<compile_context>
chip_gen: v7x
topology: tpu7x:2x2x1
jax: 0.10.0
libtpu: 0.0.40
codegen_flags: <defaults>
</compile_context>

<pallas_src>
import functools

import jax
import jax.numpy as jnp
from jax import lax
from jax.experimental import pallas as pl
from jax.experimental.pallas import tpu as pltpu


def _round_up(x, m):
    return (x + m - 1) // m * m


def _lstm_fused_kernel(x_ref, wih_ref, b_ref, whh_ref, h_out_ref,
                       xg_scr, h_scr, c_scr, *,
                       hidden_dim, t_chunk, b_block, seq_len, unroll):
    """Fused input projection + sequential LSTM recurrence over one time chunk.

    x_ref   : (T_CHUNK*B_BLOCK, E) bf16  -- embedding rows, order (t, j) within chunk
    wih_ref : (E, 4H) bf16               -- input-hidden weight (MXU operand)
    b_ref   : (1, 4H) f32                -- b_ih + b_hh
    whh_ref : (H, 4H) bf16               -- recurrent weight (MXU operand)
    h_out   : (B_BLOCK, H) f32           -- last hidden state (lane-dense, H=128)
    xg_scr  : (T_CHUNK, B_BLOCK, 4H) f32 -- per-chunk pre-activation gates
    h_scr/c_scr : (B_BLOCK, H) f32       -- recurrent state carried across chunks
    """
    c_idx = pl.program_id(1)             # time-chunk index (sequential axis)

    @pl.when(c_idx == 0)
    def _():
        h_scr[...] = jnp.zeros_like(h_scr)
        c_scr[...] = jnp.zeros_like(c_scr)

    H = hidden_dim

    # Fused, time-parallel input projection for this chunk: one large bf16 MXU
    # matmul (f32 accumulation) + bias fold, stored to VMEM scratch.  The f32
    # (T*B, 4H) -> (T, B, 4H) reshape is a pure tile relabel (B_BLOCK % 8 == 0).
    xg2d = jnp.dot(x_ref[...], wih_ref[...],
                   preferred_element_type=jnp.float32) + b_ref[...]
    xg_scr[...] = xg2d.reshape(t_chunk, b_block, 4 * H)

    def sigmoid(v):
        # single-EUP sigmoid (exact identity): sigmoid(x) = 0.5*tanh(0.5*x)+0.5
        return 0.5 * jnp.tanh(0.5 * v) + 0.5

    def step(s, carry):
        h, c = carry
        h_b = h.astype(jnp.bfloat16)
        xg = xg_scr[s]                                   # (B_BLOCK, 4H) f32

        def gate(gi):
            # per-gate (H, H) column slice of W_hh keeps only (B_BLOCK, H)
            # tiles live at a time (MXU has plenty of slack for 4 small pushes)
            return xg[:, gi * H:(gi + 1) * H] + jnp.dot(
                h_b, whh_ref[:, gi * H:(gi + 1) * H],
                preferred_element_type=jnp.float32)

        # PyTorch gate order [i, f, g, o]
        i_g = sigmoid(gate(0))
        f_g = sigmoid(gate(1))
        g_g = jnp.tanh(gate(2))
        o_g = sigmoid(gate(3))
        c_new = f_g * c + i_g * g_g
        h_new = o_g * jnp.tanh(c_new)
        if seq_len % t_chunk != 0:
            # mask padded time steps of the (partial) last chunk
            valid = (c_idx * t_chunk + s) < seq_len
            h_new = jnp.where(valid, h_new, h)
            c_new = jnp.where(valid, c_new, c)
        return h_new, c_new

    h, c = lax.fori_loop(0, t_chunk, step, (h_scr[...], c_scr[...]),
                         unroll=unroll)
    h_scr[...] = h
    c_scr[...] = c

    @pl.when(c_idx == pl.num_programs(1) - 1)
    def _():
        h_out_ref[...] = h.astype(h_out_ref.dtype)


def lstm_model_forward(token_ids, params, *, t_chunk=32, unroll=8):
    """Forward pass equivalent to the PyTorch LSTMModel.forward.

    token_ids: (B, T) int32
    returns:   (B, output_dim) float32 logits
    """
    emb_table = params["embedding"]        # (V, E)
    w_ih = params["w_ih"]                  # (E, 4H)  (= weight_ih_l0.T)
    w_hh = params["w_hh"]                  # (H, 4H)  (= weight_hh_l0.T)
    b = params["b"]                        # (1, 4H)  (= bias_ih_l0 + bias_hh_l0)
    w_fc = params["w_fc"]                  # (H, O)   (= fc.weight.T)
    b_fc = params["b_fc"]                  # (1, O)

    B, T = token_ids.shape
    E = emb_table.shape[1]
    H = w_hh.shape[0]

    # ---- batch blocking: cap at 64 (vreg pressure) and prefer >=2 blocks so the
    # 'parallel' grid axis can shard across v7x's two TensorCores.
    Bp8 = _round_up(B, 8)
    if Bp8 >= 16:
        B_BLOCK = min(_round_up(pl.cdiv(Bp8, 2), 8), 64)
    else:
        B_BLOCK = Bp8
    Bp = _round_up(B, B_BLOCK)
    num_b_blocks = Bp // B_BLOCK

    # ---- time chunking (amortizes per-grid-step overhead; DMA overlaps compute)
    T_CHUNK = min(T, t_chunk)
    num_chunks = pl.cdiv(T, T_CHUNK)
    Tp = num_chunks * T_CHUNK
    unroll_n = max(1, min(unroll, T_CHUNK))

    # ---- embedding gather (bf16) directly into the (batch_block, time, batch)
    # row order the kernel consumes: the "transpose" happens on the tiny int32
    # index array, so no HBM copy of any wide activation tensor is needed.
    tok = jnp.pad(token_ids, ((0, Bp - B), (0, Tp - T)))                 # (Bp, Tp)
    tok = tok.reshape(num_b_blocks, B_BLOCK, Tp).transpose(0, 2, 1)      # (nb, Tp, Bb)
    x2d = jnp.take(emb_table.astype(jnp.bfloat16), tok.reshape(-1), axis=0)
    # x2d: (num_b_blocks * Tp * B_BLOCK, E) bf16, row order (bi, t, j)

    w_ih_bf16 = w_ih.astype(jnp.bfloat16)
    w_hh_bf16 = w_hh.astype(jnp.bfloat16)
    b_f32 = b.astype(jnp.float32)

    # ---- VMEM budget (double-buffered BlockSpec tiles + scratch) and per-chip
    # limit derived from the device (no hard 32 MiB clamp).
    vmem_needed = (
        2 * T_CHUNK * B_BLOCK * E * 2          # x chunk (bf16), double-buffered
        + 2 * E * 4 * H * 2                    # W_ih (bf16)
        + 2 * 8 * 4 * H * 4                    # bias (sublane-padded)
        + 2 * H * 4 * H * 2                    # W_hh (bf16)
        + 2 * B_BLOCK * H * 4                  # output block
        + T_CHUNK * B_BLOCK * 4 * H * 4        # xg scratch (f32)
        + 2 * B_BLOCK * H * 4                  # h/c scratch
    )
    try:
        vmem_cap = int(pltpu.get_tpu_info().vmem_capacity_bytes)
    except Exception:
        vmem_cap = 64 << 20                    # conservative (v7x per-core)
    vmem_limit = min(max(vmem_needed + (8 << 20), 32 << 20),
                     max(vmem_cap - (8 << 20), vmem_needed + (4 << 20)))
    vmem_limit = int(vmem_limit)
    assert vmem_limit >= vmem_needed, (
        f"vmem_limit {vmem_limit} < needed {vmem_needed}; shrink t_chunk/B_BLOCK")

    kernel = functools.partial(_lstm_fused_kernel, hidden_dim=H,
                               t_chunk=T_CHUNK, b_block=B_BLOCK,
                               seq_len=T, unroll=unroll_n)

    h_last = pl.pallas_call(
        kernel,
        out_shape=jax.ShapeDtypeStruct((Bp, H), jnp.float32),
        grid_spec=pltpu.PrefetchScalarGridSpec(
            num_scalar_prefetch=0,
            grid=(num_b_blocks, num_chunks),
            in_specs=[
                # bf16 embedding chunk: rows for (batch block bi, time chunk c)
                pl.BlockSpec((T_CHUNK * B_BLOCK, E),
                             lambda bi, c: (bi * num_chunks + c, 0)),
                # grid-invariant weights / bias (small; kept resident)
                pl.BlockSpec((E, 4 * H), lambda bi, c: (0, 0)),
                pl.BlockSpec((1, 4 * H), lambda bi, c: (0, 0)),
                pl.BlockSpec((H, 4 * H), lambda bi, c: (0, 0)),
            ],
            out_specs=pl.BlockSpec((B_BLOCK, H), lambda bi, c: (bi, 0)),
            scratch_shapes=[
                pltpu.VMEM((T_CHUNK, B_BLOCK, 4 * H), jnp.float32),  # xg chunk
                pltpu.VMEM((B_BLOCK, H), jnp.float32),               # h state
                pltpu.VMEM((B_BLOCK, H), jnp.float32),               # c state
            ],
        ),
        compiler_params=pltpu.CompilerParams(
            dimension_semantics=("parallel", "arbitrary"),
            vmem_limit_bytes=vmem_limit),
    )(x2d, w_ih_bf16, b_f32, w_hh_bf16)

    h_last = h_last[:B]                                  # drop batch padding
    # Tiny (B,H)@(H,O=8) classifier head in XLA; keeps the kernel output
    # lane-dense (H=128) instead of a masked O=8 store path.
    return jnp.dot(h_last, w_fc, preferred_element_type=jnp.float32) + b_fc[0]


def reference_forward(token_ids, params):
    """Pure-JAX lax.scan reference with identical mixed-precision choices
    (bf16 MXU operands, f32 accumulation, f32 h/c and gate math)."""
    B, T = token_ids.shape
    H = params["w_hh"].shape[0]
    emb = jnp.take(params["embedding"], token_ids, axis=0)        # (B, T, E)
    x_proj = jnp.dot(emb.astype(jnp.bfloat16).reshape(B * T, -1),
                     params["w_ih"].astype(jnp.bfloat16),
                     preferred_element_type=jnp.float32)
    x_proj = x_proj.reshape(B, T, 4 * H) + params["b"][0]
    whh = params["w_hh"].astype(jnp.bfloat16)

    def step(carry, xg_t):
        h, c = carry
        gates = xg_t + jnp.dot(h.astype(jnp.bfloat16), whh,
                               preferred_element_type=jnp.float32)
        i = jax.nn.sigmoid(gates[:, 0 * H:1 * H])
        f = jax.nn.sigmoid(gates[:, 1 * H:2 * H])
        g = jnp.tanh(gates[:, 2 * H:3 * H])
        o = jax.nn.sigmoid(gates[:, 3 * H:4 * H])
        c = f * c + i * g
        h = o * jnp.tanh(c)
        return (h, c), None

    init = (jnp.zeros((B, H), jnp.float32), jnp.zeros((B, H), jnp.float32))
    (h_last, _), _ = lax.scan(step, init, jnp.transpose(x_proj, (1, 0, 2)))
    return jnp.dot(h_last, params["w_fc"],
                   preferred_element_type=jnp.float32) + params["b_fc"][0]


def init_params(key, vocab_size, embedding_dim, hidden_dim, output_dim):
    ks = jax.random.split(key, 6)
    s = 0.1
    return {
        "embedding": jax.random.normal(ks[0], (vocab_size, embedding_dim), jnp.float32) * s,
        "w_ih": jax.random.normal(ks[1], (embedding_dim, 4 * hidden_dim), jnp.float32) * s,
        "w_hh": jax.random.normal(ks[2], (hidden_dim, 4 * hidden_dim), jnp.float32) * s,
        "b": jax.random.normal(ks[3], (1, 4 * hidden_dim), jnp.float32) * s,
        "w_fc": jax.random.normal(ks[4], (hidden_dim, output_dim), jnp.float32) * s,
        "b_fc": jax.random.normal(ks[5], (1, output_dim), jnp.float32) * s,
    }


if __name__ == "__main__":
    vocab_size = 50
    embedding_dim = 128
    hidden_dim = 128
    output_dim = 8
    batch = 2
    seq_len = 8

    key = jax.random.PRNGKey(0)
    k_tok, k_par = jax.random.split(key)
    token_ids = jax.random.randint(k_tok, (batch, seq_len), 0, vocab_size, dtype=jnp.int32)
    params = init_params(k_par, vocab_size, embedding_dim, hidden_dim, output_dim)

    out = lstm_model_forward(token_ids, params)
    out = jax.block_until_ready(out)

    ref = reference_forward(token_ids, params)
    assert out.shape == (batch, output_dim)
    # tolerance covers bf16 MXU operands + the exact tanh-based sigmoid identity
    assert jnp.allclose(out, ref, atol=2e-4, rtol=2e-4), "mismatch vs reference"

    print("KERNEL_OK")
</pallas_src>

<mosaic_0001>
module attributes {stable_mosaic.version = 11 : i64} {
  func.func @_lstm_fused_kernel(%arg0: i32, %arg1: i32, %arg2: memref<64x128xbf16, #tpu.memory_space<vmem>>, %arg3: memref<128x512xbf16, #tpu.memory_space<vmem>>, %arg4: memref<1x512xf32, #tpu.memory_space<vmem>>, %arg5: memref<128x512xbf16, #tpu.memory_space<vmem>>, %arg6: memref<8x128xf32, #tpu.memory_space<vmem>>, %arg7: memref<8x8x512xf32, #tpu.memory_space<vmem>>, %arg8: memref<8x128xf32, #tpu.memory_space<vmem>>, %arg9: memref<8x128xf32, #tpu.memory_space<vmem>>) attributes {dimension_semantics = [#tpu.dimension_semantics<parallel>, #tpu.dimension_semantics<arbitrary>], iteration_bounds = array<i64: 1, 1>, scalar_prefetch = 0 : i64, scratch_operands = 3 : i64, tpu.core_type = #tpu.core_type<tc>, window_params = [{transform_indices = @transform_0, window_bounds = array<i64: 64, 128>}, {pipeline_mode = #tpu.pipeline_mode<synchronous>, transform_indices = @transform_1, window_bounds = array<i64: 128, 512>}, {pipeline_mode = #tpu.pipeline_mode<synchronous>, transform_indices = @transform_2, window_bounds = array<i64: 1, 512>}, {pipeline_mode = #tpu.pipeline_mode<synchronous>, transform_indices = @transform_3, window_bounds = array<i64: 128, 512>}, {transform_indices = @transform_4, window_bounds = array<i64: 8, 128>}]} {
    %c0_i32 = arith.constant 0 : i32
    %0 = arith.cmpi eq, %arg1, %c0_i32 : i32
    %1 = arith.extui %0 : i1 to i32
    %c0_i32_0 = arith.constant 0 : i32
    %2 = arith.cmpi ne, %1, %c0_i32_0 : i32
    scf.if %2 {
      %cst_201 = arith.constant 0.000000e+00 : f32
      %394 = vector.broadcast %cst_201 : f32 to vector<8x128xf32>
      %c0_202 = arith.constant 0 : index
      %c0_203 = arith.constant 0 : index
      %395 = vector.load %arg8[%c0_202, %c0_203] : memref<8x128xf32, #tpu.memory_space<vmem>>, vector<8x128xf32>
      tpu.vector_store %arg8[%c0_202, %c0_203], %394 {strides = array<i32>} : memref<8x128xf32, #tpu.memory_space<vmem>>, vector<8x128xf32>,
      %cst_204 = arith.constant 0.000000e+00 : f32
      %396 = vector.broadcast %cst_204 : f32 to vector<8x128xf32>
      %c0_205 = arith.constant 0 : index
      %c0_206 = arith.constant 0 : index
      %397 = vector.load %arg9[%c0_205, %c0_206] : memref<8x128xf32, #tpu.memory_space<vmem>>, vector<8x128xf32>
      tpu.vector_store %arg9[%c0_205, %c0_206], %396 {strides = array<i32>} : memref<8x128xf32, #tpu.memory_space<vmem>>, vector<8x128xf32>,
    } else {
    }
    %c0 = arith.constant 0 : index
    %c0_1 = arith.constant 0 : index
    %3 = vector.load %arg2[%c0, %c0_1] : memref<64x128xbf16, #tpu.memory_space<vmem>>, vector<64x128xbf16>
    %c0_2 = arith.constant 0 : index
    %c0_3 = arith.constant 0 : index
    %4 = vector.load %arg3[%c0_2, %c0_3] : memref<128x512xbf16, #tpu.memory_space<vmem>>, vector<128x512xbf16>
    %cst = arith.constant dense<0.000000e+00> : vector<64x512xf32>
    %5 = tpu.matmul %3, %4, %cst {dimension_numbers = #tpu.dot_dimension_numbers<[1], [0], [0], [1], [0, 0, 1, 1], [], []>} : vector<64x128xbf16>, vector<128x512xbf16>, vector<64x512xf32> -> vector<64x512xf32>
    %c0_4 = arith.constant 0 : index
    %c0_5 = arith.constant 0 : index
    %6 = vector.load %arg4[%c0_4, %c0_5] : memref<1x512xf32, #tpu.memory_space<vmem>>, vector<1x512xf32>
    %7 = vector.broadcast %6 : vector<1x512xf32> to vector<64x512xf32>
    %8 = arith.addf %5, %7 : vector<64x512xf32>
    %9 = vector.shape_cast %8 : vector<64x512xf32> to vector<8x8x512xf32>
    %c0_6 = arith.constant 0 : index
    %c0_7 = arith.constant 0 : index
    %c0_8 = arith.constant 0 : index
    %10 = vector.load %arg7[%c0_6, %c0_7, %c0_8] : memref<8x8x512xf32, #tpu.memory_space<vmem>>, vector<8x8x512xf32>
    tpu.vector_store %arg7[%c0_6, %c0_7, %c0_8], %9 {strides = array<i32>} : memref<8x8x512xf32, #tpu.memory_space<vmem>>, vector<8x8x512xf32>,
    %c0_9 = arith.constant 0 : index
    %c0_10 = arith.constant 0 : index
    %11 = vector.load %arg8[%c0_9, %c0_10] : memref<8x128xf32, #tpu.memory_space<vmem>>, vector<8x128xf32>
    %c0_11 = arith.constant 0 : index
    %c0_12 = arith.constant 0 : index
    %12 = vector.load %arg9[%c0_11, %c0_12] : memref<8x128xf32, #tpu.memory_space<vmem>>, vector<8x128xf32>
    %c0_i32_13 = arith.constant 0 : i32
    %13 = arith.truncf %11 : vector<8x128xf32> to vector<8x128xbf16>
    %14 = arith.index_cast %c0_i32_13 : i32 to index
    %c0_14 = arith.constant 0 : index
    %c0_15 = arith.constant 0 : index
    %15 = vector.load %arg7[%14, %c0_14, %c0_15] : memref<8x8x512xf32, #tpu.memory_space<vmem>>, vector<1x8x512xf32>
    %16 = vector.shape_cast %15 : vector<1x8x512xf32> to vector<8x512xf32>
    %17 = vector.extract_strided_slice %16 {offsets = [0, 0], sizes = [8, 128], strides = [1, 1]} : vector<8x512xf32> to vector<8x128xf32>
    %c0_16 = arith.constant 0 : index
    %c0_17 = arith.constant 0 : index
    %18 = vector.load %arg5[%c0_16, %c0_17] : memref<128x512xbf16, #tpu.memory_space<vmem>>, vector<128x128xbf16>
    %cst_18 = arith.constant dense<0.000000e+00> : vector<8x128xf32>
    %19 = tpu.matmul %13, %18, %cst_18 {dimension_numbers = #tpu.dot_dimension_numbers<[1], [0], [0], [1], [0, 0, 1, 1], [], []>} : vector<8x128xbf16>, vector<128x128xbf16>, vector<8x128xf32> -> vector<8x128xf32>
    %20 = arith.addf %17, %19 : vector<8x128xf32>
    %cst_19 = arith.constant 5.000000e-01 : f32
    %21 = vector.broadcast %cst_19 : f32 to vector<8x128xf32>
    %22 = arith.mulf %21, %20 : vector<8x128xf32>
    %23 = math.tanh %22 : vector<8x128xf32>
    %cst_20 = arith.constant 5.000000e-01 : f32
    %24 = vector.broadcast %cst_20 : f32 to vector<8x128xf32>
    %25 = arith.mulf %24, %23 : vector<8x128xf32>
    %cst_21 = arith.constant 5.000000e-01 : f32
    %26 = vector.broadcast %cst_21 : f32 to vector<8x128xf32>
    %27 = arith.addf %25, %26 : vector<8x128xf32>
    %28 = vector.extract_strided_slice %16 {offsets = [0, 128], sizes = [8, 128], strides = [1, 1]} : vector<8x512xf32> to vector<8x128xf32>
    %c0_22 = arith.constant 0 : index
    %c128 = arith.constant 128 : index
    %29 = vector.load %arg5[%c0_22, %c128] : memref<128x512xbf16, #tpu.memory_space<vmem>>, vector<128x128xbf16>
    %cst_23 = arith.constant dense<0.000000e+00> : vector<8x128xf32>
    %30 = tpu.matmul %13, %29, %cst_23 {dimension_numbers = #tpu.dot_dimension_numbers<[1], [0], [0], [1], [0, 0, 1, 1], [], []>} : vector<8x128xbf16>, vector<128x128xbf16>, vector<8x128xf32> -> vector<8x128xf32>
    %31 = arith.addf %28, %30 : vector<8x128xf32>
    %cst_24 = arith.constant 5.000000e-01 : f32
    %32 = vector.broadcast %cst_24 : f32 to vector<8x128xf32>
    %33 = arith.mulf %32, %31 : vector<8x128xf32>
    %34 = math.tanh %33 : vector<8x128xf32>
    %cst_25 = arith.constant 5.000000e-01 : f32
    %35 = vector.broadcast %cst_25 : f32 to vector<8x128xf32>
    %36 = arith.mulf %35, %34 : vector<8x128xf32>
    %cst_26 = arith.constant 5.000000e-01 : f32
    %37 = vector.broadcast %cst_26 : f32 to vector<8x128xf32>
    %38 = arith.addf %36, %37 : vector<8x128xf32>
    %39 = vector.extract_strided_slice %16 {offsets = [0, 256], sizes = [8, 128], strides = [1, 1]} : vector<8x512xf32> to vector<8x128xf32>
    %c0_27 = arith.constant 0 : index
    %c256 = arith.constant 256 : index
    %40 = vector.load %arg5[%c0_27, %c256] : memref<128x512xbf16, #tpu.memory_space<vmem>>, vector<128x128xbf16>
    %cst_28 = arith.constant dense<0.000000e+00> : vector<8x128xf32>
    %41 = tpu.matmul %13, %40, %cst_28 {dimension_numbers = #tpu.dot_dimension_numbers<[1], [0], [0], [1], [0, 0, 1, 1], [], []>} : vector<8x128xbf16>, vector<128x128xbf16>, vector<8x128xf32> -> vector<8x128xf32>
    %42 = arith.addf %39, %41 : vector<8x128xf32>
    %43 = math.tanh %42 : vector<8x128xf32>
    %44 = vector.extract_strided_slice %16 {offsets = [0, 384], sizes = [8, 128], strides = [1, 1]} : vector<8x512xf32> to vector<8x128xf32>
    %c0_29 = arith.constant 0 : index
    %c384 = arith.constant 384 : index
    %45 = vector.load %arg5[%c0_29, %c384] : memref<128x512xbf16, #tpu.memory_space<vmem>>, vector<128x128xbf16>
    %cst_30 = arith.constant dense<0.000000e+00> : vector<8x128xf32>
    %46 = tpu.matmul %13, %45, %cst_30 {dimension_numbers = #tpu.dot_dimension_numbers<[1], [0], [0], [1], [0, 0, 1, 1], [], []>} : vector<8x128xbf16>, vector<128x128xbf16>, vector<8x128xf32> -> vector<8x128xf32>
    %47 = arith.addf %44, %46 : vector<8x128xf32>
    %cst_31 = arith.constant 5.000000e-01 : f32
    %48 = vector.broadcast %cst_31 : f32 to vector<8x128xf32>
    %49 = arith.mulf %48, %47 : vector<8x128xf32>
    %50 = math.tanh %49 : vector<8x128xf32>
    %cst_32 = arith.constant 5.000000e-01 : f32
    %51 = vector.broadcast %cst_32 : f32 to vector<8x128xf32>
    %52 = arith.mulf %51, %50 : vector<8x128xf32>
    %cst_33 = arith.constant 5.000000e-01 : f32
    %53 = vector.broadcast %cst_33 : f32 to vector<8x128xf32>
    %54 = arith.addf %52, %53 : vector<8x128xf32>
    %55 = arith.mulf %38, %12 : vector<8x128xf32>
    %56 = arith.mulf %27, %43 : vector<8x128xf32>
    %57 = arith.addf %55, %56 : vector<8x128xf32>
    %58 = math.tanh %57 : vector<8x128xf32>
    %59 = arith.mulf %54, %58 : vector<8x128xf32>
    %c1_i32 = arith.constant 1 : i32
    %60 = arith.truncf %59 : vector<8x128xf32> to vector<8x128xbf16>
    %61 = arith.index_cast %c1_i32 : i32 to index
    %c0_34 = arith.constant 0 : index
    %c0_35 = arith.constant 0 : index
    %62 = vector.load %arg7[%61, %c0_34, %c0_35] : memref<8x8x512xf32, #tpu.memory_space<vmem>>, vector<1x8x512xf32>
    %63 = vector.shape_cast %62 : vector<1x8x512xf32> to vector<8x512xf32>
    %64 = vector.extract_strided_slice %63 {offsets = [0, 0], sizes = [8, 128], strides = [1, 1]} : vector<8x512xf32> to vector<8x128xf32>
    %c0_36 = arith.constant 0 : index
    %c0_37 = arith.constant 0 : index
    %65 = vector.load %arg5[%c0_36, %c0_37] : memref<128x512xbf16, #tpu.memory_space<vmem>>, vector<128x128xbf16>
    %cst_38 = arith.constant dense<0.000000e+00> : vector<8x128xf32>
    %66 = tpu.matmul %60, %65, %cst_38 {dimension_numbers = #tpu.dot_dimension_numbers<[1], [0], [0], [1], [0, 0, 1, 1], [], []>} : vector<8x128xbf16>, vector<128x128xbf16>, vector<8x128xf32> -> vector<8x128xf32>
    %67 = arith.addf %64, %66 : vector<8x128xf32>
    %cst_39 = arith.constant 5.000000e-01 : f32
    %68 = vector.broadcast %cst_39 : f32 to vector<8x128xf32>
    %69 = arith.mulf %68, %67 : vector<8x128xf32>
    %70 = math.tanh %69 : vector<8x128xf32>
    %cst_40 = arith.constant 5.000000e-01 : f32
    %71 = vector.broadcast %cst_40 : f32 to vector<8x128xf32>
    %72 = arith.mulf %71, %70 : vector<8x128xf32>
    %cst_41 = arith.constant 5.000000e-01 : f32
    %73 = vector.broadcast %cst_41 : f32 to vector<8x128xf32>
    %74 = arith.addf %72, %73 : vector<8x128xf32>
    %75 = vector.extract_strided_slice %63 {offsets = [0, 128], sizes = [8, 128], strides = [1, 1]} : vector<8x512xf32> to vector<8x128xf32>
    %c0_42 = arith.constant 0 : index
    %c128_43 = arith.constant 128 : index
    %76 = vector.load %arg5[%c0_42, %c128_43] : memref<128x512xbf16, #tpu.memory_space<vmem>>, vector<128x128xbf16>
    %cst_44 = arith.constant dense<0.000000e+00> : vector<8x128xf32>
    %77 = tpu.matmul %60, %76, %cst_44 {dimension_numbers = #tpu.dot_dimension_numbers<[1], [0], [0], [1], [0, 0, 1, 1], [], []>} : vector<8x128xbf16>, vector<128x128xbf16>, vector<8x128xf32> -> vector<8x128xf32>
    %78 = arith.addf %75, %77 : vector<8x128xf32>
    %cst_45 = arith.constant 5.000000e-01 : f32
    %79 = vector.broadcast %cst_45 : f32 to vector<8x128xf32>
    %80 = arith.mulf %79, %78 : vector<8x128xf32>
    %81 = math.tanh %80 : vector<8x128xf32>
    %cst_46 = arith.constant 5.000000e-01 : f32
    %82 = vector.broadcast %cst_46 : f32 to vector<8x128xf32>
    %83 = arith.mulf %82, %81 : vector<8x128xf32>
    %cst_47 = arith.constant 5.000000e-01 : f32
    %84 = vector.broadcast %cst_47 : f32 to vector<8x128xf32>
    %85 = arith.addf %83, %84 : vector<8x128xf32>
    %86 = vector.extract_strided_slice %63 {offsets = [0, 256], sizes = [8, 128], strides = [1, 1]} : vector<8x512xf32> to vector<8x128xf32>
    %c0_48 = arith.constant 0 : index
    %c256_49 = arith.constant 256 : index
    %87 = vector.load %arg5[%c0_48, %c256_49] : memref<128x512xbf16, #tpu.memory_space<vmem>>, vector<128x128xbf16>
    %cst_50 = arith.constant dense<0.000000e+00> : vector<8x128xf32>
    %88 = tpu.matmul %60, %87, %cst_50 {dimension_numbers = #tpu.dot_dimension_numbers<[1], [0], [0], [1], [0, 0, 1, 1], [], []>} : vector<8x128xbf16>, vector<128x128xbf16>, vector<8x128xf32> -> vector<8x128xf32>
    %89 = arith.addf %86, %88 : vector<8x128xf32>
    %90 = math.tanh %89 : vector<8x128xf32>
    %91 = vector.extract_strided_slice %63 {offsets = [0, 384], sizes = [8, 128], strides = [1, 1]} : vector<8x512xf32> to vector<8x128xf32>
    %c0_51 = arith.constant 0 : index
    %c384_52 = arith.constant 384 : index
    %92 = vector.load %arg5[%c0_51, %c384_52] : memref<128x512xbf16, #tpu.memory_space<vmem>>, vector<128x128xbf16>
    %cst_53 = arith.constant dense<0.000000e+00> : vector<8x128xf32>
    %93 = tpu.matmul %60, %92, %cst_53 {dimension_numbers = #tpu.dot_dimension_numbers<[1], [0], [0], [1], [0, 0, 1, 1], [], []>} : vector<8x128xbf16>, vector<128x128xbf16>, vector<8x128xf32> -> vector<8x128xf32>
    %94 = arith.addf %91, %93 : vector<8x128xf32>
    %cst_54 = arith.constant 5.000000e-01 : f32
    %95 = vector.broadcast %cst_54 : f32 to vector<8x128xf32>
    %96 = arith.mulf %95, %94 : vector<8x128xf32>
    %97 = math.tanh %96 : vector<8x128xf32>
    %cst_55 = arith.constant 5.000000e-01 : f32
    %98 = vector.broadcast %cst_55 : f32 to vector<8x128xf32>
    %99 = arith.mulf %98, %97 : vector<8x128xf32>
    %cst_56 = arith.constant 5.000000e-01 : f32
    %100 = vector.broadcast %cst_56 : f32 to vector<8x128xf32>
    %101 = arith.addf %99, %100 : vector<8x128xf32>
    %102 = arith.mulf %85, %57 : vector<8x128xf32>
    %103 = arith.mulf %74, %90 : vector<8x128xf32>
    %104 = arith.addf %102, %103 : vector<8x128xf32>
    %105 = math.tanh %104 : vector<8x128xf32>
    %106 = arith.mulf %101, %105 : vector<8x128xf32>
    %c2_i32 = arith.constant 2 : i32
    %107 = arith.truncf %106 : vector<8x128xf32> to vector<8x128xbf16>
    %108 = arith.index_cast %c2_i32 : i32 to index
    %c0_57 = arith.constant 0 : index
    %c0_58 = arith.constant 0 : index
    %109 = vector.load %arg7[%108, %c0_57, %c0_58] : memref<8x8x512xf32, #tpu.memory_space<vmem>>, vector<1x8x512xf32>
    %110 = vector.shape_cast %109 : vector<1x8x512xf32> to vector<8x512xf32>
    %111 = vector.extract_strided_slice %110 {offsets = [0, 0], sizes = [8, 128], strides = [1, 1]} : vector<8x512xf32> to vector<8x128xf32>
    %c0_59 = arith.constant 0 : index
    %c0_60 = arith.constant 0 : index
    %112 = vector.load %arg5[%c0_59, %c0_60] : memref<128x512xbf16, #tpu.memory_space<vmem>>, vector<128x128xbf16>
    %cst_61 = arith.constant dense<0.000000e+00> : vector<8x128xf32>
    %113 = tpu.matmul %107, %112, %cst_61 {dimension_numbers = #tpu.dot_dimension_numbers<[1], [0], [0], [1], [0, 0, 1, 1], [], []>} : vector<8x128xbf16>, vector<128x128xbf16>, vector<8x128xf32> -> vector<8x128xf32>
    %114 = arith.addf %111, %113 : vector<8x128xf32>
    %cst_62 = arith.constant 5.000000e-01 : f32
    %115 = vector.broadcast %cst_62 : f32 to vector<8x128xf32>
    %116 = arith.mulf %115, %114 : vector<8x128xf32>
    %117 = math.tanh %116 : vector<8x128xf32>
    %cst_63 = arith.constant 5.000000e-01 : f32
    %118 = vector.broadcast %cst_63 : f32 to vector<8x128xf32>
    %119 = arith.mulf %118, %117 : vector<8x128xf32>
    %cst_64 = arith.constant 5.000000e-01 : f32
    %120 = vector.broadcast %cst_64 : f32 to vector<8x128xf32>
    %121 = arith.addf %119, %120 : vector<8x128xf32>
    %122 = vector.extract_strided_slice %110 {offsets = [0, 128], sizes = [8, 128], strides = [1, 1]} : vector<8x512xf32> to vector<8x128xf32>
    %c0_65 = arith.constant 0 : index
    %c128_66 = arith.constant 128 : index
    %123 = vector.load %arg5[%c0_65, %c128_66] : memref<128x512xbf16, #tpu.memory_space<vmem>>, vector<128x128xbf16>
    %cst_67 = arith.constant dense<0.000000e+00> : vector<8x128xf32>
    %124 = tpu.matmul %107, %123, %cst_67 {dimension_numbers = #tpu.dot_dimension_numbers<[1], [0], [0], [1], [0, 0, 1, 1], [], []>} : vector<8x128xbf16>, vector<128x128xbf16>, vector<8x128xf32> -> vector<8x128xf32>
    %125 = arith.addf %122, %124 : vector<8x128xf32>
    %cst_68 = arith.constant 5.000000e-01 : f32
    %126 = vector.broadcast %cst_68 : f32 to vector<8x128xf32>
    %127 = arith.mulf %126, %125 : vector<8x128xf32>
    %128 = math.tanh %127 : vector<8x128xf32>
    %cst_69 = arith.constant 5.000000e-01 : f32
    %129 = vector.broadcast %cst_69 : f32 to vector<8x128xf32>
    %130 = arith.mulf %129, %128 : vector<8x128xf32>
    %cst_70 = arith.constant 5.000000e-01 : f32
    %131 = vector.broadcast %cst_70 : f32 to vector<8x128xf32>
    %132 = arith.addf %130, %131 : vector<8x128xf32>
    %133 = vector.extract_strided_slice %110 {offsets = [0, 256], sizes = [8, 128], strides = [1, 1]} : vector<8x512xf32> to vector<8x128xf32>
    %c0_71 = arith.constant 0 : index
    %c256_72 = arith.constant 256 : index
    %134 = vector.load %arg5[%c0_71, %c256_72] : memref<128x512xbf16, #tpu.memory_space<vmem>>, vector<128x128xbf16>
    %cst_73 = arith.constant dense<0.000000e+00> : vector<8x128xf32>
    %135 = tpu.matmul %107, %134, %cst_73 {dimension_numbers = #tpu.dot_dimension_numbers<[1], [0], [0], [1], [0, 0, 1, 1], [], []>} : vector<8x128xbf16>, vector<128x128xbf16>, vector<8x128xf32> -> vector<8x128xf32>
    %136 = arith.addf %133, %135 : vector<8x128xf32>
    %137 = math.tanh %136 : vector<8x128xf32>
    %138 = vector.extract_strided_slice %110 {offsets = [0, 384], sizes = [8, 128], strides = [1, 1]} : vector<8x512xf32> to vector<8x128xf32>
    %c0_74 = arith.constant 0 : index
    %c384_75 = arith.constant 384 : index
    %139 = vector.load %arg5[%c0_74, %c384_75] : memref<128x512xbf16, #tpu.memory_space<vmem>>, vector<128x128xbf16>
    %cst_76 = arith.constant dense<0.000000e+00> : vector<8x128xf32>
    %140 = tpu.matmul %107, %139, %cst_76 {dimension_numbers = #tpu.dot_dimension_numbers<[1], [0], [0], [1], [0, 0, 1, 1], [], []>} : vector<8x128xbf16>, vector<128x128xbf16>, vector<8x128xf32> -> vector<8x128xf32>
    %141 = arith.addf %138, %140 : vector<8x128xf32>
    %cst_77 = arith.constant 5.000000e-01 : f32
    %142 = vector.broadcast %cst_77 : f32 to vector<8x128xf32>
    %143 = arith.mulf %142, %141 : vector<8x128xf32>
    %144 = math.tanh %143 : vector<8x128xf32>
    %cst_78 = arith.constant 5.000000e-01 : f32
    %145 = vector.broadcast %cst_78 : f32 to vector<8x128xf32>
    %146 = arith.mulf %145, %144 : vector<8x128xf32>
    %cst_79 = arith.constant 5.000000e-01 : f32
    %147 = vector.broadcast %cst_79 : f32 to vector<8x128xf32>
    %148 = arith.addf %146, %147 : vector<8x128xf32>
    %149 = arith.mulf %132, %104 : vector<8x128xf32>
    %150 = arith.mulf %121, %137 : vector<8x128xf32>
    %151 = arith.addf %149, %150 : vector<8x128xf32>
    %152 = math.tanh %151 : vector<8x128xf32>
    %153 = arith.mulf %148, %152 : vector<8x128xf32>
    %c3_i32 = arith.constant 3 : i32
    %154 = arith.truncf %153 : vector<8x128xf32> to vector<8x128xbf16>
    %155 = arith.index_cast %c3_i32 : i32 to index
    %c0_80 = arith.constant 0 : index
    %c0_81 = arith.constant 0 : index
    %156 = vector.load %arg7[%155, %c0_80, %c0_81] : memref<8x8x512xf32, #tpu.memory_space<vmem>>, vector<1x8x512xf32>
    %157 = vector.shape_cast %156 : vector<1x8x512xf32> to vector<8x512xf32>
    %158 = vector.extract_strided_slice %157 {offsets = [0, 0], sizes = [8, 128], strides = [1, 1]} : vector<8x512xf32> to vector<8x128xf32>
    %c0_82 = arith.constant 0 : index
    %c0_83 = arith.constant 0 : index
    %159 = vector.load %arg5[%c0_82, %c0_83] : memref<128x512xbf16, #tpu.memory_space<vmem>>, vector<128x128xbf16>
    %cst_84 = arith.constant dense<0.000000e+00> : vector<8x128xf32>
    %160 = tpu.matmul %154, %159, %cst_84 {dimension_numbers = #tpu.dot_dimension_numbers<[1], [0], [0], [1], [0, 0, 1, 1], [], []>} : vector<8x128xbf16>, vector<128x128xbf16>, vector<8x128xf32> -> vector<8x128xf32>
    %161 = arith.addf %158, %160 : vector<8x128xf32>
    %cst_85 = arith.constant 5.000000e-01 : f32
    %162 = vector.broadcast %cst_85 : f32 to vector<8x128xf32>
    %163 = arith.mulf %162, %161 : vector<8x128xf32>
    %164 = math.tanh %163 : vector<8x128xf32>
    %cst_86 = arith.constant 5.000000e-01 : f32
    %165 = vector.broadcast %cst_86 : f32 to vector<8x128xf32>
    %166 = arith.mulf %165, %164 : vector<8x128xf32>
    %cst_87 = arith.constant 5.000000e-01 : f32
    %167 = vector.broadcast %cst_87 : f32 to vector<8x128xf32>
    %168 = arith.addf %166, %167 : vector<8x128xf32>
    %169 = vector.extract_strided_slice %157 {offsets = [0, 128], sizes = [8, 128], strides = [1, 1]} : vector<8x512xf32> to vector<8x128xf32>
    %c0_88 = arith.constant 0 : index
    %c128_89 = arith.constant 128 : index
    %170 = vector.load %arg5[%c0_88, %c128_89] : memref<128x512xbf16, #tpu.memory_space<vmem>>, vector<128x128xbf16>
    %cst_90 = arith.constant dense<0.000000e+00> : vector<8x128xf32>
    %171 = tpu.matmul %154, %170, %cst_90 {dimension_numbers = #tpu.dot_dimension_numbers<[1], [0], [0], [1], [0, 0, 1, 1], [], []>} : vector<8x128xbf16>, vector<128x128xbf16>, vector<8x128xf32> -> vector<8x128xf32>
    %172 = arith.addf %169, %171 : vector<8x128xf32>
    %cst_91 = arith.constant 5.000000e-01 : f32
    %173 = vector.broadcast %cst_91 : f32 to vector<8x128xf32>
    %174 = arith.mulf %173, %172 : vector<8x128xf32>
    %175 = math.tanh %174 : vector<8x128xf32>
    %cst_92 = arith.constant 5.000000e-01 : f32
    %176 = vector.broadcast %cst_92 : f32 to vector<8x128xf32>
    %177 = arith.mulf %176, %175 : vector<8x128xf32>
    %cst_93 = arith.constant 5.000000e-01 : f32
    %178 = vector.broadcast %cst_93 : f32 to vector<8x128xf32>
    %179 = arith.addf %177, %178 : vector<8x128xf32>
    %180 = vector.extract_strided_slice %157 {offsets = [0, 256], sizes = [8, 128], strides = [1, 1]} : vector<8x512xf32> to vector<8x128xf32>
    %c0_94 = arith.constant 0 : index
    %c256_95 = arith.constant 256 : index
    %181 = vector.load %arg5[%c0_94, %c256_95] : memref<128x512xbf16, #tpu.memory_space<vmem>>, vector<128x128xbf16>
    %cst_96 = arith.constant dense<0.000000e+00> : vector<8x128xf32>
    %182 = tpu.matmul %154, %181, %cst_96 {dimension_numbers = #tpu.dot_dimension_numbers<[1], [0], [0], [1], [0, 0, 1, 1], [], []>} : vector<8x128xbf16>, vector<128x128xbf16>, vector<8x128xf32> -> vector<8x128xf32>
    %183 = arith.addf %180, %182 : vector<8x128xf32>
    %184 = math.tanh %183 : vector<8x128xf32>
    %185 = vector.extract_strided_slice %157 {offsets = [0, 384], sizes = [8, 128], strides = [1, 1]} : vector<8x512xf32> to vector<8x128xf32>
    %c0_97 = arith.constant 0 : index
    %c384_98 = arith.constant 384 : index
    %186 = vector.load %arg5[%c0_97, %c384_98] : memref<128x512xbf16, #tpu.memory_space<vmem>>, vector<128x128xbf16>
    %cst_99 = arith.constant dense<0.000000e+00> : vector<8x128xf32>
    %187 = tpu.matmul %154, %186, %cst_99 {dimension_numbers = #tpu.dot_dimension_numbers<[1], [0], [0], [1], [0, 0, 1, 1], [], []>} : vector<8x128xbf16>, vector<128x128xbf16>, vector<8x128xf32> -> vector<8x128xf32>
    %188 = arith.addf %185, %187 : vector<8x128xf32>
    %cst_100 = arith.constant 5.000000e-01 : f32
    %189 = vector.broadcast %cst_100 : f32 to vector<8x128xf32>
    %190 = arith.mulf %189, %188 : vector<8x128xf32>
    %191 = math.tanh %190 : vector<8x128xf32>
    %cst_101 = arith.constant 5.000000e-01 : f32
    %192 = vector.broadcast %cst_101 : f32 to vector<8x128xf32>
    %193 = arith.mulf %192, %191 : vector<8x128xf32>
    %cst_102 = arith.constant 5.000000e-01 : f32
    %194 = vector.broadcast %cst_102 : f32 to vector<8x128xf32>
    %195 = arith.addf %193, %194 : vector<8x128xf32>
    %196 = arith.mulf %179, %151 : vector<8x128xf32>
    %197 = arith.mulf %168, %184 : vector<8x128xf32>
    %198 = arith.addf %196, %197 : vector<8x128xf32>
    %199 = math.tanh %198 : vector<8x128xf32>
    %200 = arith.mulf %195, %199 : vector<8x128xf32>
    %c4_i32 = arith.constant 4 : i32
    %201 = arith.truncf %200 : vector<8x128xf32> to vector<8x128xbf16>
    %202 = arith.index_cast %c4_i32 : i32 to index
    %c0_103 = arith.constant 0 : index
    %c0_104 = arith.constant 0 : index
    %203 = vector.load %arg7[%202, %c0_103, %c0_104] : memref<8x8x512xf32, #tpu.memory_space<vmem>>, vector<1x8x512xf32>
    %204 = vector.shape_cast %203 : vector<1x8x512xf32> to vector<8x512xf32>
    %205 = vector.extract_strided_slice %204 {offsets = [0, 0], sizes = [8, 128], strides = [1, 1]} : vector<8x512xf32> to vector<8x128xf32>
    %c0_105 = arith.constant 0 : index
    %c0_106 = arith.constant 0 : index
    %206 = vector.load %arg5[%c0_105, %c0_106] : memref<128x512xbf16, #tpu.memory_space<vmem>>, vector<128x128xbf16>
    %cst_107 = arith.constant dense<0.000000e+00> : vector<8x128xf32>
    %207 = tpu.matmul %201, %206, %cst_107 {dimension_numbers = #tpu.dot_dimension_numbers<[1], [0], [0], [1], [0, 0, 1, 1], [], []>} : vector<8x128xbf16>, vector<128x128xbf16>, vector<8x128xf32> -> vector<8x128xf32>
    %208 = arith.addf %205, %207 : vector<8x128xf32>
    %cst_108 = arith.constant 5.000000e-01 : f32
    %209 = vector.broadcast %cst_108 : f32 to vector<8x128xf32>
    %210 = arith.mulf %209, %208 : vector<8x128xf32>
    %211 = math.tanh %210 : vector<8x128xf32>
    %cst_109 = arith.constant 5.000000e-01 : f32
    %212 = vector.broadcast %cst_109 : f32 to vector<8x128xf32>
    %213 = arith.mulf %212, %211 : vector<8x128xf32>
    %cst_110 = arith.constant 5.000000e-01 : f32
    %214 = vector.broadcast %cst_110 : f32 to vector<8x128xf32>
    %215 = arith.addf %213, %214 : vector<8x128xf32>
    %216 = vector.extract_strided_slice %204 {offsets = [0, 128], sizes = [8, 128], strides = [1, 1]} : vector<8x512xf32> to vector<8x128xf32>
    %c0_111 = arith.constant 0 : index
    %c128_112 = arith.constant 128 : index
    %217 = vector.load %arg5[%c0_111, %c128_112] : memref<128x512xbf16, #tpu.memory_space<vmem>>, vector<128x128xbf16>
    %cst_113 = arith.constant dense<0.000000e+00> : vector<8x128xf32>
    %218 = tpu.matmul %201, %217, %cst_113 {dimension_numbers = #tpu.dot_dimension_numbers<[1], [0], [0], [1], [0, 0, 1, 1], [], []>} : vector<8x128xbf16>, vector<128x128xbf16>, vector<8x128xf32> -> vector<8x128xf32>
    %219 = arith.addf %216, %218 : vector<8x128xf32>
    %cst_114 = arith.constant 5.000000e-01 : f32
    %220 = vector.broadcast %cst_114 : f32 to vector<8x128xf32>
    %221 = arith.mulf %220, %219 : vector<8x128xf32>
    %222 = math.tanh %221 : vector<8x128xf32>
    %cst_115 = arith.constant 5.000000e-01 : f32
    %223 = vector.broadcast %cst_115 : f32 to vector<8x128xf32>
    %224 = arith.mulf %223, %222 : vector<8x128xf32>
    %cst_116 = arith.constant 5.000000e-01 : f32
    %225 = vector.broadcast %cst_116 : f32 to vector<8x128xf32>
    %226 = arith.addf %224, %225 : vector<8x128xf32>
    %227 = vector.extract_strided_slice %204 {offsets = [0, 256], sizes = [8, 128], strides = [1, 1]} : vector<8x512xf32> to vector<8x128xf32>
    %c0_117 = arith.constant 0 : index
    %c256_118 = arith.constant 256 : index
    %228 = vector.load %arg5[%c0_117, %c256_118] : memref<128x512xbf16, #tpu.memory_space<vmem>>, vector<128x128xbf16>
    %cst_119 = arith.constant dense<0.000000e+00> : vector<8x128xf32>
    %229 = tpu.matmul %201, %228, %cst_119 {dimension_numbers = #tpu.dot_dimension_numbers<[1], [0], [0], [1], [0, 0, 1, 1], [], []>} : vector<8x128xbf16>, vector<128x128xbf16>, vector<8x128xf32> -> vector<8x128xf32>
    %230 = arith.addf %227, %229 : vector<8x128xf32>
    %231 = math.tanh %230 : vector<8x128xf32>
    %232 = vector.extract_strided_slice %204 {offsets = [0, 384], sizes = [8, 128], strides = [1, 1]} : vector<8x512xf32> to vector<8x128xf32>
    %c0_120 = arith.constant 0 : index
    %c384_121 = arith.constant 384 : index
    %233 = vector.load %arg5[%c0_120, %c384_121] : memref<128x512xbf16, #tpu.memory_space<vmem>>, vector<128x128xbf16>
    %cst_122 = arith.constant dense<0.000000e+00> : vector<8x128xf32>
    %234 = tpu.matmul %201, %233, %cst_122 {dimension_numbers = #tpu.dot_dimension_numbers<[1], [0], [0], [1], [0, 0, 1, 1], [], []>} : vector<8x128xbf16>, vector<128x128xbf16>, vector<8x128xf32> -> vector<8x128xf32>
    %235 = arith.addf %232, %234 : vector<8x128xf32>
    %cst_123 = arith.constant 5.000000e-01 : f32
    %236 = vector.broadcast %cst_123 : f32 to vector<8x128xf32>
    %237 = arith.mulf %236, %235 : vector<8x128xf32>
    %238 = math.tanh %237 : vector<8x128xf32>
    %cst_124 = arith.constant 5.000000e-01 : f32
    %239 = vector.broadcast %cst_124 : f32 to vector<8x128xf32>
    %240 = arith.mulf %239, %238 : vector<8x128xf32>
    %cst_125 = arith.constant 5.000000e-01 : f32
    %241 = vector.broadcast %cst_125 : f32 to vector<8x128xf32>
    %242 = arith.addf %240, %241 : vector<8x128xf32>
    %243 = arith.mulf %226, %198 : vector<8x128xf32>
    %244 = arith.mulf %215, %231 : vector<8x128xf32>
    %245 = arith.addf %243, %244 : vector<8x128xf32>
    %246 = math.tanh %245 : vector<8x128xf32>
    %247 = arith.mulf %242, %246 : vector<8x128xf32>
    %c5_i32 = arith.constant 5 : i32
    %248 = arith.truncf %247 : vector<8x128xf32> to vector<8x128xbf16>
    %249 = arith.index_cast %c5_i32 : i32 to index
    %c0_126 = arith.constant 0 : index
    %c0_127 = arith.constant 0 : index
    %250 = vector.load %arg7[%249, %c0_126, %c0_127] : memref<8x8x512xf32, #tpu.memory_space<vmem>>, vector<1x8x512xf32>
    %251 = vector.shape_cast %250 : vector<1x8x512xf32> to vector<8x512xf32>
    %252 = vector.extract_strided_slice %251 {offsets = [0, 0], sizes = [8, 128], strides = [1, 1]} : vector<8x512xf32> to vector<8x128xf32>
    %c0_128 = arith.constant 0 : index
    %c0_129 = arith.constant 0 : index
    %253 = vector.load %arg5[%c0_128, %c0_129] : memref<128x512xbf16, #tpu.memory_space<vmem>>, vector<128x128xbf16>
    %cst_130 = arith.constant dense<0.000000e+00> : vector<8x128xf32>
    %254 = tpu.matmul %248, %253, %cst_130 {dimension_numbers = #tpu.dot_dimension_numbers<[1], [0], [0], [1], [0, 0, 1, 1], [], []>} : vector<8x128xbf16>, vector<128x128xbf16>, vector<8x128xf32> -> vector<8x128xf32>
    %255 = arith.addf %252, %254 : vector<8x128xf32>
    %cst_131 = arith.constant 5.000000e-01 : f32
    %256 = vector.broadcast %cst_131 : f32 to vector<8x128xf32>
    %257 = arith.mulf %256, %255 : vector<8x128xf32>
    %258 = math.tanh %257 : vector<8x128xf32>
    %cst_132 = arith.constant 5.000000e-01 : f32
    %259 = vector.broadcast %cst_132 : f32 to vector<8x128xf32>
    %260 = arith.mulf %259, %258 : vector<8x128xf32>
    %cst_133 = arith.constant 5.000000e-01 : f32
    %261 = vector.broadcast %cst_133 : f32 to vector<8x128xf32>
    %262 = arith.addf %260, %261 : vector<8x128xf32>
    %263 = vector.extract_strided_slice %251 {offsets = [0, 128], sizes = [8, 128], strides = [1, 1]} : vector<8x512xf32> to vector<8x128xf32>
    %c0_134 = arith.constant 0 : index
    %c128_135 = arith.constant 128 : index
    %264 = vector.load %arg5[%c0_134, %c128_135] : memref<128x512xbf16, #tpu.memory_space<vmem>>, vector<128x128xbf16>
    %cst_136 = arith.constant dense<0.000000e+00> : vector<8x128xf32>
    %265 = tpu.matmul %248, %264, %cst_136 {dimension_numbers = #tpu.dot_dimension_numbers<[1], [0], [0], [1], [0, 0, 1, 1], [], []>} : vector<8x128xbf16>, vector<128x128xbf16>, vector<8x128xf32> -> vector<8x128xf32>
    %266 = arith.addf %263, %265 : vector<8x128xf32>
    %cst_137 = arith.constant 5.000000e-01 : f32
    %267 = vector.broadcast %cst_137 : f32 to vector<8x128xf32>
    %268 = arith.mulf %267, %266 : vector<8x128xf32>
    %269 = math.tanh %268 : vector<8x128xf32>
    %cst_138 = arith.constant 5.000000e-01 : f32
    %270 = vector.broadcast %cst_138 : f32 to vector<8x128xf32>
    %271 = arith.mulf %270, %269 : vector<8x128xf32>
    %cst_139 = arith.constant 5.000000e-01 : f32
    %272 = vector.broadcast %cst_139 : f32 to vector<8x128xf32>
    %273 = arith.addf %271, %272 : vector<8x128xf32>
    %274 = vector.extract_strided_slice %251 {offsets = [0, 256], sizes = [8, 128], strides = [1, 1]} : vector<8x512xf32> to vector<8x128xf32>
    %c0_140 = arith.constant 0 : index
    %c256_141 = arith.constant 256 : index
    %275 = vector.load %arg5[%c0_140, %c256_141] : memref<128x512xbf16, #tpu.memory_space<vmem>>, vector<128x128xbf16>
    %cst_142 = arith.constant dense<0.000000e+00> : vector<8x128xf32>
    %276 = tpu.matmul %248, %275, %cst_142 {dimension_numbers = #tpu.dot_dimension_numbers<[1], [0], [0], [1], [0, 0, 1, 1], [], []>} : vector<8x128xbf16>, vector<128x128xbf16>, vector<8x128xf32> -> vector<8x128xf32>
    %277 = arith.addf %274, %276 : vector<8x128xf32>
    %278 = math.tanh %277 : vector<8x128xf32>
    %279 = vector.extract_strided_slice %251 {offsets = [0, 384], sizes = [8, 128], strides = [1, 1]} : vector<8x512xf32> to vector<8x128xf32>
    %c0_143 = arith.constant 0 : index
    %c384_144 = arith.constant 384 : index
    %280 = vector.load %arg5[%c0_143, %c384_144] : memref<128x512xbf16, #tpu.memory_space<vmem>>, vector<128x128xbf16>
    %cst_145 = arith.constant dense<0.000000e+00> : vector<8x128xf32>
    %281 = tpu.matmul %248, %280, %cst_145 {dimension_numbers = #tpu.dot_dimension_numbers<[1], [0], [0], [1], [0, 0, 1, 1], [], []>} : vector<8x128xbf16>, vector<128x128xbf16>, vector<8x128xf32> -> vector<8x128xf32>
    %282 = arith.addf %279, %281 : vector<8x128xf32>
    %cst_146 = arith.constant 5.000000e-01 : f32
    %283 = vector.broadcast %cst_146 : f32 to vector<8x128xf32>
    %284 = arith.mulf %283, %282 : vector<8x128xf32>
    %285 = math.tanh %284 : vector<8x128xf32>
    %cst_147 = arith.constant 5.000000e-01 : f32
    %286 = vector.broadcast %cst_147 : f32 to vector<8x128xf32>
    %287 = arith.mulf %286, %285 : vector<8x128xf32>
    %cst_148 = arith.constant 5.000000e-01 : f32
    %288 = vector.broadcast %cst_148 : f32 to vector<8x128xf32>
    %289 = arith.addf %287, %288 : vector<8x128xf32>
    %290 = arith.mulf %273, %245 : vector<8x128xf32>
    %291 = arith.mulf %262, %278 : vector<8x128xf32>
    %292 = arith.addf %290, %291 : vector<8x128xf32>
    %293 = math.tanh %292 : vector<8x128xf32>
    %294 = arith.mulf %289, %293 : vector<8x128xf32>
    %c6_i32 = arith.constant 6 : i32
    %295 = arith.truncf %294 : vector<8x128xf32> to vector<8x128xbf16>
    %296 = arith.index_cast %c6_i32 : i32 to index
    %c0_149 = arith.constant 0 : index
    %c0_150 = arith.constant 0 : index
    %297 = vector.load %arg7[%296, %c0_149, %c0_150] : memref<8x8x512xf32, #tpu.memory_space<vmem>>, vector<1x8x512xf32>
    %298 = vector.shape_cast %297 : vector<1x8x512xf32> to vector<8x512xf32>
    %299 = vector.extract_strided_slice %298 {offsets = [0, 0], sizes = [8, 128], strides = [1, 1]} : vector<8x512xf32> to vector<8x128xf32>
    %c0_151 = arith.constant 0 : index
    %c0_152 = arith.constant 0 : index
    %300 = vector.load %arg5[%c0_151, %c0_152] : memref<128x512xbf16, #tpu.memory_space<vmem>>, vector<128x128xbf16>
    %cst_153 = arith.constant dense<0.000000e+00> : vector<8x128xf32>
    %301 = tpu.matmul %295, %300, %cst_153 {dimension_numbers = #tpu.dot_dimension_numbers<[1], [0], [0], [1], [0, 0, 1, 1], [], []>} : vector<8x128xbf16>, vector<128x128xbf16>, vector<8x128xf32> -> vector<8x128xf32>
    %302 = arith.addf %299, %301 : vector<8x128xf32>
    %cst_154 = arith.constant 5.000000e-01 : f32
    %303 = vector.broadcast %cst_154 : f32 to vector<8x128xf32>
    %304 = arith.mulf %303, %302 : vector<8x128xf32>
    %305 = math.tanh %304 : vector<8x128xf32>
    %cst_155 = arith.constant 5.000000e-01 : f32
    %306 = vector.broadcast %cst_155 : f32 to vector<8x128xf32>
    %307 = arith.mulf %306, %305 : vector<8x128xf32>
    %cst_156 = arith.constant 5.000000e-01 : f32
    %308 = vector.broadcast %cst_156 : f32 to vector<8x128xf32>
    %309 = arith.addf %307, %308 : vector<8x128xf32>
    %310 = vector.extract_strided_slice %298 {offsets = [0, 128], sizes = [8, 128], strides = [1, 1]} : vector<8x512xf32> to vector<8x128xf32>
    %c0_157 = arith.constant 0 : index
    %c128_158 = arith.constant 128 : index
    %311 = vector.load %arg5[%c0_157, %c128_158] : memref<128x512xbf16, #tpu.memory_space<vmem>>, vector<128x128xbf16>
    %cst_159 = arith.constant dense<0.000000e+00> : vector<8x128xf32>
    %312 = tpu.matmul %295, %311, %cst_159 {dimension_numbers = #tpu.dot_dimension_numbers<[1], [0], [0], [1], [0, 0, 1, 1], [], []>} : vector<8x128xbf16>, vector<128x128xbf16>, vector<8x128xf32> -> vector<8x128xf32>
    %313 = arith.addf %310, %312 : vector<8x128xf32>
    %cst_160 = arith.constant 5.000000e-01 : f32
    %314 = vector.broadcast %cst_160 : f32 to vector<8x128xf32>
    %315 = arith.mulf %314, %313 : vector<8x128xf32>
    %316 = math.tanh %315 : vector<8x128xf32>
    %cst_161 = arith.constant 5.000000e-01 : f32
    %317 = vector.broadcast %cst_161 : f32 to vector<8x128xf32>
    %318 = arith.mulf %317, %316 : vector<8x128xf32>
    %cst_162 = arith.constant 5.000000e-01 : f32
    %319 = vector.broadcast %cst_162 : f32 to vector<8x128xf32>
    %320 = arith.addf %318, %319 : vector<8x128xf32>
    %321 = vector.extract_strided_slice %298 {offsets = [0, 256], sizes = [8, 128], strides = [1, 1]} : vector<8x512xf32> to vector<8x128xf32>
    %c0_163 = arith.constant 0 : index
    %c256_164 = arith.constant 256 : index
    %322 = vector.load %arg5[%c0_163, %c256_164] : memref<128x512xbf16, #tpu.memory_space<vmem>>, vector<128x128xbf16>
    %cst_165 = arith.constant dense<0.000000e+00> : vector<8x128xf32>
    %323 = tpu.matmul %295, %322, %cst_165 {dimension_numbers = #tpu.dot_dimension_numbers<[1], [0], [0], [1], [0, 0, 1, 1], [], []>} : vector<8x128xbf16>, vector<128x128xbf16>, vector<8x128xf32> -> vector<8x128xf32>
    %324 = arith.addf %321, %323 : vector<8x128xf32>
    %325 = math.tanh %324 : vector<8x128xf32>
    %326 = vector.extract_strided_slice %298 {offsets = [0, 384], sizes = [8, 128], strides = [1, 1]} : vector<8x512xf32> to vector<8x128xf32>
    %c0_166 = arith.constant 0 : index
    %c384_167 = arith.constant 384 : index
    %327 = vector.load %arg5[%c0_166, %c384_167] : memref<128x512xbf16, #tpu.memory_space<vmem>>, vector<128x128xbf16>
    %cst_168 = arith.constant dense<0.000000e+00> : vector<8x128xf32>
    %328 = tpu.matmul %295, %327, %cst_168 {dimension_numbers = #tpu.dot_dimension_numbers<[1], [0], [0], [1], [0, 0, 1, 1], [], []>} : vector<8x128xbf16>, vector<128x128xbf16>, vector<8x128xf32> -> vector<8x128xf32>
    %329 = arith.addf %326, %328 : vector<8x128xf32>
    %cst_169 = arith.constant 5.000000e-01 : f32
    %330 = vector.broadcast %cst_169 : f32 to vector<8x128xf32>
    %331 = arith.mulf %330, %329 : vector<8x128xf32>
    %332 = math.tanh %331 : vector<8x128xf32>
    %cst_170 = arith.constant 5.000000e-01 : f32
    %333 = vector.broadcast %cst_170 : f32 to vector<8x128xf32>
    %334 = arith.mulf %333, %332 : vector<8x128xf32>
    %cst_171 = arith.constant 5.000000e-01 : f32
    %335 = vector.broadcast %cst_171 : f32 to vector<8x128xf32>
    %336 = arith.addf %334, %335 : vector<8x128xf32>
    %337 = arith.mulf %320, %292 : vector<8x128xf32>
    %338 = arith.mulf %309, %325 : vector<8x128xf32>
    %339 = arith.addf %337, %338 : vector<8x128xf32>
    %340 = math.tanh %339 : vector<8x128xf32>
    %341 = arith.mulf %336, %340 : vector<8x128xf32>
    %c7_i32 = arith.constant 7 : i32
    %342 = arith.truncf %341 : vector<8x128xf32> to vector<8x128xbf16>
    %343 = arith.index_cast %c7_i32 : i32 to index
    %c0_172 = arith.constant 0 : index
    %c0_173 = arith.constant 0 : index
    %344 = vector.load %arg7[%343, %c0_172, %c0_173] : memref<8x8x512xf32, #tpu.memory_space<vmem>>, vector<1x8x512xf32>
    %345 = vector.shape_cast %344 : vector<1x8x512xf32> to vector<8x512xf32>
    %346 = vector.extract_strided_slice %345 {offsets = [0, 0], sizes = [8, 128], strides = [1, 1]} : vector<8x512xf32> to vector<8x128xf32>
    %c0_174 = arith.constant 0 : index
    %c0_175 = arith.constant 0 : index
    %347 = vector.load %arg5[%c0_174, %c0_175] : memref<128x512xbf16, #tpu.memory_space<vmem>>, vector<128x128xbf16>
    %cst_176 = arith.constant dense<0.000000e+00> : vector<8x128xf32>
    %348 = tpu.matmul %342, %347, %cst_176 {dimension_numbers = #tpu.dot_dimension_numbers<[1], [0], [0], [1], [0, 0, 1, 1], [], []>} : vector<8x128xbf16>, vector<128x128xbf16>, vector<8x128xf32> -> vector<8x128xf32>
    %349 = arith.addf %346, %348 : vector<8x128xf32>
    %cst_177 = arith.constant 5.000000e-01 : f32
    %350 = vector.broadcast %cst_177 : f32 to vector<8x128xf32>
    %351 = arith.mulf %350, %349 : vector<8x128xf32>
    %352 = math.tanh %351 : vector<8x128xf32>
    %cst_178 = arith.constant 5.000000e-01 : f32
    %353 = vector.broadcast %cst_178 : f32 to vector<8x128xf32>
    %354 = arith.mulf %353, %352 : vector<8x128xf32>
    %cst_179 = arith.constant 5.000000e-01 : f32
    %355 = vector.broadcast %cst_179 : f32 to vector<8x128xf32>
    %356 = arith.addf %354, %355 : vector<8x128xf32>
    %357 = vector.extract_strided_slice %345 {offsets = [0, 128], sizes = [8, 128], strides = [1, 1]} : vector<8x512xf32> to vector<8x128xf32>
    %c0_180 = arith.constant 0 : index
    %c128_181 = arith.constant 128 : index
    %358 = vector.load %arg5[%c0_180, %c128_181] : memref<128x512xbf16, #tpu.memory_space<vmem>>, vector<128x128xbf16>
    %cst_182 = arith.constant dense<0.000000e+00> : vector<8x128xf32>
    %359 = tpu.matmul %342, %358, %cst_182 {dimension_numbers = #tpu.dot_dimension_numbers<[1], [0], [0], [1], [0, 0, 1, 1], [], []>} : vector<8x128xbf16>, vector<128x128xbf16>, vector<8x128xf32> -> vector<8x128xf32>
    %360 = arith.addf %357, %359 : vector<8x128xf32>
    %cst_183 = arith.constant 5.000000e-01 : f32
    %361 = vector.broadcast %cst_183 : f32 to vector<8x128xf32>
    %362 = arith.mulf %361, %360 : vector<8x128xf32>
    %363 = math.tanh %362 : vector<8x128xf32>
    %cst_184 = arith.constant 5.000000e-01 : f32
    %364 = vector.broadcast %cst_184 : f32 to vector<8x128xf32>
    %365 = arith.mulf %364, %363 : vector<8x128xf32>
    %cst_185 = arith.constant 5.000000e-01 : f32
    %366 = vector.broadcast %cst_185 : f32 to vector<8x128xf32>
    %367 = arith.addf %365, %366 : vector<8x128xf32>
    %368 = vector.extract_strided_slice %345 {offsets = [0, 256], sizes = [8, 128], strides = [1, 1]} : vector<8x512xf32> to vector<8x128xf32>
    %c0_186 = arith.constant 0 : index
    %c256_187 = arith.constant 256 : index
    %369 = vector.load %arg5[%c0_186, %c256_187] : memref<128x512xbf16, #tpu.memory_space<vmem>>, vector<128x128xbf16>
    %cst_188 = arith.constant dense<0.000000e+00> : vector<8x128xf32>
    %370 = tpu.matmul %342, %369, %cst_188 {dimension_numbers = #tpu.dot_dimension_numbers<[1], [0], [0], [1], [0, 0, 1, 1], [], []>} : vector<8x128xbf16>, vector<128x128xbf16>, vector<8x128xf32> -> vector<8x128xf32>
    %371 = arith.addf %368, %370 : vector<8x128xf32>
    %372 = math.tanh %371 : vector<8x128xf32>
    %373 = vector.extract_strided_slice %345 {offsets = [0, 384], sizes = [8, 128], strides = [1, 1]} : vector<8x512xf32> to vector<8x128xf32>
    %c0_189 = arith.constant 0 : index
    %c384_190 = arith.constant 384 : index
    %374 = vector.load %arg5[%c0_189, %c384_190] : memref<128x512xbf16, #tpu.memory_space<vmem>>, vector<128x128xbf16>
    %cst_191 = arith.constant dense<0.000000e+00> : vector<8x128xf32>
    %375 = tpu.matmul %342, %374, %cst_191 {dimension_numbers = #tpu.dot_dimension_numbers<[1], [0], [0], [1], [0, 0, 1, 1], [], []>} : vector<8x128xbf16>, vector<128x128xbf16>, vector<8x128xf32> -> vector<8x128xf32>
    %376 = arith.addf %373, %375 : vector<8x128xf32>
    %cst_192 = arith.constant 5.000000e-01 : f32
    %377 = vector.broadcast %cst_192 : f32 to vector<8x128xf32>
    %378 = arith.mulf %377, %376 : vector<8x128xf32>
    %379 = math.tanh %378 : vector<8x128xf32>
    %cst_193 = arith.constant 5.000000e-01 : f32
    %380 = vector.broadcast %cst_193 : f32 to vector<8x128xf32>
    %381 = arith.mulf %380, %379 : vector<8x128xf32>
    %cst_194 = arith.constant 5.000000e-01 : f32
    %382 = vector.broadcast %cst_194 : f32 to vector<8x128xf32>
    %383 = arith.addf %381, %382 : vector<8x128xf32>
    %384 = arith.mulf %367, %339 : vector<8x128xf32>
    %385 = arith.mulf %356, %372 : vector<8x128xf32>
    %386 = arith.addf %384, %385 : vector<8x128xf32>
    %387 = math.tanh %386 : vector<8x128xf32>
    %388 = arith.mulf %383, %387 : vector<8x128xf32>
    %c8_i32 = arith.constant 8 : i32
    %c0_195 = arith.constant 0 : index
    %c0_196 = arith.constant 0 : index
    %389 = vector.load %arg8[%c0_195, %c0_196] : memref<8x128xf32, #tpu.memory_space<vmem>>, vector<8x128xf32>
    tpu.vector_store %arg8[%c0_195, %c0_196], %388 {strides = array<i32>} : memref<8x128xf32, #tpu.memory_space<vmem>>, vector<8x128xf32>,
    %c0_197 = arith.constant 0 : index
    %c0_198 = arith.constant 0 : index
    %390 = vector.load %arg9[%c0_197, %c0_198] : memref<8x128xf32, #tpu.memory_space<vmem>>, vector<8x128xf32>
    tpu.vector_store %arg9[%c0_197, %c0_198], %386 {strides = array<i32>} : memref<8x128xf32, #tpu.memory_space<vmem>>, vector<8x128xf32>,
    %c0_i32_199 = arith.constant 0 : i32
    %391 = arith.cmpi eq, %arg1, %c0_i32_199 : i32
    %392 = arith.extui %391 : i1 to i32
    %c0_i32_200 = arith.constant 0 : i32
    %393 = arith.cmpi ne, %392, %c0_i32_200 : i32
    scf.if %393 {
      %c0_201 = arith.constant 0 : index
      %c0_202 = arith.constant 0 : index
      %394 = vector.load %arg6[%c0_201, %c0_202] : memref<8x128xf32, #tpu.memory_space<vmem>>, vector<8x128xf32>
      tpu.vector_store %arg6[%c0_201, %c0_202], %388 {strides = array<i32>} : memref<8x128xf32, #tpu.memory_space<vmem>>, vector<8x128xf32>,
    } else {
    }
    return
  }
  func.func @transform_0(%arg0: i32, %arg1: i32) -> (i32, i32) {
    %c1_i32 = arith.constant 1 : i32
    %0 = arith.muli %arg0, %c1_i32 : i32
    %1 = arith.addi %0, %arg1 : i32
    %c0_i32 = arith.constant 0 : i32
    %c0_i32_0 = arith.constant 0 : i32
    return %1, %c0_i32 : i32, i32
  }
  func.func @transform_1(%arg0: i32, %arg1: i32) -> (i32, i32) {
    %c0_i32 = arith.constant 0 : i32
    %c0_i32_0 = arith.constant 0 : i32
    %c0_i32_1 = arith.constant 0 : i32
    return %c0_i32, %c0_i32_0 : i32, i32
  }
  func.func @transform_2(%arg0: i32, %arg1: i32) -> (i32, i32) {
    %c0_i32 = arith.constant 0 : i32
    %c0_i32_0 = arith.constant 0 : i32
    %c0_i32_1 = arith.constant 0 : i32
    return %c0_i32, %c0_i32_0 : i32, i32
  }
  func.func @transform_3(%arg0: i32, %arg1: i32) -> (i32, i32) {
    %c0_i32 = arith.constant 0 : i32
    %c0_i32_0 = arith.constant 0 : i32
    %c0_i32_1 = arith.constant 0 : i32
    return %c0_i32, %c0_i32_0 : i32, i32
  }
  func.func @transform_4(%arg0: i32, %arg1: i32) -> (i32, i32) {
    %c0_i32 = arith.constant 0 : i32
    %c0_i32_0 = arith.constant 0 : i32
    return %arg0, %c0_i32 : i32, i32
  }
}

</mosaic_0001>

<llo_original>
// kernel: tpu_custom_call.1
$region0: #{tpu_custom_call.1}
  #allocation0 [shape = 'u32[]', space=smem, size = 0x4, offset = 0x4, fixed_abs, tag = 'smem constant byte address 0x4 - core index']
  #allocation1 [shape = 'u32[144,128]{1,0:T(1,128)}', space=vmem, size = 0x12000, scoped, tag = 'internal scratch']
  #allocation2 [shape = 'f32[8,8,512]{2,1,0:T(8,128)}', space=vmem, size = 0x20000, scoped, tag = 'scratch operand']
  #allocation3 [shape = 'f32[8,128]{1,0:T(8,128)}', space=vmem, size = 0x1000, scoped, tag = 'scratch operand']
  #allocation4 [shape = 'f32[8,128]{1,0:T(8,128)}', space=vmem, size = 0x1000, scoped, tag = 'scratch operand']
  %s0 = inlined_call_operand.hbm [shape: bf16[64,128], index: 0, kind: input, shape index: {}]
  %s1 = inlined_call_operand.hbm [shape: bf16[128,512], index: 1, kind: input, shape index: {}]
  %s2 = inlined_call_operand.vmem [shape: f32[1,512], index: 2, kind: input, shape index: {}]
  %s3 = inlined_call_operand.hbm [shape: bf16[128,512], index: 3, kind: input, shape index: {}]
  %s4 = inlined_call_operand.hbm [shape: f32[8,128], index: 4, kind: output, shape index: {}]
  %s5 = sld [smem:[#allocation0]]
  $region46: #{tpu_custom_call.1} parent=0
    _
  %s7 = ssub.s32 1, %s5
  %s8 = scalar_select 0, %s7, %s5
  $region1: #{tpu_custom_call.1} parent=0
    #allocation5 [shape = 'u8[16384]{0}', space=vmem, size = 0x4000, scoped, tag = 'input window, operand 0, single buffered']
    #allocation6 [shape = 's32[1]{0}', space=sflag, size = 0x4, scoped, tag = 'scoped memory for tpu_custom_call.1']
    #allocation7 [shape = 's32[1]{0}', space=sflag, size = 0x4, scoped, tag = 'scoped memory for tpu_custom_call.1']
    #allocation8 [shape = 'u8[131072]{0}', space=vmem, size = 0x20000, scoped, tag = 'input window, operand 1, single buffered']
    #allocation9 [shape = 's32[1]{0}', space=sflag, size = 0x4, scoped, tag = 'scoped memory for tpu_custom_call.1']
    #allocation10 [shape = 'u8[131072]{0}', space=vmem, size = 0x20000, scoped, tag = 'input window, operand 3, single buffered']
    #allocation11 [shape = 'u8[4096]{0}', space=vmem, size = 0x1000, scoped, tag = 'output window, operand 0, single buffered']
    %9 = vsyncpa [#allocation6], 0
    %10 = vsyncpa [#allocation9], 0
    %11 = vsyncpa [#allocation7], 0
    // Predicated region
    $region2: #{tpu_custom_call.1} parent=1 // pred_check
      _
    $region3: #{tpu_custom_call.1} parent=1 // pred_check_branch
      %13 = sbr.rel (0) target = $region5
    $region4: #{tpu_custom_call.1} parent=1 // pred_region
      %s14 = sadd.s32 0, 0
      %s15 = smul.u32 8, %s14
      %s17 = ssub.s32 512, 512
      %18 = vsyncadd [#allocation6], %s17
      %s19 = smul.addr %s15, 64
      %s20 = scalar_lea.hbm %s0, %s19
      %s21 = sshll.u32 [#allocation5], 4
      %s22 = int_to_ptr.vmem [resolvable:$true] %s21
      %27 = dma.hbm_to_vmem [thread:$0]  %s20, 512, %s22, [#allocation6], 64, 64, 4
    $region5: #{tpu_custom_call.1} parent=1 // pred_fallthru
      _
    // Predicated region
    $region6: #{tpu_custom_call.1} parent=1 // pred_check
      _
    $region7: #{tpu_custom_call.1} parent=1 // pred_check_branch
      %29 = sbr.rel (0) target = $region9
    $region8: #{tpu_custom_call.1} parent=1 // pred_region
      %s31 = ssub.s32 4096, 4096
      %32 = vsyncadd [#allocation9], %s31
      %s33 = sshll.u32 [#allocation8], 4
      %s34 = int_to_ptr.vmem [resolvable:$true] %s33
      %39 = dma.hbm_to_vmem [thread:$0]  %s1, 4096, %s34, [#allocation9], 256, 256, 16
    $region9: #{tpu_custom_call.1} parent=1 // pred_fallthru
      _
    // Predicated region
    $region10: #{tpu_custom_call.1} parent=1 // pred_check
      _
    $region11: #{tpu_custom_call.1} parent=1 // pred_check_branch
      %41 = sbr.rel (0) target = $region13
    $region12: #{tpu_custom_call.1} parent=1 // pred_region
      _
    $region13: #{tpu_custom_call.1} parent=1 // pred_fallthru
      _
    // Predicated region
    $region14: #{tpu_custom_call.1} parent=1 // pred_check
      _
    $region15: #{tpu_custom_call.1} parent=1 // pred_check_branch
      %43 = sbr.rel (0) target = $region17
    $region16: #{tpu_custom_call.1} parent=1 // pred_region
      %s45 = ssub.s32 4096, 4096
      %46 = vsyncadd [#allocation9], %s45
      %s47 = sshll.u32 [#allocation10], 4
      %s48 = int_to_ptr.vmem [resolvable:$true] %s47
      %53 = dma.hbm_to_vmem [thread:$0]  %s3, 4096, %s48, [#allocation9], 256, 256, 16
    $region17: #{tpu_custom_call.1} parent=1 // pred_fallthru
      _
    // Predicated region
    $region18: #{tpu_custom_call.1} parent=1 // pred_check
      _
    $region19: #{tpu_custom_call.1} parent=1 // pred_check_branch
      %55 = sbr.rel (0) target = $region21
    $region20: #{tpu_custom_call.1} parent=1 // pred_region
      %56 = dma.done [#allocation6], 512
    $region21: #{tpu_custom_call.1} parent=1 // pred_fallthru
      _
    // Predicated region
    $region22: #{tpu_custom_call.1} parent=1 // pred_check
      _
    $region23: #{tpu_custom_call.1} parent=1 // pred_check_branch
      %58 = sbr.rel (0) target = $region25
    $region24: #{tpu_custom_call.1} parent=1 // pred_region
      %59 = dma.done [#allocation9], 4096
    $region25: #{tpu_custom_call.1} parent=1 // pred_fallthru
      _
    // Predicated region
    $region26: #{tpu_custom_call.1} parent=1 // pred_check
      _
    $region27: #{tpu_custom_call.1} parent=1 // pred_check_branch
      %61 = sbr.rel (0) target = $region29
    $region28: #{tpu_custom_call.1} parent=1 // pred_region
      %62 = dma.done [#allocation9], 4096
    $region29: #{tpu_custom_call.1} parent=1 // pred_fallthru
      _
    %s63 = sadd.s32 0, 0
    %s64 = smul.u32 8, %s63
    %p66 = scmp.eq.s32.totalorder 0, 0
    // Predicated region
    $region30: #{tpu_custom_call.1} parent=1 // pred_check
      %p67 = pneg %p66
    $region31: #{tpu_custom_call.1} parent=1 // pred_check_branch
      %69 = sbr.rel (%p67) target = $region33
    $region32: #{tpu_custom_call.1} parent=1 // pred_region
      %70 = vst [vmem:[#allocation3] sm:$0xff] 0.0
      %71 = vst [vmem:[#allocation4] sm:$0xff] 0.0
    $region33: #{tpu_custom_call.1} parent=1 // pred_fallthru
      _
    %v72 = vld [vmem:[#allocation5] sm:$0xf]
    %v73 = vld [vmem:[#allocation5 + $0x4] sm:$0xf]
    %v74 = vld [vmem:[#allocation5 + $0x8] sm:$0xf]
    %v75 = vld [vmem:[#allocation5 + $0xc] sm:$0xf]
    %v76 = vld [vmem:[#allocation5 + $0x10] sm:$0xf]
    %v77 = vld [vmem:[#allocation5 + $0x14] sm:$0xf]
    %v78 = vld [vmem:[#allocation5 + $0x18] sm:$0xf]
    %v79 = vld [vmem:[#allocation5 + $0x1c] sm:$0xf]
    %v80 = vld [vmem:[#allocation8] sm:$0xff]
    %v81 = vld [vmem:[#allocation8 + $0x8] sm:$0xff]
    %v82 = vld [vmem:[#allocation8 + $0x10] sm:$0xff]
    %v83 = vld [vmem:[#allocation8 + $0x18] sm:$0xff]
    %v84 = vld [vmem:[#allocation8 + $0x20] sm:$0xff]
    %v85 = vld [vmem:[#allocation8 + $0x28] sm:$0xff]
    %v86 = vld [vmem:[#allocation8 + $0x30] sm:$0xff]
    %v87 = vld [vmem:[#allocation8 + $0x38] sm:$0xff]
    %v88 = vld [vmem:[#allocation8 + $0x40] sm:$0xff]
    %v89 = vld [vmem:[#allocation8 + $0x48] sm:$0xff]
    %v90 = vld [vmem:[#allocation8 + $0x50] sm:$0xff]
    %v91 = vld [vmem:[#allocation8 + $0x58] sm:$0xff]
    %v92 = vld [vmem:[#allocation8 + $0x60] sm:$0xff]
    %v93 = vld [vmem:[#allocation8 + $0x68] sm:$0xff]
    %v94 = vld [vmem:[#allocation8 + $0x70] sm:$0xff]
    %v95 = vld [vmem:[#allocation8 + $0x78] sm:$0xff]
    %v96 = vld [vmem:[#allocation8 + $0x80] sm:$0xff]
    %v97 = vld [vmem:[#allocation8 + $0x88] sm:$0xff]
    %v98 = vld [vmem:[#allocation8 + $0x90] sm:$0xff]
    %v99 = vld [vmem:[#allocation8 + $0x98] sm:$0xff]
    %v100 = vld [vmem:[#allocation8 + $0xa0] sm:$0xff]
    %v101 = vld [vmem:[#allocation8 + $0xa8] sm:$0xff]
    %v102 = vld [vmem:[#allocation8 + $0xb0] sm:$0xff]
    %v103 = vld [vmem:[#allocation8 + $0xb8] sm:$0xff]
    %v104 = vld [vmem:[#allocation8 + $0xc0] sm:$0xff]
    %v105 = vld [vmem:[#allocation8 + $0xc8] sm:$0xff]
    %v106 = vld [vmem:[#allocation8 + $0xd0] sm:$0xff]
    %v107 = vld [vmem:[#allocation8 + $0xd8] sm:$0xff]
    %v108 = vld [vmem:[#allocation8 + $0xe0] sm:$0xff]
    %v109 = vld [vmem:[#allocation8 + $0xe8] sm:$0xff]
    %v110 = vld [vmem:[#allocation8 + $0xf0] sm:$0xff]
    %v111 = vld [vmem:[#allocation8 + $0xf8] sm:$0xff]
    %v112 = vld [vmem:[%s2] sm:$0xf]
    %v114 = vlaneseq
    %v115 = vshrl.u32 %v114, 7
    %v116 = vsub.s32 0, %v115
    %v117 = vrot.slane %v112, %v116
    %v118 = vlaneseq
    %v119 = vshrl.u32 %v118, 7
    %v120 = vsub.s32 1, %v119
    %v121 = vrot.slane %v112, %v120
    %v122 = vlaneseq
    %v123 = vshrl.u32 %v122, 7
    %v124 = vsub.s32 2, %v123
    %v125 = vrot.slane %v112, %v124
    %v126 = vlaneseq
    %v127 = vshrl.u32 %v126, 7
    %v128 = vsub.s32 3, %v127
    %v129 = vrot.slane %v112, %v128
    %v142 = vunpack.c.l.b16 %v72
    %v143 = vunpack.c.l.b16 %v73
    %v144 = vunpack.c.l.b16 %v74
    %v145 = vunpack.c.l.b16 %v75
    %v146 = vunpack.c.l.b16 %v76
    %v147 = vunpack.c.l.b16 %v77
    %v148 = vunpack.c.l.b16 %v78
    %v149 = vunpack.c.l.b16 %v79
    %v150 = vpack.c.b16 %v143, %v142
    %v151 = vpack.c.b16 %v145, %v144
    %v152 = vpack.c.b16 %v147, %v146
    %v153 = vpack.c.b16 %v149, %v148
    %v190 = vunpack.c.l.b16 %v80
    %v191 = vunpack.c.h.b16 %v80
    %v192 = vunpack.c.l.b16 %v81
    %v193 = vunpack.c.h.b16 %v81
    %v194 = vunpack.c.l.b16 %v82
    %v195 = vunpack.c.h.b16 %v82
    %v196 = vunpack.c.l.b16 %v83
    %v197 = vunpack.c.h.b16 %v83
    %v198 = vunpack.c.l.b16 %v84
    %v199 = vunpack.c.h.b16 %v84
    %v200 = vunpack.c.l.b16 %v85
    %v201 = vunpack.c.h.b16 %v85
    %v202 = vunpack.c.l.b16 %v86
    %v203 = vunpack.c.h.b16 %v86
    %v204 = vunpack.c.l.b16 %v87
    %v205 = vunpack.c.h.b16 %v87
    %v206 = vunpack.c.l.b16 %v88
    %v207 = vunpack.c.h.b16 %v88
    %v208 = vunpack.c.l.b16 %v89
    %v209 = vunpack.c.h.b16 %v89
    %v210 = vunpack.c.l.b16 %v90
    %v211 = vunpack.c.h.b16 %v90
    %v212 = vunpack.c.l.b16 %v91
    %v213 = vunpack.c.h.b16 %v91
    %v214 = vunpack.c.l.b16 %v92
    %v215 = vunpack.c.h.b16 %v92
    %v216 = vunpack.c.l.b16 %v93
    %v217 = vunpack.c.h.b16 %v93
    %v218 = vunpack.c.l.b16 %v94
    %v219 = vunpack.c.h.b16 %v94
    %v220 = vunpack.c.l.b16 %v95
    %v221 = vunpack.c.h.b16 %v95
    %v222 = vunpack.c.l.b16 %v96
    %v223 = vunpack.c.h.b16 %v96
    %v224 = vunpack.c.l.b16 %v97
    %v225 = vunpack.c.h.b16 %v97
    %v226 = vunpack.c.l.b16 %v98
    %v227 = vunpack.c.h.b16 %v98
    %v228 = vunpack.c.l.b16 %v99
    %v229 = vunpack.c.h.b16 %v99
    %v230 = vunpack.c.l.b16 %v100
    %v231 = vunpack.c.h.b16 %v100
    %v232 = vunpack.c.l.b16 %v101
    %v233 = vunpack.c.h.b16 %v101
    %v234 = vunpack.c.l.b16 %v102
    %v235 = vunpack.c.h.b16 %v102
    %v236 = vunpack.c.l.b16 %v103
    %v237 = vunpack.c.h.b16 %v103
    %v238 = vunpack.c.l.b16 %v104
    %v239 = vunpack.c.h.b16 %v104
    %v240 = vunpack.c.l.b16 %v105
    %v241 = vunpack.c.h.b16 %v105
    %v242 = vunpack.c.l.b16 %v106
    %v243 = vunpack.c.h.b16 %v106
    %v244 = vunpack.c.l.b16 %v107
    %v245 = vunpack.c.h.b16 %v107
    %v246 = vunpack.c.l.b16 %v108
    %v247 = vunpack.c.h.b16 %v108
    %v248 = vunpack.c.l.b16 %v109
    %v249 = vunpack.c.h.b16 %v109
    %v250 = vunpack.c.l.b16 %v110
    %v251 = vunpack.c.h.b16 %v110
    %v252 = vunpack.c.l.b16 %v111
    %v253 = vunpack.c.h.b16 %v111
    %v254 = vpack.c.b16 %v194, %v190
    %v255 = vpack.c.b16 %v195, %v191
    %v256 = vpack.c.b16 %v196, %v192
    %v257 = vpack.c.b16 %v197, %v193
    %v258 = vpack.c.b16 %v202, %v198
    %v259 = vpack.c.b16 %v203, %v199
    %v260 = vpack.c.b16 %v204, %v200
    %v261 = vpack.c.b16 %v205, %v201
    %v262 = vpack.c.b16 %v210, %v206
    %v263 = vpack.c.b16 %v211, %v207
    %v264 = vpack.c.b16 %v212, %v208
    %v265 = vpack.c.b16 %v213, %v209
    %v266 = vpack.c.b16 %v218, %v214
    %v267 = vpack.c.b16 %v219, %v215
    %v268 = vpack.c.b16 %v220, %v216
    %v269 = vpack.c.b16 %v221, %v217
    %v270 = vpack.c.b16 %v226, %v222
    %v271 = vpack.c.b16 %v227, %v223
    %v272 = vpack.c.b16 %v228, %v224
    %v273 = vpack.c.b16 %v229, %v225
    %v274 = vpack.c.b16 %v234, %v230
    %v275 = vpack.c.b16 %v235, %v231
    %v276 = vpack.c.b16 %v236, %v232
    %v277 = vpack.c.b16 %v237, %v233
    %v278 = vpack.c.b16 %v242, %v238
    %v279 = vpack.c.b16 %v243, %v239
    %v280 = vpack.c.b16 %v244, %v240
    %v281 = vpack.c.b16 %v245, %v241
    %v282 = vpack.c.b16 %v250, %v246
    %v283 = vpack.c.b16 %v251, %v247
    %v284 = vpack.c.b16 %v252, %v248
    %v285 = vpack.c.b16 %v253, %v249
    %318 = vmatprep.subr.bf16.mxu0 %v255
    %319 = vmatpush1.bf16.msra.mxu0 %v254
    %320 = vmatprep.subr.bf16.mxu0 %v259
    %321 = vmatpush1.bf16.msra.mxu0 %v258
    %322 = vmatprep.subr.bf16.mxu0 %v263
    %323 = vmatpush1.bf16.msra.mxu0 %v262
    %324 = vmatprep.subr.bf16.mxu0 %v267
    %325 = vmatpush1.bf16.msra.mxu0 %v266
    %326 = vmatprep.subr.bf16.mxu0 %v271
    %327 = vmatpush1.bf16.msra.mxu0 %v270
    %328 = vmatprep.subr.bf16.mxu0 %v275
    %329 = vmatpush1.bf16.msra.mxu0 %v274
    %330 = vmatprep.subr.bf16.mxu0 %v279
    %331 = vmatpush1.bf16.msra.mxu0 %v278
    %332 = vmatprep.subr.bf16.mxu0 %v283
    %333 = vmatpush1.bf16.msra.mxu0 %v282
    %334 = vmatprep.subr.bf16.mxu0 0
    %335 = vmatpush1.bf16.msra.mxu0 0
    %336 = vmatprep.subr.bf16.mxu0 0
    %337 = vmatpush1.bf16.msra.mxu0 0
    %338 = vmatprep.subr.bf16.mxu0 0
    %339 = vmatpush1.bf16.msra.mxu0 0
    %340 = vmatprep.subr.bf16.mxu0 0
    %341 = vmatpush1.bf16.msra.mxu0 0
    %342 = vmatprep.subr.bf16.mxu0 0
    %343 = vmatpush1.bf16.msra.mxu0 0
    %344 = vmatprep.subr.bf16.mxu0 0
    %345 = vmatpush1.bf16.msra.mxu0 0
    %346 = vmatprep.subr.bf16.mxu0 0
    %347 = vmatpush1.bf16.msra.mxu0 0
    %348 = vmatprep.subr.bf16.mxu0 0
    %349 = vmatpush1.bf16.msra.mxu0 0
    %350 = vmatprep.mubr.bf16.mxu0 0
    %351 = vmatmul.mubr.bf16.gmra.mrb[0].mxu0 %v150
    %v352 = vpop.f32.mrb[0].mxu0
    %v353 = vadd.f32 %v117, %v352
    %v354 = vpop.f32.mrb[0].mxu0
    %v355 = vadd.f32 %v121, %v354
    %v356 = vpop.f32.mrb[0].mxu0
    %v357 = vadd.f32 %v117, %v356
    %v358 = vpop.f32.mrb[0].mxu0
    %v359 = vadd.f32 %v121, %v358
    %360 = vmatprep.mubr.bf16.mxu0 0
    %361 = vmatmul.mubr.bf16.gmra.mrb[0].mxu0 %v151
    %v362 = vpop.f32.mrb[0].mxu0
    %v363 = vadd.f32 %v117, %v362
    %v364 = vpop.f32.mrb[0].mxu0
    %v365 = vadd.f32 %v121, %v364
    %v366 = vpop.f32.mrb[0].mxu0
    %v367 = vadd.f32 %v117, %v366
    %v368 = vpop.f32.mrb[0].mxu0
    %v369 = vadd.f32 %v121, %v368
    %370 = vmatprep.mubr.bf16.mxu0 0
    %371 = vmatmul.mubr.bf16.gmra.mrb[0].mxu0 %v152
    %v372 = vpop.f32.mrb[0].mxu0
    %v373 = vadd.f32 %v117, %v372
    %v374 = vpop.f32.mrb[0].mxu0
    %v375 = vadd.f32 %v121, %v374
    %v376 = vpop.f32.mrb[0].mxu0
    %v377 = vadd.f32 %v117, %v376
    %v378 = vpop.f32.mrb[0].mxu0
    %v379 = vadd.f32 %v121, %v378
    %380 = vmatprep.mubr.bf16.mxu0 0
    %381 = vmatmul.mubr.bf16.gmra.mrb[0].mxu0 %v153
    %v382 = vpop.f32.mrb[0].mxu0
    %v383 = vadd.f32 %v117, %v382
    %v384 = vpop.f32.mrb[0].mxu0
    %v385 = vadd.f32 %v121, %v384
    %v386 = vpop.f32.mrb[0].mxu0
    %v387 = vadd.f32 %v117, %v386
    %v388 = vpop.f32.mrb[0].mxu0
    %v389 = vadd.f32 %v121, %v388
    %390 = vdwg.mxu0
    %391 = vmatprep.subr.bf16.mxu0 %v257
    %392 = vmatpush1.bf16.msra.mxu0 %v256
    %393 = vmatprep.subr.bf16.mxu0 %v261
    %394 = vmatpush1.bf16.msra.mxu0 %v260
    %395 = vmatprep.subr.bf16.mxu0 %v265
    %396 = vmatpush1.bf16.msra.mxu0 %v264
    %397 = vmatprep.subr.bf16.mxu0 %v269
    %398 = vmatpush1.bf16.msra.mxu0 %v268
    %399 = vmatprep.subr.bf16.mxu0 %v273
    %400 = vmatpush1.bf16.msra.mxu0 %v272
    %401 = vmatprep.subr.bf16.mxu0 %v277
    %402 = vmatpush1.bf16.msra.mxu0 %v276
    %403 = vmatprep.subr.bf16.mxu0 %v281
    %404 = vmatpush1.bf16.msra.mxu0 %v280
    %405 = vmatprep.subr.bf16.mxu0 %v285
    %406 = vmatpush1.bf16.msra.mxu0 %v284
    %407 = vmatprep.subr.bf16.mxu0 0
    %408 = vmatpush1.bf16.msra.mxu0 0
    %409 = vmatprep.subr.bf16.mxu0 0
    %410 = vmatpush1.bf16.msra.mxu0 0
    %411 = vmatprep.subr.bf16.mxu0 0
    %412 = vmatpush1.bf16.msra.mxu0 0
    %413 = vmatprep.subr.bf16.mxu0 0
    %414 = vmatpush1.bf16.msra.mxu0 0
    %415 = vmatprep.subr.bf16.mxu0 0
    %416 = vmatpush1.bf16.msra.mxu0 0
    %417 = vmatprep.subr.bf16.mxu0 0
    %418 = vmatpush1.bf16.msra.mxu0 0
    %419 = vmatprep.subr.bf16.mxu0 0
    %420 = vmatpush1.bf16.msra.mxu0 0
    %421 = vmatprep.subr.bf16.mxu0 0
    %422 = vmatpush1.bf16.msra.mxu0 0
    %423 = vmatprep.mubr.bf16.mxu0 0
    %424 = vmatmul.mubr.bf16.gmra.mrb[0].mxu0 %v150
    %v425 = vpop.f32.mrb[0].mxu0
    %v426 = vadd.f32 %v125, %v425
    %v427 = vpop.f32.mrb[0].mxu0
    %v428 = vadd.f32 %v129, %v427
    %v429 = vpop.f32.mrb[0].mxu0
    %v430 = vadd.f32 %v125, %v429
    %v431 = vpop.f32.mrb[0].mxu0
    %v432 = vadd.f32 %v129, %v431
    %433 = vmatprep.mubr.bf16.mxu0 0
    %434 = vmatmul.mubr.bf16.gmra.mrb[0].mxu0 %v151
    %v435 = vpop.f32.mrb[0].mxu0
    %v436 = vadd.f32 %v125, %v435
    %v437 = vpop.f32.mrb[0].mxu0
    %v438 = vadd.f32 %v129, %v437
    %v439 = vpop.f32.mrb[0].mxu0
    %v440 = vadd.f32 %v125, %v439
    %v441 = vpop.f32.mrb[0].mxu0
    %v442 = vadd.f32 %v129, %v441
    %443 = vmatprep.mubr.bf16.mxu0 0
    %444 = vmatmul.mubr.bf16.gmra.mrb[0].mxu0 %v152
    %v445 = vpop.f32.mrb[0].mxu0
    %v446 = vadd.f32 %v125, %v445
    %v447 = vpop.f32.mrb[0].mxu0
    %v448 = vadd.f32 %v129, %v447
    %v449 = vpop.f32.mrb[0].mxu0
    %v450 = vadd.f32 %v125, %v449
    %v451 = vpop.f32.mrb[0].mxu0
    %v452 = vadd.f32 %v129, %v451
    %453 = vmatprep.mubr.bf16.mxu0 0
    %454 = vmatmul.mubr.bf16.gmra.mrb[0].mxu0 %v153
    %v455 = vpop.f32.mrb[0].mxu0
    %v456 = vadd.f32 %v125, %v455
    %v457 = vpop.f32.mrb[0].mxu0
    %v458 = vadd.f32 %v129, %v457
    %v459 = vpop.f32.mrb[0].mxu0
    %v460 = vadd.f32 %v125, %v459
    %v461 = vpop.f32.mrb[0].mxu0
    %v462 = vadd.f32 %v129, %v461
    %463 = vdwg.mxu0
    %464 = vst [vmem:[#allocation2] sm:$0xff] %v353
    %465 = vst [vmem:[#allocation2 + $0x8] sm:$0xff] %v355
    %466 = vst [vmem:[#allocation2 + $0x10] sm:$0xff] %v426
    %467 = vst [vmem:[#allocation2 + $0x18] sm:$0xff] %v428
    %468 = vst [vmem:[#allocation2 + $0x20] sm:$0xff] %v357
    %469 = vst [vmem:[#allocation2 + $0x28] sm:$0xff] %v359
    %470 = vst [vmem:[#allocation2 + $0x30] sm:$0xff] %v430
    %471 = vst [vmem:[#allocation2 + $0x38] sm:$0xff] %v432
    %472 = vst [vmem:[#allocation2 + $0x40] sm:$0xff] %v363
    %473 = vst [vmem:[#allocation2 + $0x48] sm:$0xff] %v365
    %474 = vst [vmem:[#allocation2 + $0x50] sm:$0xff] %v436
    %475 = vst [vmem:[#allocation2 + $0x58] sm:$0xff] %v438
    %476 = vst [vmem:[#allocation2 + $0x60] sm:$0xff] %v367
    %477 = vst [vmem:[#allocation2 + $0x68] sm:$0xff] %v369
    %478 = vst [vmem:[#allocation2 + $0x70] sm:$0xff] %v440
    %479 = vst [vmem:[#allocation2 + $0x78] sm:$0xff] %v442
    %480 = vst [vmem:[#allocation2 + $0x80] sm:$0xff] %v373
    %481 = vst [vmem:[#allocation2 + $0x88] sm:$0xff] %v375
    %482 = vst [vmem:[#allocation2 + $0x90] sm:$0xff] %v446
    %483 = vst [vmem:[#allocation2 + $0x98] sm:$0xff] %v448
    %484 = vst [vmem:[#allocation2 + $0xa0] sm:$0xff] %v377
    %485 = vst [vmem:[#allocation2 + $0xa8] sm:$0xff] %v379
    %486 = vst [vmem:[#allocation2 + $0xb0] sm:$0xff] %v450
    %487 = vst [vmem:[#allocation2 + $0xb8] sm:$0xff] %v452
    %488 = vst [vmem:[#allocation2 + $0xc0] sm:$0xff] %v383
    %489 = vst [vmem:[#allocation2 + $0xc8] sm:$0xff] %v385
    %490 = vst [vmem:[#allocation2 + $0xd0] sm:$0xff] %v456
    %491 = vst [vmem:[#allocation2 + $0xd8] sm:$0xff] %v458
    %492 = vst [vmem:[#allocation2 + $0xe0] sm:$0xff] %v387
    %493 = vst [vmem:[#allocation2 + $0xe8] sm:$0xff] %v389
    %494 = vst [vmem:[#allocation2 + $0xf0] sm:$0xff] %v460
    %495 = vst [vmem:[#allocation2 + $0xf8] sm:$0xff] %v462
    %v496 = vld [vmem:[#allocation3] sm:$0xff]
    %v497 = vld [vmem:[#allocation4] sm:$0xff]
    %v498 = vpack.c.bf16 %v496, %v496
    %v499 = vld [vmem:[#allocation2] sm:$0xff]
    %v500 = vld [vmem:[#allocation2 + $0x8] sm:$0xff]
    %v501 = vld [vmem:[#allocation2 + $0x10] sm:$0xff]
    %v502 = vld [vmem:[#allocation2 + $0x18] sm:$0xff]
    %v503 = vld [vmem:[#allocation10] sm:$0xf]
    %v504 = vld [vmem:[#allocation10 + $0x10] sm:$0xf]
    %v505 = vld [vmem:[#allocation10 + $0x20] sm:$0xf]
    %v506 = vld [vmem:[#allocation10 + $0x30] sm:$0xf]
    %v507 = vld [vmem:[#allocation10 + $0x40] sm:$0xf]
    %v508 = vld [vmem:[#allocation10 + $0x50] sm:$0xf]
    %v509 = vld [vmem:[#allocation10 + $0x60] sm:$0xf]
    %v510 = vld [vmem:[#allocation10 + $0x70] sm:$0xf]
    %v511 = vld [vmem:[#allocation10 + $0x80] sm:$0xf]
    %v512 = vld [vmem:[#allocation10 + $0x90] sm:$0xf]
    %v513 = vld [vmem:[#allocation10 + $0xa0] sm:$0xf]
    %v514 = vld [vmem:[#allocation10 + $0xb0] sm:$0xf]
    %v515 = vld [vmem:[#allocation10 + $0xc0] sm:$0xf]
    %v516 = vld [vmem:[#allocation10 + $0xd0] sm:$0xf]
    %v517 = vld [vmem:[#allocation10 + $0xe0] sm:$0xf]
    %v518 = vld [vmem:[#allocation10 + $0xf0] sm:$0xf]
    %v535 = vunpack.c.l.b16 %v503
    %v536 = vunpack.c.l.b16 %v504
    %v537 = vunpack.c.l.b16 %v505
    %v538 = vunpack.c.l.b16 %v506
    %v539 = vunpack.c.l.b16 %v507
    %v540 = vunpack.c.l.b16 %v508
    %v541 = vunpack.c.l.b16 %v509
    %v542 = vunpack.c.l.b16 %v510
    %v543 = vunpack.c.l.b16 %v511
    %v544 = vunpack.c.l.b16 %v512
    %v545 = vunpack.c.l.b16 %v513
    %v546 = vunpack.c.l.b16 %v514
    %v547 = vunpack.c.l.b16 %v515
    %v548 = vunpack.c.l.b16 %v516
    %v549 = vunpack.c.l.b16 %v517
    %v550 = vunpack.c.l.b16 %v518
    %v551 = vpack.c.b16 %v536, %v535
    %v552 = vpack.c.b16 %v538, %v537
    %v553 = vpack.c.b16 %v540, %v539
    %v554 = vpack.c.b16 %v542, %v541
    %v555 = vpack.c.b16 %v544, %v543
    %v556 = vpack.c.b16 %v546, %v545
    %v557 = vpack.c.b16 %v548, %v547
    %v558 = vpack.c.b16 %v550, %v549
    %567 = vmatprep.subr.bf16.mxu0 0
    %568 = vmatpush1.bf16.msra.mxu0 %v551
    %569 = vmatprep.subr.bf16.mxu0 0
    %570 = vmatpush1.bf16.msra.mxu0 %v552
    %571 = vmatprep.subr.bf16.mxu0 0
    %572 = vmatpush1.bf16.msra.mxu0 %v553
    %573 = vmatprep.subr.bf16.mxu0 0
    %574 = vmatpush1.bf16.msra.mxu0 %v554
    %575 = vmatprep.subr.bf16.mxu0 0
    %576 = vmatpush1.bf16.msra.mxu0 %v555
    %577 = vmatprep.subr.bf16.mxu0 0
    %578 = vmatpush1.bf16.msra.mxu0 %v556
    %579 = vmatprep.subr.bf16.mxu0 0
    %580 = vmatpush1.bf16.msra.mxu0 %v557
    %581 = vmatprep.subr.bf16.mxu0 0
    %582 = vmatpush1.bf16.msra.mxu0 %v558
    %583 = vmatprep.subr.bf16.mxu0 0
    %584 = vmatpush1.bf16.msra.mxu0 0
    %585 = vmatprep.subr.bf16.mxu0 0
    %586 = vmatpush1.bf16.msra.mxu0 0
    %587 = vmatprep.subr.bf16.mxu0 0
    %588 = vmatpush1.bf16.msra.mxu0 0
    %589 = vmatprep.subr.bf16.mxu0 0
    %590 = vmatpush1.bf16.msra.mxu0 0
    %591 = vmatprep.subr.bf16.mxu0 0
    %592 = vmatpush1.bf16.msra.mxu0 0
    %593 = vmatprep.subr.bf16.mxu0 0
    %594 = vmatpush1.bf16.msra.mxu0 0
    %595 = vmatprep.subr.bf16.mxu0 0
    %596 = vmatpush1.bf16.msra.mxu0 0
    %597 = vmatprep.subr.bf16.mxu0 0
    %598 = vmatpush1.bf16.msra.mxu0 0
    %599 = vmatprep.mubr.bf16.mxu0 0
    %600 = vmatmul.mubr.bf16.gmra.mrb[0].mxu0 %v498
    %v601 = vpop.f32.mrb[0].mxu0
    %v602 = vadd.f32 0.0, %v601
    %v603 = vpop.f32.mrb[0].mxu0
    %v604 = vpop.f32.mrb[0].mxu0
    %v605 = vpop.f32.mrb[0].mxu0
    %606 = vdwg.mxu0
    %v607 = vadd.f32 %v499, %v602
    %v608 = vmul.f32 %v607, 0.5
    %v609 = vtanh.pop %v608
    %v610 = vmul.f32 %v609, 0.5
    %v611 = vadd.f32 %v610, 0.5
    %v612 = vld [vmem:[#allocation10 + $0x4] sm:$0xf]
    %v613 = vld [vmem:[#allocation10 + $0x14] sm:$0xf]
    %v614 = vld [vmem:[#allocation10 + $0x24] sm:$0xf]
    %v615 = vld [vmem:[#allocation10 + $0x34] sm:$0xf]
    %v616 = vld [vmem:[#allocation10 + $0x44] sm:$0xf]
    %v617 = vld [vmem:[#allocation10 + $0x54] sm:$0xf]
    %v618 = vld [vmem:[#allocation10 + $0x64] sm:$0xf]
    %v619 = vld [vmem:[#allocation10 + $0x74] sm:$0xf]
    %v620 = vld [vmem:[#allocation10 + $0x84] sm:$0xf]
    %v621 = vld [vmem:[#allocation10 + $0x94] sm:$0xf]
    %v622 = vld [vmem:[#allocation10 + $0xa4] sm:$0xf]
    %v623 = vld [vmem:[#allocation10 + $0xb4] sm:$0xf]
    %v624 = vld [vmem:[#allocation10 + $0xc4] sm:$0xf]
    %v625 = vld [vmem:[#allocation10 + $0xd4] sm:$0xf]
    %v626 = vld [vmem:[#allocation10 + $0xe4] sm:$0xf]
    %v627 = vld [vmem:[#allocation10 + $0xf4] sm:$0xf]
    %v644 = vunpack.c.l.b16 %v612
    %v645 = vunpack.c.l.b16 %v613
    %v646 = vunpack.c.l.b16 %v614
    %v647 = vunpack.c.l.b16 %v615
    %v648 = vunpack.c.l.b16 %v616
    %v649 = vunpack.c.l.b16 %v617
    %v650 = vunpack.c.l.b16 %v618
    %v651 = vunpack.c.l.b16 %v619
    %v652 = vunpack.c.l.b16 %v620
    %v653 = vunpack.c.l.b16 %v621
    %v654 = vunpack.c.l.b16 %v622
    %v655 = vunpack.c.l.b16 %v623
    %v656 = vunpack.c.l.b16 %v624
    %v657 = vunpack.c.l.b16 %v625
    %v658 = vunpack.c.l.b16 %v626
    %v659 = vunpack.c.l.b16 %v627
    %v660 = vpack.c.b16 %v645, %v644
    %v661 = vpack.c.b16 %v647, %v646
    %v662 = vpack.c.b16 %v649, %v648
    %v663 = vpack.c.b16 %v651, %v650
    %v664 = vpack.c.b16 %v653, %v652
    %v665 = vpack.c.b16 %v655, %v654
    %v666 = vpack.c.b16 %v657, %v656
    %v667 = vpack.c.b16 %v659, %v658
    %676 = vmatprep.subr.bf16.mxu0 0
    %677 = vmatpush1.bf16.msra.mxu0 %v660
    %678 = vmatprep.subr.bf16.mxu0 0
    %679 = vmatpush1.bf16.msra.mxu0 %v661
    %680 = vmatprep.subr.bf16.mxu0 0
    %681 = vmatpush1.bf16.msra.mxu0 %v662
    %682 = vmatprep.subr.bf16.mxu0 0
    %683 = vmatpush1.bf16.msra.mxu0 %v663
    %684 = vmatprep.subr.bf16.mxu0 0
    %685 = vmatpush1.bf16.msra.mxu0 %v664
    %686 = vmatprep.subr.bf16.mxu0 0
    %687 = vmatpush1.bf16.msra.mxu0 %v665
    %688 = vmatprep.subr.bf16.mxu0 0
    %689 = vmatpush1.bf16.msra.mxu0 %v666
    %690 = vmatprep.subr.bf16.mxu0 0
    %691 = vmatpush1.bf16.msra.mxu0 %v667
    %692 = vmatprep.subr.bf16.mxu0 0
    %693 = vmatpush1.bf16.msra.mxu0 0
    %694 = vmatprep.subr.bf16.mxu0 0
    %695 = vmatpush1.bf16.msra.mxu0 0
    %696 = vmatprep.subr.bf16.mxu0 0
    %697 = vmatpush1.bf16.msra.mxu0 0
    %698 = vmatprep.subr.bf16.mxu0 0
    %699 = vmatpush1.bf16.msra.mxu0 0
    %700 = vmatprep.subr.bf16.mxu0 0
    %701 = vmatpush1.bf16.msra.mxu0 0
    %702 = vmatprep.subr.bf16.mxu0 0
    %703 = vmatpush1.bf16.msra.mxu0 0
    %704 = vmatprep.subr.bf16.mxu0 0
    %705 = vmatpush1.bf16.msra.mxu0 0
    %706 = vmatprep.subr.bf16.mxu0 0
    %707 = vmatpush1.bf16.msra.mxu0 0
    %708 = vmatprep.mubr.bf16.mxu0 0
    %709 = vmatmul.mubr.bf16.gmra.mrb[0].mxu0 %v498
    %v710 = vpop.f32.mrb[0].mxu0
    %v711 = vadd.f32 0.0, %v710
    %v712 = vpop.f32.mrb[0].mxu0
    %v713 = vpop.f32.mrb[0].mxu0
    %v714 = vpop.f32.mrb[0].mxu0
    %715 = vdwg.mxu0
    %v716 = vadd.f32 %v500, %v711
    %v717 = vmul.f32 %v716, 0.5
    %v718 = vtanh.pop %v717
    %v719 = vmul.f32 %v718, 0.5
    %v720 = vadd.f32 %v719, 0.5
    %v721 = vld [vmem:[#allocation10 + $0x8] sm:$0xf]
    %v722 = vld [vmem:[#allocation10 + $0x18] sm:$0xf]
    %v723 = vld [vmem:[#allocation10 + $0x28] sm:$0xf]
    %v724 = vld [vmem:[#allocation10 + $0x38] sm:$0xf]
    %v725 = vld [vmem:[#allocation10 + $0x48] sm:$0xf]
    %v726 = vld [vmem:[#allocation10 + $0x58] sm:$0xf]
    %v727 = vld [vmem:[#allocation10 + $0x68] sm:$0xf]
    %v728 = vld [vmem:[#allocation10 + $0x78] sm:$0xf]
    %v729 = vld [vmem:[#allocation10 + $0x88] sm:$0xf]
    %v730 = vld [vmem:[#allocation10 + $0x98] sm:$0xf]
    %v731 = vld [vmem:[#allocation10 + $0xa8] sm:$0xf]
    %v732 = vld [vmem:[#allocation10 + $0xb8] sm:$0xf]
    %v733 = vld [vmem:[#allocation10 + $0xc8] sm:$0xf]
    %v734 = vld [vmem:[#allocation10 + $0xd8] sm:$0xf]
    %v735 = vld [vmem:[#allocation10 + $0xe8] sm:$0xf]
    %v736 = vld [vmem:[#allocation10 + $0xf8] sm:$0xf]
    %v753 = vunpack.c.l.b16 %v721
    %v754 = vunpack.c.l.b16 %v722
    %v755 = vunpack.c.l.b16 %v723
    %v756 = vunpack.c.l.b16 %v724
    %v757 = vunpack.c.l.b16 %v725
    %v758 = vunpack.c.l.b16 %v726
    %v759 = vunpack.c.l.b16 %v727
    %v760 = vunpack.c.l.b16 %v728
    %v761 = vunpack.c.l.b16 %v729
    %v762 = vunpack.c.l.b16 %v730
    %v763 = vunpack.c.l.b16 %v731
    %v764 = vunpack.c.l.b16 %v732
    %v765 = vunpack.c.l.b16 %v733
    %v766 = vunpack.c.l.b16 %v734
    %v767 = vunpack.c.l.b16 %v735
    %v768 = vunpack.c.l.b16 %v736
    %v769 = vpack.c.b16 %v754, %v753
    %v770 = vpack.c.b16 %v756, %v755
    %v771 = vpack.c.b16 %v758, %v757
    %v772 = vpack.c.b16 %v760, %v759
    %v773 = vpack.c.b16 %v762, %v761
    %v774 = vpack.c.b16 %v764, %v763
    %v775 = vpack.c.b16 %v766, %v765
    %v776 = vpack.c.b16 %v768, %v767
    %785 = vmatprep.subr.bf16.mxu0 0
    %786 = vmatpush1.bf16.msra.mxu0 %v769
    %787 = vmatprep.subr.bf16.mxu0 0
    %788 = vmatpush1.bf16.msra.mxu0 %v770
    %789 = vmatprep.subr.bf16.mxu0 0
    %790 = vmatpush1.bf16.msra.mxu0 %v771
    %791 = vmatprep.subr.bf16.mxu0 0
    %792 = vmatpush1.bf16.msra.mxu0 %v772
    %793 = vmatprep.subr.bf16.mxu0 0
    %794 = vmatpush1.bf16.msra.mxu0 %v773
    %795 = vmatprep.subr.bf16.mxu0 0
    %796 = vmatpush1.bf16.msra.mxu0 %v774
    %797 = vmatprep.subr.bf16.mxu0 0
    %798 = vmatpush1.bf16.msra.mxu0 %v775
    %799 = vmatprep.subr.bf16.mxu0 0
    %800 = vmatpush1.bf16.msra.mxu0 %v776
    %801 = vmatprep.subr.bf16.mxu0 0
    %802 = vmatpush1.bf16.msra.mxu0 0
    %803 = vmatprep.subr.bf16.mxu0 0
    %804 = vmatpush1.bf16.msra.mxu0 0
    %805 = vmatprep.subr.bf16.mxu0 0
    %806 = vmatpush1.bf16.msra.mxu0 0
    %807 = vmatprep.subr.bf16.mxu0 0
    %808 = vmatpush1.bf16.msra.mxu0 0
    %809 = vmatprep.subr.bf16.mxu0 0
    %810 = vmatpush1.bf16.msra.mxu0 0
    %811 = vmatprep.subr.bf16.mxu0 0
    %812 = vmatpush1.bf16.msra.mxu0 0
    %813 = vmatprep.subr.bf16.mxu0 0
    %814 = vmatpush1.bf16.msra.mxu0 0
    %815 = vmatprep.subr.bf16.mxu0 0
    %816 = vmatpush1.bf16.msra.mxu0 0
    %817 = vmatprep.mubr.bf16.mxu0 0
    %818 = vmatmul.mubr.bf16.gmra.mrb[0].mxu0 %v498
    %v819 = vpop.f32.mrb[0].mxu0
    %v820 = vadd.f32 0.0, %v819
    %v821 = vpop.f32.mrb[0].mxu0
    %v822 = vpop.f32.mrb[0].mxu0
    %v823 = vpop.f32.mrb[0].mxu0
    %824 = vdwg.mxu0
    %v825 = vadd.f32 %v501, %v820
    %v826 = vtanh.pop %v825
    %v827 = vld [vmem:[#allocation10 + $0xc] sm:$0xf]
    %v828 = vld [vmem:[#allocation10 + $0x1c] sm:$0xf]
    %v829 = vld [vmem:[#allocation10 + $0x2c] sm:$0xf]
    %v830 = vld [vmem:[#allocation10 + $0x3c] sm:$0xf]
    %v831 = vld [vmem:[#allocation10 + $0x4c] sm:$0xf]
    %v832 = vld [vmem:[#allocation10 + $0x5c] sm:$0xf]
    %v833 = vld [vmem:[#allocation10 + $0x6c] sm:$0xf]
    %v834 = vld [vmem:[#allocation10 + $0x7c] sm:$0xf]
    %v835 = vld [vmem:[#allocation10 + $0x8c] sm:$0xf]
    %v836 = vld [vmem:[#allocation10 + $0x9c] sm:$0xf]
    %v837 = vld [vmem:[#allocation10 + $0xac] sm:$0xf]
    %v838 = vld [vmem:[#allocation10 + $0xbc] sm:$0xf]
    %v839 = vld [vmem:[#allocation10 + $0xcc] sm:$0xf]
    %v840 = vld [vmem:[#allocation10 + $0xdc] sm:$0xf]
    %v841 = vld [vmem:[#allocation10 + $0xec] sm:$0xf]
    %v842 = vld [vmem:[#allocation10 + $0xfc] sm:$0xf]
    %v859 = vunpack.c.l.b16 %v827
    %v860 = vunpack.c.l.b16 %v828
    %v861 = vunpack.c.l.b16 %v829
    %v862 = vunpack.c.l.b16 %v830
    %v863 = vunpack.c.l.b16 %v831
    %v864 = vunpack.c.l.b16 %v832
    %v865 = vunpack.c.l.b16 %v833
    %v866 = vunpack.c.l.b16 %v834
    %v867 = vunpack.c.l.b16 %v835
    %v868 = vunpack.c.l.b16 %v836
    %v869 = vunpack.c.l.b16 %v837
    %v870 = vunpack.c.l.b16 %v838
    %v871 = vunpack.c.l.b16 %v839
    %v872 = vunpack.c.l.b16 %v840
    %v873 = vunpack.c.l.b16 %v841
    %v874 = vunpack.c.l.b16 %v842
    %v875 = vpack.c.b16 %v860, %v859
    %v876 = vpack.c.b16 %v862, %v861
    %v877 = vpack.c.b16 %v864, %v863
    %v878 = vpack.c.b16 %v866, %v865
    %v879 = vpack.c.b16 %v868, %v867
    %v880 = vpack.c.b16 %v870, %v869
    %v881 = vpack.c.b16 %v872, %v871
    %v882 = vpack.c.b16 %v874, %v873
    %891 = vmatprep.subr.bf16.mxu0 0
    %892 = vmatpush1.bf16.msra.mxu0 %v875
    %893 = vmatprep.subr.bf16.mxu0 0
    %894 = vmatpush1.bf16.msra.mxu0 %v876
    %895 = vmatprep.subr.bf16.mxu0 0
    %896 = vmatpush1.bf16.msra.mxu0 %v877
    %897 = vmatprep.subr.bf16.mxu0 0
    %898 = vmatpush1.bf16.msra.mxu0 %v878
    %899 = vmatprep.subr.bf16.mxu0 0
    %900 = vmatpush1.bf16.msra.mxu0 %v879
    %901 = vmatprep.subr.bf16.mxu0 0
    %902 = vmatpush1.bf16.msra.mxu0 %v880
    %903 = vmatprep.subr.bf16.mxu0 0
    %904 = vmatpush1.bf16.msra.mxu0 %v881
    %905 = vmatprep.subr.bf16.mxu0 0
    %906 = vmatpush1.bf16.msra.mxu0 %v882
    %907 = vmatprep.subr.bf16.mxu0 0
    %908 = vmatpush1.bf16.msra.mxu0 0
    %909 = vmatprep.subr.bf16.mxu0 0
    %910 = vmatpush1.bf16.msra.mxu0 0
    %911 = vmatprep.subr.bf16.mxu0 0
    %912 = vmatpush1.bf16.msra.mxu0 0
    %913 = vmatprep.subr.bf16.mxu0 0
    %914 = vmatpush1.bf16.msra.mxu0 0
    %915 = vmatprep.subr.bf16.mxu0 0
    %916 = vmatpush1.bf16.msra.mxu0 0
    %917 = vmatprep.subr.bf16.mxu0 0
    %918 = vmatpush1.bf16.msra.mxu0 0
    %919 = vmatprep.subr.bf16.mxu0 0
    %920 = vmatpush1.bf16.msra.mxu0 0
    %921 = vmatprep.subr.bf16.mxu0 0
    %922 = vmatpush1.bf16.msra.mxu0 0
    %923 = vmatprep.mubr.bf16.mxu0 0
    %924 = vmatmul.mubr.bf16.gmra.mrb[0].mxu0 %v498
    %v925 = vpop.f32.mrb[0].mxu0
    %v926 = vadd.f32 0.0, %v925
    %v927 = vpop.f32.mrb[0].mxu0
    %v928 = vpop.f32.mrb[0].mxu0
    %v929 = vpop.f32.mrb[0].mxu0
    %930 = vdwg.mxu0
    %v931 = vadd.f32 %v502, %v926
    %v932 = vmul.f32 %v931, 0.5
    %v933 = vtanh.pop %v932
    %v934 = vmul.f32 %v933, 0.5
    %v935 = vadd.f32 %v934, 0.5
    %v936 = vmul.f32 %v720, %v497
    %v937 = vmul.f32 %v611, %v826
    %v938 = vadd.f32 %v936, %v937
    %v939 = vtanh.pop %v938
    %v940 = vmul.f32 %v935, %v939
    %v941 = vpack.c.bf16 %v940, %v940
    %s942 = scalar_lea.vmem [#allocation2], 32
    %v943 = vld [vmem:[%s942] sm:$0xff]
    %v944 = vld [vmem:[%s942 + $0x8] sm:$0xff]
    %v945 = vld [vmem:[%s942 + $0x10] sm:$0xff]
    %v946 = vld [vmem:[%s942 + $0x18] sm:$0xff]
    %947 = vmatprep.subr.bf16.mxu0 0
    %948 = vmatpush1.bf16.msra.mxu0 %v551
    %949 = vmatprep.subr.bf16.mxu0 0
    %950 = vmatpush1.bf16.msra.mxu0 %v552
    %951 = vmatprep.subr.bf16.mxu0 0
    %952 = vmatpush1.bf16.msra.mxu0 %v553
    %953 = vmatprep.subr.bf16.mxu0 0
    %954 = vmatpush1.bf16.msra.mxu0 %v554
    %955 = vmatprep.subr.bf16.mxu0 0
    %956 = vmatpush1.bf16.msra.mxu0 %v555
    %957 = vmatprep.subr.bf16.mxu0 0
    %958 = vmatpush1.bf16.msra.mxu0 %v556
    %959 = vmatprep.subr.bf16.mxu0 0
    %960 = vmatpush1.bf16.msra.mxu0 %v557
    %961 = vmatprep.subr.bf16.mxu0 0
    %962 = vmatpush1.bf16.msra.mxu0 %v558
    %963 = vmatprep.subr.bf16.mxu0 0
    %964 = vmatpush1.bf16.msra.mxu0 0
    %965 = vmatprep.subr.bf16.mxu0 0
    %966 = vmatpush1.bf16.msra.mxu0 0
    %967 = vmatprep.subr.bf16.mxu0 0
    %968 = vmatpush1.bf16.msra.mxu0 0
    %969 = vmatprep.subr.bf16.mxu0 0
    %970 = vmatpush1.bf16.msra.mxu0 0
    %971 = vmatprep.subr.bf16.mxu0 0
    %972 = vmatpush1.bf16.msra.mxu0 0
    %973 = vmatprep.subr.bf16.mxu0 0
    %974 = vmatpush1.bf16.msra.mxu0 0
    %975 = vmatprep.subr.bf16.mxu0 0
    %976 = vmatpush1.bf16.msra.mxu0 0
    %977 = vmatprep.subr.bf16.mxu0 0
    %978 = vmatpush1.bf16.msra.mxu0 0
    %979 = vmatprep.mubr.bf16.mxu0 0
    %980 = vmatmul.mubr.bf16.gmra.mrb[0].mxu0 %v941
    %v981 = vpop.f32.mrb[0].mxu0
    %v982 = vadd.f32 0.0, %v981
    %v983 = vpop.f32.mrb[0].mxu0
    %v984 = vpop.f32.mrb[0].mxu0
    %v985 = vpop.f32.mrb[0].mxu0
    %986 = vdwg.mxu0
    %v987 = vadd.f32 %v943, %v982
    %v988 = vmul.f32 %v987, 0.5
    %v989 = vtanh.pop %v988
    %v990 = vmul.f32 %v989, 0.5
    %v991 = vadd.f32 %v990, 0.5
    %992 = vmatprep.subr.bf16.mxu0 0
    %993 = vmatpush1.bf16.msra.mxu0 %v660
    %994 = vmatprep.subr.bf16.mxu0 0
    %995 = vmatpush1.bf16.msra.mxu0 %v661
    %996 = vmatprep.subr.bf16.mxu0 0
    %997 = vmatpush1.bf16.msra.mxu0 %v662
    %998 = vmatprep.subr.bf16.mxu0 0
    %999 = vmatpush1.bf16.msra.mxu0 %v663
    %1000 = vmatprep.subr.bf16.mxu0 0
    %1001 = vmatpush1.bf16.msra.mxu0 %v664
    %1002 = vmatprep.subr.bf16.mxu0 0
    %1003 = vmatpush1.bf16.msra.mxu0 %v665
    %1004 = vmatprep.subr.bf16.mxu0 0
    %1005 = vmatpush1.bf16.msra.mxu0 %v666
    %1006 = vmatprep.subr.bf16.mxu0 0
    %1007 = vmatpush1.bf16.msra.mxu0 %v667
    %1008 = vmatprep.subr.bf16.mxu0 0
    %1009 = vmatpush1.bf16.msra.mxu0 0
    %1010 = vmatprep.subr.bf16.mxu0 0
    %1011 = vmatpush1.bf16.msra.mxu0 0
    %1012 = vmatprep.subr.bf16.mxu0 0
    %1013 = vmatpush1.bf16.msra.mxu0 0
    %1014 = vmatprep.subr.bf16.mxu0 0
    %1015 = vmatpush1.bf16.msra.mxu0 0
    %1016 = vmatprep.subr.bf16.mxu0 0
    %1017 = vmatpush1.bf16.msra.mxu0 0
    %1018 = vmatprep.subr.bf16.mxu0 0
    %1019 = vmatpush1.bf16.msra.mxu0 0
    %1020 = vmatprep.subr.bf16.mxu0 0
    %1021 = vmatpush1.bf16.msra.mxu0 0
    %1022 = vmatprep.subr.bf16.mxu0 0
    %1023 = vmatpush1.bf16.msra.mxu0 0
    %1024 = vmatprep.mubr.bf16.mxu0 0
    %1025 = vmatmul.mubr.bf16.gmra.mrb[0].mxu0 %v941
    %v1026 = vpop.f32.mrb[0].mxu0
    %v1027 = vadd.f32 0.0, %v1026
    %v1028 = vpop.f32.mrb[0].mxu0
    %v1029 = vpop.f32.mrb[0].mxu0
    %v1030 = vpop.f32.mrb[0].mxu0
    %1031 = vdwg.mxu0
    %v1032 = vadd.f32 %v944, %v1027
    %v1033 = vmul.f32 %v1032, 0.5
    %v1034 = vtanh.pop %v1033
    %v1035 = vmul.f32 %v1034, 0.5
    %v1036 = vadd.f32 %v1035, 0.5
    %1037 = vmatprep.subr.bf16.mxu0 0
    %1038 = vmatpush1.bf16.msra.mxu0 %v769
    %1039 = vmatprep.subr.bf16.mxu0 0
    %1040 = vmatpush1.bf16.msra.mxu0 %v770
    %1041 = vmatprep.subr.bf16.mxu0 0
    %1042 = vmatpush1.bf16.msra.mxu0 %v771
    %1043 = vmatprep.subr.bf16.mxu0 0
    %1044 = vmatpush1.bf16.msra.mxu0 %v772
    %1045 = vmatprep.subr.bf16.mxu0 0
    %1046 = vmatpush1.bf16.msra.mxu0 %v773
    %1047 = vmatprep.subr.bf16.mxu0 0
    %1048 = vmatpush1.bf16.msra.mxu0 %v774
    %1049 = vmatprep.subr.bf16.mxu0 0
    %1050 = vmatpush1.bf16.msra.mxu0 %v775
    %1051 = vmatprep.subr.bf16.mxu0 0
    %1052 = vmatpush1.bf16.msra.mxu0 %v776
    %1053 = vmatprep.subr.bf16.mxu0 0
    %1054 = vmatpush1.bf16.msra.mxu0 0
    %1055 = vmatprep.subr.bf16.mxu0 0
    %1056 = vmatpush1.bf16.msra.mxu0 0
    %1057 = vmatprep.subr.bf16.mxu0 0
    %1058 = vmatpush1.bf16.msra.mxu0 0
    %1059 = vmatprep.subr.bf16.mxu0 0
    %1060 = vmatpush1.bf16.msra.mxu0 0
    %1061 = vmatprep.subr.bf16.mxu0 0
    %1062 = vmatpush1.bf16.msra.mxu0 0
    %1063 = vmatprep.subr.bf16.mxu0 0
    %1064 = vmatpush1.bf16.msra.mxu0 0
    %1065 = vmatprep.subr.bf16.mxu0 0
    %1066 = vmatpush1.bf16.msra.mxu0 0
    %1067 = vmatprep.subr.bf16.mxu0 0
    %1068 = vmatpush1.bf16.msra.mxu0 0
    %1069 = vmatprep.mubr.bf16.mxu0 0
    %1070 = vmatmul.mubr.bf16.gmra.mrb[0].mxu0 %v941
    %v1071 = vpop.f32.mrb[0].mxu0
    %v1072 = vadd.f32 0.0, %v1071
    %v1073 = vpop.f32.mrb[0].mxu0
    %v1074 = vpop.f32.mrb[0].mxu0
    %v1075 = vpop.f32.mrb[0].mxu0
    %1076 = vdwg.mxu0
    %v1077 = vadd.f32 %v945, %v1072
    %v1078 = vtanh.pop %v1077
    %1079 = vmatprep.subr.bf16.mxu0 0
    %1080 = vmatpush1.bf16.msra.mxu0 %v875
    %1081 = vmatprep.subr.bf16.mxu0 0
    %1082 = vmatpush1.bf16.msra.mxu0 %v876
    %1083 = vmatprep.subr.bf16.mxu0 0
    %1084 = vmatpush1.bf16.msra.mxu0 %v877
    %1085 = vmatprep.subr.bf16.mxu0 0
    %1086 = vmatpush1.bf16.msra.mxu0 %v878
    %1087 = vmatprep.subr.bf16.mxu0 0
    %1088 = vmatpush1.bf16.msra.mxu0 %v879
    %1089 = vmatprep.subr.bf16.mxu0 0
    %1090 = vmatpush1.bf16.msra.mxu0 %v880
    %1091 = vmatprep.subr.bf16.mxu0 0
    %1092 = vmatpush1.bf16.msra.mxu0 %v881
    %1093 = vmatprep.subr.bf16.mxu0 0
    %1094 = vmatpush1.bf16.msra.mxu0 %v882
    %1095 = vmatprep.subr.bf16.mxu0 0
    %1096 = vmatpush1.bf16.msra.mxu0 0
    %1097 = vmatprep.subr.bf16.mxu0 0
    %1098 = vmatpush1.bf16.msra.mxu0 0
    %1099 = vmatprep.subr.bf16.mxu0 0
    %1100 = vmatpush1.bf16.msra.mxu0 0
    %1101 = vmatprep.subr.bf16.mxu0 0
    %1102 = vmatpush1.bf16.msra.mxu0 0
    %1103 = vmatprep.subr.bf16.mxu0 0
    %1104 = vmatpush1.bf16.msra.mxu0 0
    %1105 = vmatprep.subr.bf16.mxu0 0
    %1106 = vmatpush1.bf16.msra.mxu0 0
    %1107 = vmatprep.subr.bf16.mxu0 0
    %1108 = vmatpush1.bf16.msra.mxu0 0
    %1109 = vmatprep.subr.bf16.mxu0 0
    %1110 = vmatpush1.bf16.msra.mxu0 0
    %1111 = vmatprep.mubr.bf16.mxu0 0
    %1112 = vmatmul.mubr.bf16.gmra.mrb[0].mxu0 %v941
    %v1113 = vpop.f32.mrb[0].mxu0
    %v1114 = vadd.f32 0.0, %v1113
    %v1115 = vpop.f32.mrb[0].mxu0
    %v1116 = vpop.f32.mrb[0].mxu0
    %v1117 = vpop.f32.mrb[0].mxu0
    %1118 = vdwg.mxu0
    %v1119 = vadd.f32 %v946, %v1114
    %v1120 = vmul.f32 %v1119, 0.5
    %v1121 = vtanh.pop %v1120
    %v1122 = vmul.f32 %v1121, 0.5
    %v1123 = vadd.f32 %v1122, 0.5
    %v1124 = vmul.f32 %v1036, %v938
    %v1125 = vmul.f32 %v991, %v1078
    %v1126 = vadd.f32 %v1124, %v1125
    %v1127 = vtanh.pop %v1126
    %v1128 = vmul.f32 %v1123, %v1127
    %v1129 = vpack.c.bf16 %v1128, %v1128
    %s1130 = scalar_lea.vmem [#allocation2], 64
    %v1131 = vld [vmem:[%s1130] sm:$0xff]
    %v1132 = vld [vmem:[%s1130 + $0x8] sm:$0xff]
    %v1133 = vld [vmem:[%s1130 + $0x10] sm:$0xff]
    %v1134 = vld [vmem:[%s1130 + $0x18] sm:$0xff]
    %1135 = vmatprep.subr.bf16.mxu0 0
    %1136 = vmatpush1.bf16.msra.mxu0 %v551
    %1137 = vmatprep.subr.bf16.mxu0 0
    %1138 = vmatpush1.bf16.msra.mxu0 %v552
    %1139 = vmatprep.subr.bf16.mxu0 0
    %1140 = vmatpush1.bf16.msra.mxu0 %v553
    %1141 = vmatprep.subr.bf16.mxu0 0
    %1142 = vmatpush1.bf16.msra.mxu0 %v554
    %1143 = vmatprep.subr.bf16.mxu0 0
    %1144 = vmatpush1.bf16.msra.mxu0 %v555
    %1145 = vmatprep.subr.bf16.mxu0 0
    %1146 = vmatpush1.bf16.msra.mxu0 %v556
    %1147 = vmatprep.subr.bf16.mxu0 0
    %1148 = vmatpush1.bf16.msra.mxu0 %v557
    %1149 = vmatprep.subr.bf16.mxu0 0
    %1150 = vmatpush1.bf16.msra.mxu0 %v558
    %1151 = vmatprep.subr.bf16.mxu0 0
    %1152 = vmatpush1.bf16.msra.mxu0 0
    %1153 = vmatprep.subr.bf16.mxu0 0
    %1154 = vmatpush1.bf16.msra.mxu0 0
    %1155 = vmatprep.subr.bf16.mxu0 0
    %1156 = vmatpush1.bf16.msra.mxu0 0
    %1157 = vmatprep.subr.bf16.mxu0 0
    %1158 = vmatpush1.bf16.msra.mxu0 0
    %1159 = vmatprep.subr.bf16.mxu0 0
    %1160 = vmatpush1.bf16.msra.mxu0 0
    %1161 = vmatprep.subr.bf16.mxu0 0
    %1162 = vmatpush1.bf16.msra.mxu0 0
    %1163 = vmatprep.subr.bf16.mxu0 0
    %1164 = vmatpush1.bf16.msra.mxu0 0
    %1165 = vmatprep.subr.bf16.mxu0 0
    %1166 = vmatpush1.bf16.msra.mxu0 0
    %1167 = vmatprep.mubr.bf16.mxu0 0
    %1168 = vmatmul.mubr.bf16.gmra.mrb[0].mxu0 %v1129
    %v1169 = vpop.f32.mrb[0].mxu0
    %v1170 = vadd.f32 0.0, %v1169
    %v1171 = vpop.f32.mrb[0].mxu0
    %v1172 = vpop.f32.mrb[0].mxu0
    %v1173 = vpop.f32.mrb[0].mxu0
    %1174 = vdwg.mxu0
    %v1175 = vadd.f32 %v1131, %v1170
    %v1176 = vmul.f32 %v1175, 0.5
    %v1177 = vtanh.pop %v1176
    %v1178 = vmul.f32 %v1177, 0.5
    %v1179 = vadd.f32 %v1178, 0.5
    %1180 = vmatprep.subr.bf16.mxu0 0
    %1181 = vmatpush1.bf16.msra.mxu0 %v660
    %1182 = vmatprep.subr.bf16.mxu0 0
    %1183 = vmatpush1.bf16.msra.mxu0 %v661
    %1184 = vmatprep.subr.bf16.mxu0 0
    %1185 = vmatpush1.bf16.msra.mxu0 %v662
    %1186 = vmatprep.subr.bf16.mxu0 0
    %1187 = vmatpush1.bf16.msra.mxu0 %v663
    %1188 = vmatprep.subr.bf16.mxu0 0
    %1189 = vmatpush1.bf16.msra.mxu0 %v664
    %1190 = vmatprep.subr.bf16.mxu0 0
    %1191 = vmatpush1.bf16.msra.mxu0 %v665
    %1192 = vmatprep.subr.bf16.mxu0 0
    %1193 = vmatpush1.bf16.msra.mxu0 %v666
    %1194 = vmatprep.subr.bf16.mxu0 0
    %1195 = vmatpush1.bf16.msra.mxu0 %v667
    %1196 = vmatprep.subr.bf16.mxu0 0
    %1197 = vmatpush1.bf16.msra.mxu0 0
    %1198 = vmatprep.subr.bf16.mxu0 0
    %1199 = vmatpush1.bf16.msra.mxu0 0
    %1200 = vmatprep.subr.bf16.mxu0 0
    %1201 = vmatpush1.bf16.msra.mxu0 0
    %1202 = vmatprep.subr.bf16.mxu0 0
    %1203 = vmatpush1.bf16.msra.mxu0 0
    %1204 = vmatprep.subr.bf16.mxu0 0
    %1205 = vmatpush1.bf16.msra.mxu0 0
    %1206 = vmatprep.subr.bf16.mxu0 0
    %1207 = vmatpush1.bf16.msra.mxu0 0
    %1208 = vmatprep.subr.bf16.mxu0 0
    %1209 = vmatpush1.bf16.msra.mxu0 0
    %1210 = vmatprep.subr.bf16.mxu0 0
    %1211 = vmatpush1.bf16.msra.mxu0 0
    %1212 = vmatprep.mubr.bf16.mxu0 0
    %1213 = vmatmul.mubr.bf16.gmra.mrb[0].mxu0 %v1129
    %v1214 = vpop.f32.mrb[0].mxu0
    %v1215 = vadd.f32 0.0, %v1214
    %v1216 = vpop.f32.mrb[0].mxu0
    %v1217 = vpop.f32.mrb[0].mxu0
    %v1218 = vpop.f32.mrb[0].mxu0
    %1219 = vdwg.mxu0
    %v1220 = vadd.f32 %v1132, %v1215
    %v1221 = vmul.f32 %v1220, 0.5
    %v1222 = vtanh.pop %v1221
    %v1223 = vmul.f32 %v1222, 0.5
    %v1224 = vadd.f32 %v1223, 0.5
    %1225 = vmatprep.subr.bf16.mxu0 0
    %1226 = vmatpush1.bf16.msra.mxu0 %v769
    %1227 = vmatprep.subr.bf16.mxu0 0
    %1228 = vmatpush1.bf16.msra.mxu0 %v770
    %1229 = vmatprep.subr.bf16.mxu0 0
    %1230 = vmatpush1.bf16.msra.mxu0 %v771
    %1231 = vmatprep.subr.bf16.mxu0 0
    %1232 = vmatpush1.bf16.msra.mxu0 %v772
    %1233 = vmatprep.subr.bf16.mxu0 0
    %1234 = vmatpush1.bf16.msra.mxu0 %v773
    %1235 = vmatprep.subr.bf16.mxu0 0
    %1236 = vmatpush1.bf16.msra.mxu0 %v774
    %1237 = vmatprep.subr.bf16.mxu0 0
    %1238 = vmatpush1.bf16.msra.mxu0 %v775
    %1239 = vmatprep.subr.bf16.mxu0 0
    %1240 = vmatpush1.bf16.msra.mxu0 %v776
    %1241 = vmatprep.subr.bf16.mxu0 0
    %1242 = vmatpush1.bf16.msra.mxu0 0
    %1243 = vmatprep.subr.bf16.mxu0 0
    %1244 = vmatpush1.bf16.msra.mxu0 0
    %1245 = vmatprep.subr.bf16.mxu0 0
    %1246 = vmatpush1.bf16.msra.mxu0 0
    %1247 = vmatprep.subr.bf16.mxu0 0
    %1248 = vmatpush1.bf16.msra.mxu0 0
    %1249 = vmatprep.subr.bf16.mxu0 0
    %1250 = vmatpush1.bf16.msra.mxu0 0
    %1251 = vmatprep.subr.bf16.mxu0 0
    %1252 = vmatpush1.bf16.msra.mxu0 0
    %1253 = vmatprep.subr.bf16.mxu0 0
    %1254 = vmatpush1.bf16.msra.mxu0 0
    %1255 = vmatprep.subr.bf16.mxu0 0
    %1256 = vmatpush1.bf16.msra.mxu0 0
    %1257 = vmatprep.mubr.bf16.mxu0 0
    %1258 = vmatmul.mubr.bf16.gmra.mrb[0].mxu0 %v1129
    %v1259 = vpop.f32.mrb[0].mxu0
    %v1260 = vadd.f32 0.0, %v1259
    %v1261 = vpop.f32.mrb[0].mxu0
    %v1262 = vpop.f32.mrb[0].mxu0
    %v1263 = vpop.f32.mrb[0].mxu0
    %1264 = vdwg.mxu0
    %v1265 = vadd.f32 %v1133, %v1260
    %v1266 = vtanh.pop %v1265
    %1267 = vmatprep.subr.bf16.mxu0 0
    %1268 = vmatpush1.bf16.msra.mxu0 %v875
    %1269 = vmatprep.subr.bf16.mxu0 0
    %1270 = vmatpush1.bf16.msra.mxu0 %v876
    %1271 = vmatprep.subr.bf16.mxu0 0
    %1272 = vmatpush1.bf16.msra.mxu0 %v877
    %1273 = vmatprep.subr.bf16.mxu0 0
    %1274 = vmatpush1.bf16.msra.mxu0 %v878
    %1275 = vmatprep.subr.bf16.mxu0 0
    %1276 = vmatpush1.bf16.msra.mxu0 %v879
    %1277 = vmatprep.subr.bf16.mxu0 0
    %1278 = vmatpush1.bf16.msra.mxu0 %v880
    %1279 = vmatprep.subr.bf16.mxu0 0
    %1280 = vmatpush1.bf16.msra.mxu0 %v881
    %1281 = vmatprep.subr.bf16.mxu0 0
    %1282 = vmatpush1.bf16.msra.mxu0 %v882
    %1283 = vmatprep.subr.bf16.mxu0 0
    %1284 = vmatpush1.bf16.msra.mxu0 0
    %1285 = vmatprep.subr.bf16.mxu0 0
    %1286 = vmatpush1.bf16.msra.mxu0 0
    %1287 = vmatprep.subr.bf16.mxu0 0
    %1288 = vmatpush1.bf16.msra.mxu0 0
    %1289 = vmatprep.subr.bf16.mxu0 0
    %1290 = vmatpush1.bf16.msra.mxu0 0
    %1291 = vmatprep.subr.bf16.mxu0 0
    %1292 = vmatpush1.bf16.msra.mxu0 0
    %1293 = vmatprep.subr.bf16.mxu0 0
    %1294 = vmatpush1.bf16.msra.mxu0 0
    %1295 = vmatprep.subr.bf16.mxu0 0
    %1296 = vmatpush1.bf16.msra.mxu0 0
    %1297 = vmatprep.subr.bf16.mxu0 0
    %1298 = vmatpush1.bf16.msra.mxu0 0
    %1299 = vmatprep.mubr.bf16.mxu0 0
    %1300 = vmatmul.mubr.bf16.gmra.mrb[0].mxu0 %v1129
    %v1301 = vpop.f32.mrb[0].mxu0
    %v1302 = vadd.f32 0.0, %v1301
    %v1303 = vpop.f32.mrb[0].mxu0
    %v1304 = vpop.f32.mrb[0].mxu0
    %v1305 = vpop.f32.mrb[0].mxu0
    %1306 = vdwg.mxu0
    %v1307 = vadd.f32 %v1134, %v1302
    %v1308 = vmul.f32 %v1307, 0.5
    %v1309 = vtanh.pop %v1308
    %v1310 = vmul.f32 %v1309, 0.5
    %v1311 = vadd.f32 %v1310, 0.5
    %v1312 = vmul.f32 %v1224, %v1126
    %v1313 = vmul.f32 %v1179, %v1266
    %v1314 = vadd.f32 %v1312, %v1313
    %v1315 = vtanh.pop %v1314
    %v1316 = vmul.f32 %v1311, %v1315
    %v1317 = vpack.c.bf16 %v1316, %v1316
    %s1318 = scalar_lea.vmem [#allocation2], 96
    %v1319 = vld [vmem:[%s1318] sm:$0xff]
    %v1320 = vld [vmem:[%s1318 + $0x8] sm:$0xff]
    %v1321 = vld [vmem:[%s1318 + $0x10] sm:$0xff]
    %v1322 = vld [vmem:[%s1318 + $0x18] sm:$0xff]
    %1323 = vmatprep.subr.bf16.mxu0 0
    %1324 = vmatpush1.bf16.msra.mxu0 %v551
    %1325 = vmatprep.subr.bf16.mxu0 0
    %1326 = vmatpush1.bf16.msra.mxu0 %v552
    %1327 = vmatprep.subr.bf16.mxu0 0
    %1328 = vmatpush1.bf16.msra.mxu0 %v553
    %1329 = vmatprep.subr.bf16.mxu0 0
    %1330 = vmatpush1.bf16.msra.mxu0 %v554
    %1331 = vmatprep.subr.bf16.mxu0 0
    %1332 = vmatpush1.bf16.msra.mxu0 %v555
    %1333 = vmatprep.subr.bf16.mxu0 0
    %1334 = vmatpush1.bf16.msra.mxu0 %v556
    %1335 = vmatprep.subr.bf16.mxu0 0
    %1336 = vmatpush1.bf16.msra.mxu0 %v557
    %1337 = vmatprep.subr.bf16.mxu0 0
    %1338 = vmatpush1.bf16.msra.mxu0 %v558
    %1339 = vmatprep.subr.bf16.mxu0 0
    %1340 = vmatpush1.bf16.msra.mxu0 0
    %1341 = vmatprep.subr.bf16.mxu0 0
    %1342 = vmatpush1.bf16.msra.mxu0 0
    %1343 = vmatprep.subr.bf16.mxu0 0
    %1344 = vmatpush1.bf16.msra.mxu0 0
    %1345 = vmatprep.subr.bf16.mxu0 0
    %1346 = vmatpush1.bf16.msra.mxu0 0
    %1347 = vmatprep.subr.bf16.mxu0 0
    %1348 = vmatpush1.bf16.msra.mxu0 0
    %1349 = vmatprep.subr.bf16.mxu0 0
    %1350 = vmatpush1.bf16.msra.mxu0 0
    %1351 = vmatprep.subr.bf16.mxu0 0
    %1352 = vmatpush1.bf16.msra.mxu0 0
    %1353 = vmatprep.subr.bf16.mxu0 0
    %1354 = vmatpush1.bf16.msra.mxu0 0
    %1355 = vmatprep.mubr.bf16.mxu0 0
    %1356 = vmatmul.mubr.bf16.gmra.mrb[0].mxu0 %v1317
    %v1357 = vpop.f32.mrb[0].mxu0
    %v1358 = vadd.f32 0.0, %v1357
    %v1359 = vpop.f32.mrb[0].mxu0
    %v1360 = vpop.f32.mrb[0].mxu0
    %v1361 = vpop.f32.mrb[0].mxu0
    %1362 = vdwg.mxu0
    %v1363 = vadd.f32 %v1319, %v1358
    %v1364 = vmul.f32 %v1363, 0.5
    %v1365 = vtanh.pop %v1364
    %v1366 = vmul.f32 %v1365, 0.5
    %v1367 = vadd.f32 %v1366, 0.5
    %1368 = vmatprep.subr.bf16.mxu0 0
    %1369 = vmatpush1.bf16.msra.mxu0 %v660
    %1370 = vmatprep.subr.bf16.mxu0 0
    %1371 = vmatpush1.bf16.msra.mxu0 %v661
    %1372 = vmatprep.subr.bf16.mxu0 0
    %1373 = vmatpush1.bf16.msra.mxu0 %v662
    %1374 = vmatprep.subr.bf16.mxu0 0
    %1375 = vmatpush1.bf16.msra.mxu0 %v663
    %1376 = vmatprep.subr.bf16.mxu0 0
    %1377 = vmatpush1.bf16.msra.mxu0 %v664
    %1378 = vmatprep.subr.bf16.mxu0 0
    %1379 = vmatpush1.bf16.msra.mxu0 %v665
    %1380 = vmatprep.subr.bf16.mxu0 0
    %1381 = vmatpush1.bf16.msra.mxu0 %v666
    %1382 = vmatprep.subr.bf16.mxu0 0
    %1383 = vmatpush1.bf16.msra.mxu0 %v667
    %1384 = vmatprep.subr.bf16.mxu0 0
    %1385 = vmatpush1.bf16.msra.mxu0 0
    %1386 = vmatprep.subr.bf16.mxu0 0
    %1387 = vmatpush1.bf16.msra.mxu0 0
    %1388 = vmatprep.subr.bf16.mxu0 0
    %1389 = vmatpush1.bf16.msra.mxu0 0
    %1390 = vmatprep.subr.bf16.mxu0 0
    %1391 = vmatpush1.bf16.msra.mxu0 0
    %1392 = vmatprep.subr.bf16.mxu0 0
    %1393 = vmatpush1.bf16.msra.mxu0 0
    %1394 = vmatprep.subr.bf16.mxu0 0
    %1395 = vmatpush1.bf16.msra.mxu0 0
    %1396 = vmatprep.subr.bf16.mxu0 0
    %1397 = vmatpush1.bf16.msra.mxu0 0
    %1398 = vmatprep.subr.bf16.mxu0 0
    %1399 = vmatpush1.bf16.msra.mxu0 0
    %1400 = vmatprep.mubr.bf16.mxu0 0
    %1401 = vmatmul.mubr.bf16.gmra.mrb[0].mxu0 %v1317
    %v1402 = vpop.f32.mrb[0].mxu0
    %v1403 = vadd.f32 0.0, %v1402
    %v1404 = vpop.f32.mrb[0].mxu0
    %v1405 = vpop.f32.mrb[0].mxu0
    %v1406 = vpop.f32.mrb[0].mxu0
    %1407 = vdwg.mxu0
    %v1408 = vadd.f32 %v1320, %v1403
    %v1409 = vmul.f32 %v1408, 0.5
    %v1410 = vtanh.pop %v1409
    %v1411 = vmul.f32 %v1410, 0.5
    %v1412 = vadd.f32 %v1411, 0.5
    %1413 = vmatprep.subr.bf16.mxu0 0
    %1414 = vmatpush1.bf16.msra.mxu0 %v769
    %1415 = vmatprep.subr.bf16.mxu0 0
    %1416 = vmatpush1.bf16.msra.mxu0 %v770
    %1417 = vmatprep.subr.bf16.mxu0 0
    %1418 = vmatpush1.bf16.msra.mxu0 %v771
    %1419 = vmatprep.subr.bf16.mxu0 0
    %1420 = vmatpush1.bf16.msra.mxu0 %v772
    %1421 = vmatprep.subr.bf16.mxu0 0
    %1422 = vmatpush1.bf16.msra.mxu0 %v773
    %1423 = vmatprep.subr.bf16.mxu0 0
    %1424 = vmatpush1.bf16.msra.mxu0 %v774
    %1425 = vmatprep.subr.bf16.mxu0 0
    %1426 = vmatpush1.bf16.msra.mxu0 %v775
    %1427 = vmatprep.subr.bf16.mxu0 0
    %1428 = vmatpush1.bf16.msra.mxu0 %v776
    %1429 = vmatprep.subr.bf16.mxu0 0
    %1430 = vmatpush1.bf16.msra.mxu0 0
    %1431 = vmatprep.subr.bf16.mxu0 0
    %1432 = vmatpush1.bf16.msra.mxu0 0
    %1433 = vmatprep.subr.bf16.mxu0 0
    %1434 = vmatpush1.bf16.msra.mxu0 0
    %1435 = vmatprep.subr.bf16.mxu0 0
    %1436 = vmatpush1.bf16.msra.mxu0 0
    %1437 = vmatprep.subr.bf16.mxu0 0
    %1438 = vmatpush1.bf16.msra.mxu0 0
    %1439 = vmatprep.subr.bf16.mxu0 0
    %1440 = vmatpush1.bf16.msra.mxu0 0
    %1441 = vmatprep.subr.bf16.mxu0 0
    %1442 = vmatpush1.bf16.msra.mxu0 0
    %1443 = vmatprep.subr.bf16.mxu0 0
    %1444 = vmatpush1.bf16.msra.mxu0 0
    %1445 = vmatprep.mubr.bf16.mxu0 0
    %1446 = vmatmul.mubr.bf16.gmra.mrb[0].mxu0 %v1317
    %v1447 = vpop.f32.mrb[0].mxu0
    %v1448 = vadd.f32 0.0, %v1447
    %v1449 = vpop.f32.mrb[0].mxu0
    %v1450 = vpop.f32.mrb[0].mxu0
    %v1451 = vpop.f32.mrb[0].mxu0
    %1452 = vdwg.mxu0
    %v1453 = vadd.f32 %v1321, %v1448
    %v1454 = vtanh.pop %v1453
    %1455 = vmatprep.subr.bf16.mxu0 0
    %1456 = vmatpush1.bf16.msra.mxu0 %v875
    %1457 = vmatprep.subr.bf16.mxu0 0
    %1458 = vmatpush1.bf16.msra.mxu0 %v876
    %1459 = vmatprep.subr.bf16.mxu0 0
    %1460 = vmatpush1.bf16.msra.mxu0 %v877
    %1461 = vmatprep.subr.bf16.mxu0 0
    %1462 = vmatpush1.bf16.msra.mxu0 %v878
    %1463 = vmatprep.subr.bf16.mxu0 0
    %1464 = vmatpush1.bf16.msra.mxu0 %v879
    %1465 = vmatprep.subr.bf16.mxu0 0
    %1466 = vmatpush1.bf16.msra.mxu0 %v880
    %1467 = vmatprep.subr.bf16.mxu0 0
    %1468 = vmatpush1.bf16.msra.mxu0 %v881
    %1469 = vmatprep.subr.bf16.mxu0 0
    %1470 = vmatpush1.bf16.msra.mxu0 %v882
    %1471 = vmatprep.subr.bf16.mxu0 0
    %1472 = vmatpush1.bf16.msra.mxu0 0
    %1473 = vmatprep.subr.bf16.mxu0 0
    %1474 = vmatpush1.bf16.msra.mxu0 0
    %1475 = vmatprep.subr.bf16.mxu0 0
    %1476 = vmatpush1.bf16.msra.mxu0 0
    %1477 = vmatprep.subr.bf16.mxu0 0
    %1478 = vmatpush1.bf16.msra.mxu0 0
    %1479 = vmatprep.subr.bf16.mxu0 0
    %1480 = vmatpush1.bf16.msra.mxu0 0
    %1481 = vmatprep.subr.bf16.mxu0 0
    %1482 = vmatpush1.bf16.msra.mxu0 0
    %1483 = vmatprep.subr.bf16.mxu0 0
    %1484 = vmatpush1.bf16.msra.mxu0 0
    %1485 = vmatprep.subr.bf16.mxu0 0
    %1486 = vmatpush1.bf16.msra.mxu0 0
    %1487 = vmatprep.mubr.bf16.mxu0 0
    %1488 = vmatmul.mubr.bf16.gmra.mrb[0].mxu0 %v1317
    %v1489 = vpop.f32.mrb[0].mxu0
    %v1490 = vadd.f32 0.0, %v1489
    %v1491 = vpop.f32.mrb[0].mxu0
    %v1492 = vpop.f32.mrb[0].mxu0
    %v1493 = vpop.f32.mrb[0].mxu0
    %1494 = vdwg.mxu0
    %v1495 = vadd.f32 %v1322, %v1490
    %v1496 = vmul.f32 %v1495, 0.5
    %v1497 = vtanh.pop %v1496
    %v1498 = vmul.f32 %v1497, 0.5
    %v1499 = vadd.f32 %v1498, 0.5
    %v1500 = vmul.f32 %v1412, %v1314
    %v1501 = vmul.f32 %v1367, %v1454
    %v1502 = vadd.f32 %v1500, %v1501
    %v1503 = vtanh.pop %v1502
    %v1504 = vmul.f32 %v1499, %v1503
    %v1505 = vpack.c.bf16 %v1504, %v1504
    %s1506 = scalar_lea.vmem [#allocation2], 128
    %v1507 = vld [vmem:[%s1506] sm:$0xff]
    %v1508 = vld [vmem:[%s1506 + $0x8] sm:$0xff]
    %v1509 = vld [vmem:[%s1506 + $0x10] sm:$0xff]
    %v1510 = vld [vmem:[%s1506 + $0x18] sm:$0xff]
    %1511 = vmatprep.subr.bf16.mxu0 0
    %1512 = vmatpush1.bf16.msra.mxu0 %v551
    %1513 = vmatprep.subr.bf16.mxu0 0
    %1514 = vmatpush1.bf16.msra.mxu0 %v552
    %1515 = vmatprep.subr.bf16.mxu0 0
    %1516 = vmatpush1.bf16.msra.mxu0 %v553
    %1517 = vmatprep.subr.bf16.mxu0 0
    %1518 = vmatpush1.bf16.msra.mxu0 %v554
    %1519 = vmatprep.subr.bf16.mxu0 0
    %1520 = vmatpush1.bf16.msra.mxu0 %v555
    %1521 = vmatprep.subr.bf16.mxu0 0
    %1522 = vmatpush1.bf16.msra.mxu0 %v556
    %1523 = vmatprep.subr.bf16.mxu0 0
    %1524 = vmatpush1.bf16.msra.mxu0 %v557
    %1525 = vmatprep.subr.bf16.mxu0 0
    %1526 = vmatpush1.bf16.msra.mxu0 %v558
    %1527 = vmatprep.subr.bf16.mxu0 0
    %1528 = vmatpush1.bf16.msra.mxu0 0
    %1529 = vmatprep.subr.bf16.mxu0 0
    %1530 = vmatpush1.bf16.msra.mxu0 0
    %1531 = vmatprep.subr.bf16.mxu0 0
    %1532 = vmatpush1.bf16.msra.mxu0 0
    %1533 = vmatprep.subr.bf16.mxu0 0
    %1534 = vmatpush1.bf16.msra.mxu0 0
    %1535 = vmatprep.subr.bf16.mxu0 0
    %1536 = vmatpush1.bf16.msra.mxu0 0
    %1537 = vmatprep.subr.bf16.mxu0 0
    %1538 = vmatpush1.bf16.msra.mxu0 0
    %1539 = vmatprep.subr.bf16.mxu0 0
    %1540 = vmatpush1.bf16.msra.mxu0 0
    %1541 = vmatprep.subr.bf16.mxu0 0
    %1542 = vmatpush1.bf16.msra.mxu0 0
    %1543 = vmatprep.mubr.bf16.mxu0 0
    %1544 = vmatmul.mubr.bf16.gmra.mrb[0].mxu0 %v1505
    %v1545 = vpop.f32.mrb[0].mxu0
    %v1546 = vadd.f32 0.0, %v1545
    %v1547 = vpop.f32.mrb[0].mxu0
    %v1548 = vpop.f32.mrb[0].mxu0
    %v1549 = vpop.f32.mrb[0].mxu0
    %1550 = vdwg.mxu0
    %v1551 = vadd.f32 %v1507, %v1546
    %v1552 = vmul.f32 %v1551, 0.5
    %v1553 = vtanh.pop %v1552
    %v1554 = vmul.f32 %v1553, 0.5
    %v1555 = vadd.f32 %v1554, 0.5
    %1556 = vmatprep.subr.bf16.mxu0 0
    %1557 = vmatpush1.bf16.msra.mxu0 %v660
    %1558 = vmatprep.subr.bf16.mxu0 0
    %1559 = vmatpush1.bf16.msra.mxu0 %v661
    %1560 = vmatprep.subr.bf16.mxu0 0
    %1561 = vmatpush1.bf16.msra.mxu0 %v662
    %1562 = vmatprep.subr.bf16.mxu0 0
    %1563 = vmatpush1.bf16.msra.mxu0 %v663
    %1564 = vmatprep.subr.bf16.mxu0 0
    %1565 = vmatpush1.bf16.msra.mxu0 %v664
    %1566 = vmatprep.subr.bf16.mxu0 0
    %1567 = vmatpush1.bf16.msra.mxu0 %v665
    %1568 = vmatprep.subr.bf16.mxu0 0
    %1569 = vmatpush1.bf16.msra.mxu0 %v666
    %1570 = vmatprep.subr.bf16.mxu0 0
    %1571 = vmatpush1.bf16.msra.mxu0 %v667
    %1572 = vmatprep.subr.bf16.mxu0 0
    %1573 = vmatpush1.bf16.msra.mxu0 0
    %1574 = vmatprep.subr.bf16.mxu0 0
    %1575 = vmatpush1.bf16.msra.mxu0 0
    %1576 = vmatprep.subr.bf16.mxu0 0
    %1577 = vmatpush1.bf16.msra.mxu0 0
    %1578 = vmatprep.subr.bf16.mxu0 0
    %1579 = vmatpush1.bf16.msra.mxu0 0
    %1580 = vmatprep.subr.bf16.mxu0 0
    %1581 = vmatpush1.bf16.msra.mxu0 0
    %1582 = vmatprep.subr.bf16.mxu0 0
    %1583 = vmatpush1.bf16.msra.mxu0 0
    %1584 = vmatprep.subr.bf16.mxu0 0
    %1585 = vmatpush1.bf16.msra.mxu0 0
    %1586 = vmatprep.subr.bf16.mxu0 0
    %1587 = vmatpush1.bf16.msra.mxu0 0
    %1588 = vmatprep.mubr.bf16.mxu0 0
    %1589 = vmatmul.mubr.bf16.gmra.mrb[0].mxu0 %v1505
    %v1590 = vpop.f32.mrb[0].mxu0
    %v1591 = vadd.f32 0.0, %v1590
    %v1592 = vpop.f32.mrb[0].mxu0
    %v1593 = vpop.f32.mrb[0].mxu0
    %v1594 = vpop.f32.mrb[0].mxu0
    %1595 = vdwg.mxu0
    %v1596 = vadd.f32 %v1508, %v1591
    %v1597 = vmul.f32 %v1596, 0.5
    %v1598 = vtanh.pop %v1597
    %v1599 = vmul.f32 %v1598, 0.5
    %v1600 = vadd.f32 %v1599, 0.5
    %1601 = vmatprep.subr.bf16.mxu0 0
    %1602 = vmatpush1.bf16.msra.mxu0 %v769
    %1603 = vmatprep.subr.bf16.mxu0 0
    %1604 = vmatpush1.bf16.msra.mxu0 %v770
    %1605 = vmatprep.subr.bf16.mxu0 0
    %1606 = vmatpush1.bf16.msra.mxu0 %v771
    %1607 = vmatprep.subr.bf16.mxu0 0
    %1608 = vmatpush1.bf16.msra.mxu0 %v772
    %1609 = vmatprep.subr.bf16.mxu0 0
    %1610 = vmatpush1.bf16.msra.mxu0 %v773
    %1611 = vmatprep.subr.bf16.mxu0 0
    %1612 = vmatpush1.bf16.msra.mxu0 %v774
    %1613 = vmatprep.subr.bf16.mxu0 0
    %1614 = vmatpush1.bf16.msra.mxu0 %v775
    %1615 = vmatprep.subr.bf16.mxu0 0
    %1616 = vmatpush1.bf16.msra.mxu0 %v776
    %1617 = vmatprep.subr.bf16.mxu0 0
    %1618 = vmatpush1.bf16.msra.mxu0 0
    %1619 = vmatprep.subr.bf16.mxu0 0
    %1620 = vmatpush1.bf16.msra.mxu0 0
    %1621 = vmatprep.subr.bf16.mxu0 0
    %1622 = vmatpush1.bf16.msra.mxu0 0
    %1623 = vmatprep.subr.bf16.mxu0 0
    %1624 = vmatpush1.bf16.msra.mxu0 0
    %1625 = vmatprep.subr.bf16.mxu0 0
    %1626 = vmatpush1.bf16.msra.mxu0 0
    %1627 = vmatprep.subr.bf16.mxu0 0
    %1628 = vmatpush1.bf16.msra.mxu0 0
    %1629 = vmatprep.subr.bf16.mxu0 0
    %1630 = vmatpush1.bf16.msra.mxu0 0
    %1631 = vmatprep.subr.bf16.mxu0 0
    %1632 = vmatpush1.bf16.msra.mxu0 0
    %1633 = vmatprep.mubr.bf16.mxu0 0
    %1634 = vmatmul.mubr.bf16.gmra.mrb[0].mxu0 %v1505
    %v1635 = vpop.f32.mrb[0].mxu0
    %v1636 = vadd.f32 0.0, %v1635
    %v1637 = vpop.f32.mrb[0].mxu0
    %v1638 = vpop.f32.mrb[0].mxu0
    %v1639 = vpop.f32.mrb[0].mxu0
    %1640 = vdwg.mxu0
    %v1641 = vadd.f32 %v1509, %v1636
    %v1642 = vtanh.pop %v1641
    %1643 = vmatprep.subr.bf16.mxu0 0
    %1644 = vmatpush1.bf16.msra.mxu0 %v875
    %1645 = vmatprep.subr.bf16.mxu0 0
    %1646 = vmatpush1.bf16.msra.mxu0 %v876
    %1647 = vmatprep.subr.bf16.mxu0 0
    %1648 = vmatpush1.bf16.msra.mxu0 %v877
    %1649 = vmatprep.subr.bf16.mxu0 0
    %1650 = vmatpush1.bf16.msra.mxu0 %v878
    %1651 = vmatprep.subr.bf16.mxu0 0
    %1652 = vmatpush1.bf16.msra.mxu0 %v879
    %1653 = vmatprep.subr.bf16.mxu0 0
    %1654 = vmatpush1.bf16.msra.mxu0 %v880
    %1655 = vmatprep.subr.bf16.mxu0 0
    %1656 = vmatpush1.bf16.msra.mxu0 %v881
    %1657 = vmatprep.subr.bf16.mxu0 0
    %1658 = vmatpush1.bf16.msra.mxu0 %v882
    %1659 = vmatprep.subr.bf16.mxu0 0
    %1660 = vmatpush1.bf16.msra.mxu0 0
    %1661 = vmatprep.subr.bf16.mxu0 0
    %1662 = vmatpush1.bf16.msra.mxu0 0
    %1663 = vmatprep.subr.bf16.mxu0 0
    %1664 = vmatpush1.bf16.msra.mxu0 0
    %1665 = vmatprep.subr.bf16.mxu0 0
    %1666 = vmatpush1.bf16.msra.mxu0 0
    %1667 = vmatprep.subr.bf16.mxu0 0
    %1668 = vmatpush1.bf16.msra.mxu0 0
    %1669 = vmatprep.subr.bf16.mxu0 0
    %1670 = vmatpush1.bf16.msra.mxu0 0
    %1671 = vmatprep.subr.bf16.mxu0 0
    %1672 = vmatpush1.bf16.msra.mxu0 0
    %1673 = vmatprep.subr.bf16.mxu0 0
    %1674 = vmatpush1.bf16.msra.mxu0 0
    %1675 = vmatprep.mubr.bf16.mxu0 0
    %1676 = vmatmul.mubr.bf16.gmra.mrb[0].mxu0 %v1505
    %v1677 = vpop.f32.mrb[0].mxu0
    %v1678 = vadd.f32 0.0, %v1677
    %v1679 = vpop.f32.mrb[0].mxu0
    %v1680 = vpop.f32.mrb[0].mxu0
    %v1681 = vpop.f32.mrb[0].mxu0
    %1682 = vdwg.mxu0
    %v1683 = vadd.f32 %v1510, %v1678
    %v1684 = vmul.f32 %v1683, 0.5
    %v1685 = vtanh.pop %v1684
    %v1686 = vmul.f32 %v1685, 0.5
    %v1687 = vadd.f32 %v1686, 0.5
    %v1688 = vmul.f32 %v1600, %v1502
    %v1689 = vmul.f32 %v1555, %v1642
    %v1690 = vadd.f32 %v1688, %v1689
    %v1691 = vtanh.pop %v1690
    %v1692 = vmul.f32 %v1687, %v1691
    %v1693 = vpack.c.bf16 %v1692, %v1692
    %s1694 = scalar_lea.vmem [#allocation2], 160
    %v1695 = vld [vmem:[%s1694] sm:$0xff]
    %v1696 = vld [vmem:[%s1694 + $0x8] sm:$0xff]
    %v1697 = vld [vmem:[%s1694 + $0x10] sm:$0xff]
    %v1698 = vld [vmem:[%s1694 + $0x18] sm:$0xff]
    %1699 = vmatprep.subr.bf16.mxu0 0
    %1700 = vmatpush1.bf16.msra.mxu0 %v551
    %1701 = vmatprep.subr.bf16.mxu0 0
    %1702 = vmatpush1.bf16.msra.mxu0 %v552
    %1703 = vmatprep.subr.bf16.mxu0 0
    %1704 = vmatpush1.bf16.msra.mxu0 %v553
    %1705 = vmatprep.subr.bf16.mxu0 0
    %1706 = vmatpush1.bf16.msra.mxu0 %v554
    %1707 = vmatprep.subr.bf16.mxu0 0
    %1708 = vmatpush1.bf16.msra.mxu0 %v555
    %1709 = vmatprep.subr.bf16.mxu0 0
    %1710 = vmatpush1.bf16.msra.mxu0 %v556
    %1711 = vmatprep.subr.bf16.mxu0 0
    %1712 = vmatpush1.bf16.msra.mxu0 %v557
    %1713 = vmatprep.subr.bf16.mxu0 0
    %1714 = vmatpush1.bf16.msra.mxu0 %v558
    %1715 = vmatprep.subr.bf16.mxu0 0
    %1716 = vmatpush1.bf16.msra.mxu0 0
    %1717 = vmatprep.subr.bf16.mxu0 0
    %1718 = vmatpush1.bf16.msra.mxu0 0
    %1719 = vmatprep.subr.bf16.mxu0 0
    %1720 = vmatpush1.bf16.msra.mxu0 0
    %1721 = vmatprep.subr.bf16.mxu0 0
    %1722 = vmatpush1.bf16.msra.mxu0 0
    %1723 = vmatprep.subr.bf16.mxu0 0
    %1724 = vmatpush1.bf16.msra.mxu0 0
    %1725 = vmatprep.subr.bf16.mxu0 0
    %1726 = vmatpush1.bf16.msra.mxu0 0
    %1727 = vmatprep.subr.bf16.mxu0 0
    %1728 = vmatpush1.bf16.msra.mxu0 0
    %1729 = vmatprep.subr.bf16.mxu0 0
    %1730 = vmatpush1.bf16.msra.mxu0 0
    %1731 = vmatprep.mubr.bf16.mxu0 0
    %1732 = vmatmul.mubr.bf16.gmra.mrb[0].mxu0 %v1693
    %v1733 = vpop.f32.mrb[0].mxu0
    %v1734 = vadd.f32 0.0, %v1733
    %v1735 = vpop.f32.mrb[0].mxu0
    %v1736 = vpop.f32.mrb[0].mxu0
    %v1737 = vpop.f32.mrb[0].mxu0
    %1738 = vdwg.mxu0
    %v1739 = vadd.f32 %v1695, %v1734
    %v1740 = vmul.f32 %v1739, 0.5
    %v1741 = vtanh.pop %v1740
    %v1742 = vmul.f32 %v1741, 0.5
    %v1743 = vadd.f32 %v1742, 0.5
    %1744 = vmatprep.subr.bf16.mxu0 0
    %1745 = vmatpush1.bf16.msra.mxu0 %v660
    %1746 = vmatprep.subr.bf16.mxu0 0
    %1747 = vmatpush1.bf16.msra.mxu0 %v661
    %1748 = vmatprep.subr.bf16.mxu0 0
    %1749 = vmatpush1.bf16.msra.mxu0 %v662
    %1750 = vmatprep.subr.bf16.mxu0 0
    %1751 = vmatpush1.bf16.msra.mxu0 %v663
    %1752 = vmatprep.subr.bf16.mxu0 0
    %1753 = vmatpush1.bf16.msra.mxu0 %v664
    %1754 = vmatprep.subr.bf16.mxu0 0
    %1755 = vmatpush1.bf16.msra.mxu0 %v665
    %1756 = vmatprep.subr.bf16.mxu0 0
    %1757 = vmatpush1.bf16.msra.mxu0 %v666
    %1758 = vmatprep.subr.bf16.mxu0 0
    %1759 = vmatpush1.bf16.msra.mxu0 %v667
    %1760 = vmatprep.subr.bf16.mxu0 0
    %1761 = vmatpush1.bf16.msra.mxu0 0
    %1762 = vmatprep.subr.bf16.mxu0 0
    %1763 = vmatpush1.bf16.msra.mxu0 0
    %1764 = vmatprep.subr.bf16.mxu0 0
    %1765 = vmatpush1.bf16.msra.mxu0 0
    %1766 = vmatprep.subr.bf16.mxu0 0
    %1767 = vmatpush1.bf16.msra.mxu0 0
    %1768 = vmatprep.subr.bf16.mxu0 0
    %1769 = vmatpush1.bf16.msra.mxu0 0
    %1770 = vmatprep.subr.bf16.mxu0 0
    %1771 = vmatpush1.bf16.msra.mxu0 0
    %1772 = vmatprep.subr.bf16.mxu0 0
    %1773 = vmatpush1.bf16.msra.mxu0 0
    %1774 = vmatprep.subr.bf16.mxu0 0
    %1775 = vmatpush1.bf16.msra.mxu0 0
    %1776 = vmatprep.mubr.bf16.mxu0 0
    %1777 = vmatmul.mubr.bf16.gmra.mrb[0].mxu0 %v1693
    %v1778 = vpop.f32.mrb[0].mxu0
    %v1779 = vadd.f32 0.0, %v1778
    %v1780 = vpop.f32.mrb[0].mxu0
    %v1781 = vpop.f32.mrb[0].mxu0
    %v1782 = vpop.f32.mrb[0].mxu0
    %1783 = vdwg.mxu0
    %v1784 = vadd.f32 %v1696, %v1779
    %v1785 = vmul.f32 %v1784, 0.5
    %v1786 = vtanh.pop %v1785
    %v1787 = vmul.f32 %v1786, 0.5
    %v1788 = vadd.f32 %v1787, 0.5
    %1789 = vmatprep.subr.bf16.mxu0 0
    %1790 = vmatpush1.bf16.msra.mxu0 %v769
    %1791 = vmatprep.subr.bf16.mxu0 0
    %1792 = vmatpush1.bf16.msra.mxu0 %v770
    %1793 = vmatprep.subr.bf16.mxu0 0
    %1794 = vmatpush1.bf16.msra.mxu0 %v771
    %1795 = vmatprep.subr.bf16.mxu0 0
    %1796 = vmatpush1.bf16.msra.mxu0 %v772
    %1797 = vmatprep.subr.bf16.mxu0 0
    %1798 = vmatpush1.bf16.msra.mxu0 %v773
    %1799 = vmatprep.subr.bf16.mxu0 0
    %1800 = vmatpush1.bf16.msra.mxu0 %v774
    %1801 = vmatprep.subr.bf16.mxu0 0
    %1802 = vmatpush1.bf16.msra.mxu0 %v775
    %1803 = vmatprep.subr.bf16.mxu0 0
    %1804 = vmatpush1.bf16.msra.mxu0 %v776
    %1805 = vmatprep.subr.bf16.mxu0 0
    %1806 = vmatpush1.bf16.msra.mxu0 0
    %1807 = vmatprep.subr.bf16.mxu0 0
    %1808 = vmatpush1.bf16.msra.mxu0 0
    %1809 = vmatprep.subr.bf16.mxu0 0
    %1810 = vmatpush1.bf16.msra.mxu0 0
    %1811 = vmatprep.subr.bf16.mxu0 0
    %1812 = vmatpush1.bf16.msra.mxu0 0
    %1813 = vmatprep.subr.bf16.mxu0 0
    %1814 = vmatpush1.bf16.msra.mxu0 0
    %1815 = vmatprep.subr.bf16.mxu0 0
    %1816 = vmatpush1.bf16.msra.mxu0 0
    %1817 = vmatprep.subr.bf16.mxu0 0
    %1818 = vmatpush1.bf16.msra.mxu0 0
    %1819 = vmatprep.subr.bf16.mxu0 0
    %1820 = vmatpush1.bf16.msra.mxu0 0
    %1821 = vmatprep.mubr.bf16.mxu0 0
    %1822 = vmatmul.mubr.bf16.gmra.mrb[0].mxu0 %v1693
    %v1823 = vpop.f32.mrb[0].mxu0
    %v1824 = vadd.f32 0.0, %v1823
    %v1825 = vpop.f32.mrb[0].mxu0
    %v1826 = vpop.f32.mrb[0].mxu0
    %v1827 = vpop.f32.mrb[0].mxu0
    %1828 = vdwg.mxu0
    %v1829 = vadd.f32 %v1697, %v1824
    %v1830 = vtanh.pop %v1829
    %1831 = vmatprep.subr.bf16.mxu0 0
    %1832 = vmatpush1.bf16.msra.mxu0 %v875
    %1833 = vmatprep.subr.bf16.mxu0 0
    %1834 = vmatpush1.bf16.msra.mxu0 %v876
    %1835 = vmatprep.subr.bf16.mxu0 0
    %1836 = vmatpush1.bf16.msra.mxu0 %v877
    %1837 = vmatprep.subr.bf16.mxu0 0
    %1838 = vmatpush1.bf16.msra.mxu0 %v878
    %1839 = vmatprep.subr.bf16.mxu0 0
    %1840 = vmatpush1.bf16.msra.mxu0 %v879
    %1841 = vmatprep.subr.bf16.mxu0 0
    %1842 = vmatpush1.bf16.msra.mxu0 %v880
    %1843 = vmatprep.subr.bf16.mxu0 0
    %1844 = vmatpush1.bf16.msra.mxu0 %v881
    %1845 = vmatprep.subr.bf16.mxu0 0
    %1846 = vmatpush1.bf16.msra.mxu0 %v882
    %1847 = vmatprep.subr.bf16.mxu0 0
    %1848 = vmatpush1.bf16.msra.mxu0 0
    %1849 = vmatprep.subr.bf16.mxu0 0
    %1850 = vmatpush1.bf16.msra.mxu0 0
    %1851 = vmatprep.subr.bf16.mxu0 0
    %1852 = vmatpush1.bf16.msra.mxu0 0
    %1853 = vmatprep.subr.bf16.mxu0 0
    %1854 = vmatpush1.bf16.msra.mxu0 0
    %1855 = vmatprep.subr.bf16.mxu0 0
    %1856 = vmatpush1.bf16.msra.mxu0 0
    %1857 = vmatprep.subr.bf16.mxu0 0
    %1858 = vmatpush1.bf16.msra.mxu0 0
    %1859 = vmatprep.subr.bf16.mxu0 0
    %1860 = vmatpush1.bf16.msra.mxu0 0
    %1861 = vmatprep.subr.bf16.mxu0 0
    %1862 = vmatpush1.bf16.msra.mxu0 0
    %1863 = vmatprep.mubr.bf16.mxu0 0
    %1864 = vmatmul.mubr.bf16.gmra.mrb[0].mxu0 %v1693
    %v1865 = vpop.f32.mrb[0].mxu0
    %v1866 = vadd.f32 0.0, %v1865
    %v1867 = vpop.f32.mrb[0].mxu0
    %v1868 = vpop.f32.mrb[0].mxu0
    %v1869 = vpop.f32.mrb[0].mxu0
    %1870 = vdwg.mxu0
    %v1871 = vadd.f32 %v1698, %v1866
    %v1872 = vmul.f32 %v1871, 0.5
    %v1873 = vtanh.pop %v1872
    %v1874 = vmul.f32 %v1873, 0.5
    %v1875 = vadd.f32 %v1874, 0.5
    %v1876 = vmul.f32 %v1788, %v1690
    %v1877 = vmul.f32 %v1743, %v1830
    %v1878 = vadd.f32 %v1876, %v1877
    %v1879 = vtanh.pop %v1878
    %v1880 = vmul.f32 %v1875, %v1879
    %v1881 = vpack.c.bf16 %v1880, %v1880
    %s1882 = scalar_lea.vmem [#allocation2], 192
    %v1883 = vld [vmem:[%s1882] sm:$0xff]
    %v1884 = vld [vmem:[%s1882 + $0x8] sm:$0xff]
    %v1885 = vld [vmem:[%s1882 + $0x10] sm:$0xff]
    %v1886 = vld [vmem:[%s1882 + $0x18] sm:$0xff]
    %1887 = vmatprep.subr.bf16.mxu0 0
    %1888 = vmatpush1.bf16.msra.mxu0 %v551
    %1889 = vmatprep.subr.bf16.mxu0 0
    %1890 = vmatpush1.bf16.msra.mxu0 %v552
    %1891 = vmatprep.subr.bf16.mxu0 0
    %1892 = vmatpush1.bf16.msra.mxu0 %v553
    %1893 = vmatprep.subr.bf16.mxu0 0
    %1894 = vmatpush1.bf16.msra.mxu0 %v554
    %1895 = vmatprep.subr.bf16.mxu0 0
    %1896 = vmatpush1.bf16.msra.mxu0 %v555
    %1897 = vmatprep.subr.bf16.mxu0 0
    %1898 = vmatpush1.bf16.msra.mxu0 %v556
    %1899 = vmatprep.subr.bf16.mxu0 0
    %1900 = vmatpush1.bf16.msra.mxu0 %v557
    %1901 = vmatprep.subr.bf16.mxu0 0
    %1902 = vmatpush1.bf16.msra.mxu0 %v558
    %1903 = vmatprep.subr.bf16.mxu0 0
    %1904 = vmatpush1.bf16.msra.mxu0 0
    %1905 = vmatprep.subr.bf16.mxu0 0
    %1906 = vmatpush1.bf16.msra.mxu0 0
    %1907 = vmatprep.subr.bf16.mxu0 0
    %1908 = vmatpush1.bf16.msra.mxu0 0
    %1909 = vmatprep.subr.bf16.mxu0 0
    %1910 = vmatpush1.bf16.msra.mxu0 0
    %1911 = vmatprep.subr.bf16.mxu0 0
    %1912 = vmatpush1.bf16.msra.mxu0 0
    %1913 = vmatprep.subr.bf16.mxu0 0
    %1914 = vmatpush1.bf16.msra.mxu0 0
    %1915 = vmatprep.subr.bf16.mxu0 0
    %1916 = vmatpush1.bf16.msra.mxu0 0
    %1917 = vmatprep.subr.bf16.mxu0 0
    %1918 = vmatpush1.bf16.msra.mxu0 0
    %1919 = vmatprep.mubr.bf16.mxu0 0
    %1920 = vmatmul.mubr.bf16.gmra.mrb[0].mxu0 %v1881
    %v1921 = vpop.f32.mrb[0].mxu0
    %v1922 = vadd.f32 0.0, %v1921
    %v1923 = vpop.f32.mrb[0].mxu0
    %v1924 = vpop.f32.mrb[0].mxu0
    %v1925 = vpop.f32.mrb[0].mxu0
    %1926 = vdwg.mxu0
    %v1927 = vadd.f32 %v1883, %v1922
    %v1928 = vmul.f32 %v1927, 0.5
    %v1929 = vtanh.pop %v1928
    %v1930 = vmul.f32 %v1929, 0.5
    %v1931 = vadd.f32 %v1930, 0.5
    %1932 = vmatprep.subr.bf16.mxu0 0
    %1933 = vmatpush1.bf16.msra.mxu0 %v660
    %1934 = vmatprep.subr.bf16.mxu0 0
    %1935 = vmatpush1.bf16.msra.mxu0 %v661
    %1936 = vmatprep.subr.bf16.mxu0 0
    %1937 = vmatpush1.bf16.msra.mxu0 %v662
    %1938 = vmatprep.subr.bf16.mxu0 0
    %1939 = vmatpush1.bf16.msra.mxu0 %v663
    %1940 = vmatprep.subr.bf16.mxu0 0
    %1941 = vmatpush1.bf16.msra.mxu0 %v664
    %1942 = vmatprep.subr.bf16.mxu0 0
    %1943 = vmatpush1.bf16.msra.mxu0 %v665
    %1944 = vmatprep.subr.bf16.mxu0 0
    %1945 = vmatpush1.bf16.msra.mxu0 %v666
    %1946 = vmatprep.subr.bf16.mxu0 0
    %1947 = vmatpush1.bf16.msra.mxu0 %v667
    %1948 = vmatprep.subr.bf16.mxu0 0
    %1949 = vmatpush1.bf16.msra.mxu0 0
    %1950 = vmatprep.subr.bf16.mxu0 0
    %1951 = vmatpush1.bf16.msra.mxu0 0
    %1952 = vmatprep.subr.bf16.mxu0 0
    %1953 = vmatpush1.bf16.msra.mxu0 0
    %1954 = vmatprep.subr.bf16.mxu0 0
    %1955 = vmatpush1.bf16.msra.mxu0 0
    %1956 = vmatprep.subr.bf16.mxu0 0
    %1957 = vmatpush1.bf16.msra.mxu0 0
    %1958 = vmatprep.subr.bf16.mxu0 0
    %1959 = vmatpush1.bf16.msra.mxu0 0
    %1960 = vmatprep.subr.bf16.mxu0 0
    %1961 = vmatpush1.bf16.msra.mxu0 0
    %1962 = vmatprep.subr.bf16.mxu0 0
    %1963 = vmatpush1.bf16.msra.mxu0 0
    %1964 = vmatprep.mubr.bf16.mxu0 0
    %1965 = vmatmul.mubr.bf16.gmra.mrb[0].mxu0 %v1881
    %v1966 = vpop.f32.mrb[0].mxu0
    %v1967 = vadd.f32 0.0, %v1966
    %v1968 = vpop.f32.mrb[0].mxu0
    %v1969 = vpop.f32.mrb[0].mxu0
    %v1970 = vpop.f32.mrb[0].mxu0
    %1971 = vdwg.mxu0
    %v1972 = vadd.f32 %v1884, %v1967
    %v1973 = vmul.f32 %v1972, 0.5
    %v1974 = vtanh.pop %v1973
    %v1975 = vmul.f32 %v1974, 0.5
    %v1976 = vadd.f32 %v1975, 0.5
    %1977 = vmatprep.subr.bf16.mxu0 0
    %1978 = vmatpush1.bf16.msra.mxu0 %v769
    %1979 = vmatprep.subr.bf16.mxu0 0
    %1980 = vmatpush1.bf16.msra.mxu0 %v770
    %1981 = vmatprep.subr.bf16.mxu0 0
    %1982 = vmatpush1.bf16.msra.mxu0 %v771
    %1983 = vmatprep.subr.bf16.mxu0 0
    %1984 = vmatpush1.bf16.msra.mxu0 %v772
    %1985 = vmatprep.subr.bf16.mxu0 0
    %1986 = vmatpush1.bf16.msra.mxu0 %v773
    %1987 = vmatprep.subr.bf16.mxu0 0
    %1988 = vmatpush1.bf16.msra.mxu0 %v774
    %1989 = vmatprep.subr.bf16.mxu0 0
    %1990 = vmatpush1.bf16.msra.mxu0 %v775
    %1991 = vmatprep.subr.bf16.mxu0 0
    %1992 = vmatpush1.bf16.msra.mxu0 %v776
    %1993 = vmatprep.subr.bf16.mxu0 0
    %1994 = vmatpush1.bf16.msra.mxu0 0
    %1995 = vmatprep.subr.bf16.mxu0 0
    %1996 = vmatpush1.bf16.msra.mxu0 0
    %1997 = vmatprep.subr.bf16.mxu0 0
    %1998 = vmatpush1.bf16.msra.mxu0 0
    %1999 = vmatprep.subr.bf16.mxu0 0
    %2000 = vmatpush1.bf16.msra.mxu0 0
    %2001 = vmatprep.subr.bf16.mxu0 0
    %2002 = vmatpush1.bf16.msra.mxu0 0
    %2003 = vmatprep.subr.bf16.mxu0 0
    %2004 = vmatpush1.bf16.msra.mxu0 0
    %2005 = vmatprep.subr.bf16.mxu0 0
    %2006 = vmatpush1.bf16.msra.mxu0 0
    %2007 = vmatprep.subr.bf16.mxu0 0
    %2008 = vmatpush1.bf16.msra.mxu0 0
    %2009 = vmatprep.mubr.bf16.mxu0 0
    %2010 = vmatmul.mubr.bf16.gmra.mrb[0].mxu0 %v1881
    %v2011 = vpop.f32.mrb[0].mxu0
    %v2012 = vadd.f32 0.0, %v2011
    %v2013 = vpop.f32.mrb[0].mxu0
    %v2014 = vpop.f32.mrb[0].mxu0
    %v2015 = vpop.f32.mrb[0].mxu0
    %2016 = vdwg.mxu0
    %v2017 = vadd.f32 %v1885, %v2012
    %v2018 = vtanh.pop %v2017
    %2019 = vmatprep.subr.bf16.mxu0 0
    %2020 = vmatpush1.bf16.msra.mxu0 %v875
    %2021 = vmatprep.subr.bf16.mxu0 0
    %2022 = vmatpush1.bf16.msra.mxu0 %v876
    %2023 = vmatprep.subr.bf16.mxu0 0
    %2024 = vmatpush1.bf16.msra.mxu0 %v877
    %2025 = vmatprep.subr.bf16.mxu0 0
    %2026 = vmatpush1.bf16.msra.mxu0 %v878
    %2027 = vmatprep.subr.bf16.mxu0 0
    %2028 = vmatpush1.bf16.msra.mxu0 %v879
    %2029 = vmatprep.subr.bf16.mxu0 0
    %2030 = vmatpush1.bf16.msra.mxu0 %v880
    %2031 = vmatprep.subr.bf16.mxu0 0
    %2032 = vmatpush1.bf16.msra.mxu0 %v881
    %2033 = vmatprep.subr.bf16.mxu0 0
    %2034 = vmatpush1.bf16.msra.mxu0 %v882
    %2035 = vmatprep.subr.bf16.mxu0 0
    %2036 = vmatpush1.bf16.msra.mxu0 0
    %2037 = vmatprep.subr.bf16.mxu0 0
    %2038 = vmatpush1.bf16.msra.mxu0 0
    %2039 = vmatprep.subr.bf16.mxu0 0
    %2040 = vmatpush1.bf16.msra.mxu0 0
    %2041 = vmatprep.subr.bf16.mxu0 0
    %2042 = vmatpush1.bf16.msra.mxu0 0
    %2043 = vmatprep.subr.bf16.mxu0 0
    %2044 = vmatpush1.bf16.msra.mxu0 0
    %2045 = vmatprep.subr.bf16.mxu0 0
    %2046 = vmatpush1.bf16.msra.mxu0 0
    %2047 = vmatprep.subr.bf16.mxu0 0
    %2048 = vmatpush1.bf16.msra.mxu0 0
    %2049 = vmatprep.subr.bf16.mxu0 0
    %2050 = vmatpush1.bf16.msra.mxu0 0
    %2051 = vmatprep.mubr.bf16.mxu0 0
    %2052 = vmatmul.mubr.bf16.gmra.mrb[0].mxu0 %v1881
    %v2053 = vpop.f32.mrb[0].mxu0
    %v2054 = vadd.f32 0.0, %v2053
    %v2055 = vpop.f32.mrb[0].mxu0
    %v2056 = vpop.f32.mrb[0].mxu0
    %v2057 = vpop.f32.mrb[0].mxu0
    %2058 = vdwg.mxu0
    %v2059 = vadd.f32 %v1886, %v2054
    %v2060 = vmul.f32 %v2059, 0.5
    %v2061 = vtanh.pop %v2060
    %v2062 = vmul.f32 %v2061, 0.5
    %v2063 = vadd.f32 %v2062, 0.5
    %v2064 = vmul.f32 %v1976, %v1878
    %v2065 = vmul.f32 %v1931, %v2018
    %v2066 = vadd.f32 %v2064, %v2065
    %v2067 = vtanh.pop %v2066
    %v2068 = vmul.f32 %v2063, %v2067
    %v2069 = vpack.c.bf16 %v2068, %v2068
    %s2070 = scalar_lea.vmem [#allocation2], 224
    %v2071 = vld [vmem:[%s2070] sm:$0xff]
    %v2072 = vld [vmem:[%s2070 + $0x8] sm:$0xff]
    %v2073 = vld [vmem:[%s2070 + $0x10] sm:$0xff]
    %v2074 = vld [vmem:[%s2070 + $0x18] sm:$0xff]
    %2075 = vmatprep.subr.bf16.mxu0 0
    %2076 = vmatpush1.bf16.msra.mxu0 %v551
    %2077 = vmatprep.subr.bf16.mxu0 0
    %2078 = vmatpush1.bf16.msra.mxu0 %v552
    %2079 = vmatprep.subr.bf16.mxu0 0
    %2080 = vmatpush1.bf16.msra.mxu0 %v553
    %2081 = vmatprep.subr.bf16.mxu0 0
    %2082 = vmatpush1.bf16.msra.mxu0 %v554
    %2083 = vmatprep.subr.bf16.mxu0 0
    %2084 = vmatpush1.bf16.msra.mxu0 %v555
    %2085 = vmatprep.subr.bf16.mxu0 0
    %2086 = vmatpush1.bf16.msra.mxu0 %v556
    %2087 = vmatprep.subr.bf16.mxu0 0
    %2088 = vmatpush1.bf16.msra.mxu0 %v557
    %2089 = vmatprep.subr.bf16.mxu0 0
    %2090 = vmatpush1.bf16.msra.mxu0 %v558
    %2091 = vmatprep.subr.bf16.mxu0 0
    %2092 = vmatpush1.bf16.msra.mxu0 0
    %2093 = vmatprep.subr.bf16.mxu0 0
    %2094 = vmatpush1.bf16.msra.mxu0 0
    %2095 = vmatprep.subr.bf16.mxu0 0
    %2096 = vmatpush1.bf16.msra.mxu0 0
    %2097 = vmatprep.subr.bf16.mxu0 0
    %2098 = vmatpush1.bf16.msra.mxu0 0
    %2099 = vmatprep.subr.bf16.mxu0 0
    %2100 = vmatpush1.bf16.msra.mxu0 0
    %2101 = vmatprep.subr.bf16.mxu0 0
    %2102 = vmatpush1.bf16.msra.mxu0 0
    %2103 = vmatprep.subr.bf16.mxu0 0
    %2104 = vmatpush1.bf16.msra.mxu0 0
    %2105 = vmatprep.subr.bf16.mxu0 0
    %2106 = vmatpush1.bf16.msra.mxu0 0
    %2107 = vmatprep.mubr.bf16.mxu0 0
    %2108 = vmatmul.mubr.bf16.gmra.mrb[0].mxu0 %v2069
    %v2109 = vpop.f32.mrb[0].mxu0
    %v2110 = vadd.f32 0.0, %v2109
    %v2111 = vpop.f32.mrb[0].mxu0
    %v2112 = vpop.f32.mrb[0].mxu0
    %v2113 = vpop.f32.mrb[0].mxu0
    %2114 = vdwg.mxu0
    %v2115 = vadd.f32 %v2071, %v2110
    %v2116 = vmul.f32 %v2115, 0.5
    %v2117 = vtanh.pop %v2116
    %v2118 = vmul.f32 %v2117, 0.5
    %v2119 = vadd.f32 %v2118, 0.5
    %2120 = vmatprep.subr.bf16.mxu0 0
    %2121 = vmatpush1.bf16.msra.mxu0 %v660
    %2122 = vmatprep.subr.bf16.mxu0 0
    %2123 = vmatpush1.bf16.msra.mxu0 %v661
    %2124 = vmatprep.subr.bf16.mxu0 0
    %2125 = vmatpush1.bf16.msra.mxu0 %v662
    %2126 = vmatprep.subr.bf16.mxu0 0
    %2127 = vmatpush1.bf16.msra.mxu0 %v663
    %2128 = vmatprep.subr.bf16.mxu0 0
    %2129 = vmatpush1.bf16.msra.mxu0 %v664
    %2130 = vmatprep.subr.bf16.mxu0 0
    %2131 = vmatpush1.bf16.msra.mxu0 %v665
    %2132 = vmatprep.subr.bf16.mxu0 0
    %2133 = vmatpush1.bf16.msra.mxu0 %v666
    %2134 = vmatprep.subr.bf16.mxu0 0
    %2135 = vmatpush1.bf16.msra.mxu0 %v667
    %2136 = vmatprep.subr.bf16.mxu0 0
    %2137 = vmatpush1.bf16.msra.mxu0 0
    %2138 = vmatprep.subr.bf16.mxu0 0
    %2139 = vmatpush1.bf16.msra.mxu0 0
    %2140 = vmatprep.subr.bf16.mxu0 0
    %2141 = vmatpush1.bf16.msra.mxu0 0
    %2142 = vmatprep.subr.bf16.mxu0 0
    %2143 = vmatpush1.bf16.msra.mxu0 0
    %2144 = vmatprep.subr.bf16.mxu0 0
    %2145 = vmatpush1.bf16.msra.mxu0 0
    %2146 = vmatprep.subr.bf16.mxu0 0
    %2147 = vmatpush1.bf16.msra.mxu0 0
    %2148 = vmatprep.subr.bf16.mxu0 0
    %2149 = vmatpush1.bf16.msra.mxu0 0
    %2150 = vmatprep.subr.bf16.mxu0 0
    %2151 = vmatpush1.bf16.msra.mxu0 0
    %2152 = vmatprep.mubr.bf16.mxu0 0
    %2153 = vmatmul.mubr.bf16.gmra.mrb[0].mxu0 %v2069
    %v2154 = vpop.f32.mrb[0].mxu0
    %v2155 = vadd.f32 0.0, %v2154
    %v2156 = vpop.f32.mrb[0].mxu0
    %v2157 = vpop.f32.mrb[0].mxu0
    %v2158 = vpop.f32.mrb[0].mxu0
    %2159 = vdwg.mxu0
    %v2160 = vadd.f32 %v2072, %v2155
    %v2161 = vmul.f32 %v2160, 0.5
    %v2162 = vtanh.pop %v2161
    %v2163 = vmul.f32 %v2162, 0.5
    %v2164 = vadd.f32 %v2163, 0.5
    %2165 = vmatprep.subr.bf16.mxu0 0
    %2166 = vmatpush1.bf16.msra.mxu0 %v769
    %2167 = vmatprep.subr.bf16.mxu0 0
    %2168 = vmatpush1.bf16.msra.mxu0 %v770
    %2169 = vmatprep.subr.bf16.mxu0 0
    %2170 = vmatpush1.bf16.msra.mxu0 %v771
    %2171 = vmatprep.subr.bf16.mxu0 0
    %2172 = vmatpush1.bf16.msra.mxu0 %v772
    %2173 = vmatprep.subr.bf16.mxu0 0
    %2174 = vmatpush1.bf16.msra.mxu0 %v773
    %2175 = vmatprep.subr.bf16.mxu0 0
    %2176 = vmatpush1.bf16.msra.mxu0 %v774
    %2177 = vmatprep.subr.bf16.mxu0 0
    %2178 = vmatpush1.bf16.msra.mxu0 %v775
    %2179 = vmatprep.subr.bf16.mxu0 0
    %2180 = vmatpush1.bf16.msra.mxu0 %v776
    %2181 = vmatprep.subr.bf16.mxu0 0
    %2182 = vmatpush1.bf16.msra.mxu0 0
    %2183 = vmatprep.subr.bf16.mxu0 0
    %2184 = vmatpush1.bf16.msra.mxu0 0
    %2185 = vmatprep.subr.bf16.mxu0 0
    %2186 = vmatpush1.bf16.msra.mxu0 0
    %2187 = vmatprep.subr.bf16.mxu0 0
    %2188 = vmatpush1.bf16.msra.mxu0 0
    %2189 = vmatprep.subr.bf16.mxu0 0
    %2190 = vmatpush1.bf16.msra.mxu0 0
    %2191 = vmatprep.subr.bf16.mxu0 0
    %2192 = vmatpush1.bf16.msra.mxu0 0
    %2193 = vmatprep.subr.bf16.mxu0 0
    %2194 = vmatpush1.bf16.msra.mxu0 0
    %2195 = vmatprep.subr.bf16.mxu0 0
    %2196 = vmatpush1.bf16.msra.mxu0 0
    %2197 = vmatprep.mubr.bf16.mxu0 0
    %2198 = vmatmul.mubr.bf16.gmra.mrb[0].mxu0 %v2069
    %v2199 = vpop.f32.mrb[0].mxu0
    %v2200 = vadd.f32 0.0, %v2199
    %v2201 = vpop.f32.mrb[0].mxu0
    %v2202 = vpop.f32.mrb[0].mxu0
    %v2203 = vpop.f32.mrb[0].mxu0
    %2204 = vdwg.mxu0
    %v2205 = vadd.f32 %v2073, %v2200
    %v2206 = vtanh.pop %v2205
    %2207 = vmatprep.subr.bf16.mxu0 0
    %2208 = vmatpush1.bf16.msra.mxu0 %v875
    %2209 = vmatprep.subr.bf16.mxu0 0
    %2210 = vmatpush1.bf16.msra.mxu0 %v876
    %2211 = vmatprep.subr.bf16.mxu0 0
    %2212 = vmatpush1.bf16.msra.mxu0 %v877
    %2213 = vmatprep.subr.bf16.mxu0 0
    %2214 = vmatpush1.bf16.msra.mxu0 %v878
    %2215 = vmatprep.subr.bf16.mxu0 0
    %2216 = vmatpush1.bf16.msra.mxu0 %v879
    %2217 = vmatprep.subr.bf16.mxu0 0
    %2218 = vmatpush1.bf16.msra.mxu0 %v880
    %2219 = vmatprep.subr.bf16.mxu0 0
    %2220 = vmatpush1.bf16.msra.mxu0 %v881
    %2221 = vmatprep.subr.bf16.mxu0 0
    %2222 = vmatpush1.bf16.msra.mxu0 %v882
    %2223 = vmatprep.subr.bf16.mxu0 0
    %2224 = vmatpush1.bf16.msra.mxu0 0
    %2225 = vmatprep.subr.bf16.mxu0 0
    %2226 = vmatpush1.bf16.msra.mxu0 0
    %2227 = vmatprep.subr.bf16.mxu0 0
    %2228 = vmatpush1.bf16.msra.mxu0 0
    %2229 = vmatprep.subr.bf16.mxu0 0
    %2230 = vmatpush1.bf16.msra.mxu0 0
    %2231 = vmatprep.subr.bf16.mxu0 0
    %2232 = vmatpush1.bf16.msra.mxu0 0
    %2233 = vmatprep.subr.bf16.mxu0 0
    %2234 = vmatpush1.bf16.msra.mxu0 0
    %2235 = vmatprep.subr.bf16.mxu0 0
    %2236 = vmatpush1.bf16.msra.mxu0 0
    %2237 = vmatprep.subr.bf16.mxu0 0
    %2238 = vmatpush1.bf16.msra.mxu0 0
    %2239 = vmatprep.mubr.bf16.mxu0 0
    %2240 = vmatmul.mubr.bf16.gmra.mrb[0].mxu0 %v2069
    %v2241 = vpop.f32.mrb[0].mxu0
    %v2242 = vadd.f32 0.0, %v2241
    %v2243 = vpop.f32.mrb[0].mxu0
    %v2244 = vpop.f32.mrb[0].mxu0
    %v2245 = vpop.f32.mrb[0].mxu0
    %2246 = vdwg.mxu0
    %v2247 = vadd.f32 %v2074, %v2242
    %v2248 = vmul.f32 %v2247, 0.5
    %v2249 = vtanh.pop %v2248
    %v2250 = vmul.f32 %v2249, 0.5
    %v2251 = vadd.f32 %v2250, 0.5
    %v2252 = vmul.f32 %v2164, %v2066
    %v2253 = vmul.f32 %v2119, %v2206
    %v2254 = vadd.f32 %v2252, %v2253
    %v2255 = vtanh.pop %v2254
    %v2256 = vmul.f32 %v2251, %v2255
    %2257 = vst [vmem:[#allocation3] sm:$0xff] %v2256
    %2258 = vst [vmem:[#allocation4] sm:$0xff] %v2254
    // Predicated region
    $region34: #{tpu_custom_call.1} parent=1 // pred_check
      %p2259 = pneg %p66
    $region35: #{tpu_custom_call.1} parent=1 // pred_check_branch
      %2261 = sbr.rel (%p2259) target = $region37
    $region36: #{tpu_custom_call.1} parent=1 // pred_region
      %2262 = vst [vmem:[#allocation11] sm:$0xff] %v2256
    $region37: #{tpu_custom_call.1} parent=1 // pred_fallthru
      _
    // Predicated region
    $region38: #{tpu_custom_call.1} parent=1 // pred_check
      _
    $region39: #{tpu_custom_call.1} parent=1 // pred_check_branch
      %2264 = sbr.rel (0) target = $region41
    $region40: #{tpu_custom_call.1} parent=1 // pred_region
      %s2266 = ssub.s32 128, 128
      %2267 = vsyncadd [#allocation7], %s2266
      %s2269 = sshll.u32 [#allocation11], 4
      %s2270 = int_to_ptr.vmem [resolvable:$true] %s2269
      %2272 = dma.vmem_to_hbm [thread:$0]  %s2270, 128, %s4, [#allocation7]
    $region41: #{tpu_custom_call.1} parent=1 // pred_fallthru
      _
    // Predicated region
    $region42: #{tpu_custom_call.1} parent=1 // pred_check
      _
    $region43: #{tpu_custom_call.1} parent=1 // pred_check_branch
      %2274 = sbr.rel (0) target = $region45
    $region44: #{tpu_custom_call.1} parent=1 // pred_region
      %2275 = dma.done [#allocation7], 128
    $region45: #{tpu_custom_call.1} parent=1 // pred_fallthru
      _
    %2276 = vsyncpa [#allocation6], 1
    %2277 = vsyncpa [#allocation9], 1
    %2278 = vsyncpa [#allocation7], 1

</llo_original>
